<compile_context>
chip_gen: v5e
topology: v5e:2x2
jax: 0.10.0
libtpu: 0.0.40
codegen_flags: <defaults>
</compile_context>

<pallas_src>
import jax
import jax.numpy as jnp
from jax.experimental import pallas as pl
from jax.experimental.pallas import tpu as pltpu


def _round_up(v, m):
    return ((v + m - 1) // m) * m


def _vmem_limit(tile_bytes):
    # ~2x the per-step tile working set (Pallas double-buffers) + headroom,
    # capped below the v7x 32 MiB default scoped-VMEM limit.
    return int(min(max(2 * tile_bytes + (4 << 20), 12 << 20), 30 << 20))


# ----------------------------------------------------------------------------
# Kernels
# ----------------------------------------------------------------------------
def _fused_add_linear_kernel(x_ref, wb_ref, wu_ref, wd_ref, wp_ref, b_ref, o_ref):
    """Fused compose + matmul: used when the batch fits in a single m-tile."""
    k = pl.program_id(2)

    @pl.when(k == 0)
    def _():
        o_ref[...] = jnp.zeros_like(o_ref)

    # W tile composed on VPU/EUP: base * sigmoid(ultra + dev * part)
    gate = jax.nn.sigmoid(wu_ref[...] + wd_ref[...] * wp_ref[...])
    w_tile = wb_ref[...] * gate

    # MXU: (tm, tk) @ (tk, tn), accumulate f32 directly into the resident
    # output tile (no VMEM scratch, no epilogue copy).
    o_ref[...] += jnp.dot(x_ref[...], w_tile, preferred_element_type=jnp.float32)

    @pl.when(k == pl.num_programs(2) - 1)
    def _():
        o_ref[...] += b_ref[...]            # (1, tn) broadcast over (tm, tn)


def _compose_weight_kernel(wb_ref, wu_ref, wd_ref, wp_ref, w_ref):
    """Pass 1 of the two-pass path: W = base * sigmoid(ultra + dev * part)."""
    w_ref[...] = wb_ref[...] * jax.nn.sigmoid(
        wu_ref[...] + wd_ref[...] * wp_ref[...])


def _matmul_bias_kernel(x_ref, w_ref, b_ref, o_ref):
    """Pass 2 of the two-pass path: y = x @ W + b with a single weight stream."""
    k = pl.program_id(2)

    @pl.when(k == 0)
    def _():
        o_ref[...] = jnp.zeros_like(o_ref)

    o_ref[...] += jnp.dot(x_ref[...], w_ref[...],
                          preferred_element_type=jnp.float32)

    @pl.when(k == pl.num_programs(2) - 1)
    def _():
        o_ref[...] += b_ref[...]


# ----------------------------------------------------------------------------
# One-time parameter preparation (hoisted out of the per-call hot path)
# ----------------------------------------------------------------------------
def prepare_add_linear_params(params, *, tn=256, tk=512):
    """Transpose + zero-pad the decomposed weights to (K_p, N_p) and compose
    the (tiny) bias gate. Call ONCE per parameter set; the result is reused by
    every add_linear_pallas call, so no HBM round-trip of the weights happens
    per forward call."""
    out_f, in_f = params["w_base"].shape
    tk = min(tk, _round_up(in_f, 128))
    tn = min(tn, _round_up(out_f, 128))
    k_p = _round_up(in_f, tk)
    n_p = _round_up(out_f, tn)

    def prep_w(name):
        w = jnp.transpose(params[name].astype(jnp.float32))       # (in, out)
        return jnp.pad(w, ((0, k_p - in_f), (0, n_p - out_f)))

    # Bias gate composed in the wrapper: it is O(out_features) work and removes
    # three input streams / BlockSpecs from the kernels.
    bias = params["b_base"] * jax.nn.sigmoid(
        params["b_ultra"] + params["b_dev"] * params["b_part"])
    bias = jnp.pad(bias.astype(jnp.float32).reshape(1, out_f),
                   ((0, 0), (0, n_p - out_f)))

    return {
        "w_base": prep_w("w_base"),
        "w_ultra": prep_w("w_ultra"),
        "w_dev": prep_w("w_dev"),
        "w_part": prep_w("w_part"),
        "bias": bias,
        "in_features": in_f,
        "out_features": out_f,
        "tk": tk,
        "tn": tn,
    }


# ----------------------------------------------------------------------------
# pallas_call wrappers
# ----------------------------------------------------------------------------
def _compose_weight(prep, *, interpret=False):
    k_p, n_p = prep["w_base"].shape
    tk, tn = prep["tk"], prep["tn"]
    spec = pl.BlockSpec((tk, tn), lambda i, j: (i, j))
    tile_bytes = 4 * 5 * tk * tn
    return pl.pallas_call(
        _compose_weight_kernel,
        out_shape=jax.ShapeDtypeStruct((k_p, n_p), jnp.float32),
        grid_spec=pltpu.PrefetchScalarGridSpec(
            num_scalar_prefetch=0,
            grid=(k_p // tk, n_p // tn),
            in_specs=[spec] * 4,
            out_specs=spec,
        ),
        compiler_params=pltpu.CompilerParams(
            dimension_semantics=("parallel", "parallel"),
            vmem_limit_bytes=_vmem_limit(tile_bytes),
        ),
        interpret=interpret,
    )(prep["w_base"], prep["w_ultra"], prep["w_dev"], prep["w_part"])


def _matmul_bias(x_p, w, bias, tm, tn, tk, *, interpret=False):
    m_p, k_p = x_p.shape
    _, n_p = w.shape
    grid = (m_p // tm, n_p // tn, k_p // tk)
    tile_bytes = 4 * (tm * tk + tk * tn + tn + tm * tn)
    return pl.pallas_call(
        _matmul_bias_kernel,
        out_shape=jax.ShapeDtypeStruct((m_p, n_p), jnp.float32),
        grid_spec=pltpu.PrefetchScalarGridSpec(
            num_scalar_prefetch=0,
            grid=grid,
            in_specs=[pl.BlockSpec((tm, tk), lambda i, j, k: (i, k)),
                      pl.BlockSpec((tk, tn), lambda i, j, k: (k, j)),
                      pl.BlockSpec((1, tn), lambda i, j, k: (0, j))],
            out_specs=pl.BlockSpec((tm, tn), lambda i, j, k: (i, j)),
        ),
        compiler_params=pltpu.CompilerParams(
            dimension_semantics=("parallel", "parallel", "arbitrary"),
            vmem_limit_bytes=_vmem_limit(tile_bytes),
        ),
        interpret=interpret,
    )(x_p, w, bias)


def _fused(x_p, prep, tm, tn, tk, *, interpret=False):
    m_p, k_p = x_p.shape
    _, n_p = prep["w_base"].shape
    grid = (m_p // tm, n_p // tn, k_p // tk)
    tile_bytes = 4 * (tm * tk + 4 * tk * tn + tn + tm * tn)
    return pl.pallas_call(
        _fused_add_linear_kernel,
        out_shape=jax.ShapeDtypeStruct((m_p, n_p), jnp.float32),
        grid_spec=pltpu.PrefetchScalarGridSpec(
            num_scalar_prefetch=0,
            grid=grid,
            in_specs=[pl.BlockSpec((tm, tk), lambda i, j, k: (i, k))]
                     + [pl.BlockSpec((tk, tn), lambda i, j, k: (k, j))] * 4
                     + [pl.BlockSpec((1, tn), lambda i, j, k: (0, j))],
            out_specs=pl.BlockSpec((tm, tn), lambda i, j, k: (i, j)),
        ),
        compiler_params=pltpu.CompilerParams(
            dimension_semantics=("parallel", "parallel", "arbitrary"),
            vmem_limit_bytes=_vmem_limit(tile_bytes),
        ),
        interpret=interpret,
    )(x_p, prep["w_base"], prep["w_ultra"], prep["w_dev"], prep["w_part"],
      prep["bias"])


def add_linear_pallas(x, prep, *, tm=256, interpret=False):
    """Forward pass: x (batch, in_features) f32, prep from
    prepare_add_linear_params(). Returns (batch, out_features) f32."""
    batch, in_f = x.shape
    assert in_f == prep["in_features"], "in_features mismatch with prepared params"
    out_f = prep["out_features"]
    tk, tn = prep["tk"], prep["tn"]
    k_p, n_p = prep["w_base"].shape

    tm = min(tm, _round_up(batch, 8))
    m_p = _round_up(batch, tm)
    m_tiles = m_p // tm

    x_p = jnp.pad(x.astype(jnp.float32), ((0, m_p - batch), (0, k_p - in_f)))

    if m_tiles >= 2:
        # Two-pass: precompose W once, then a plain matmul. Cuts dominant
        # weight HBM traffic ~4x when the batch spans multiple m-tiles.
        w = _compose_weight(prep, interpret=interpret)
        out_p = _matmul_bias(x_p, w, prep["bias"], tm, tn, tk,
                             interpret=interpret)
    else:
        # Single m-tile: fusing the compose into the matmul streams each
        # decomposed weight exactly once -- strictly cheaper than two passes.
        out_p = _fused(x_p, prep, tm, tn, tk, interpret=interpret)

    return out_p[:batch, :out_f]


# ----------------------------------------------------------------------------
# Param init + pure-JAX reference (for correctness checking)
# ----------------------------------------------------------------------------
def init_add_linear_params(key, in_features, out_features, scale=1.0):
    """Mirrors additive_decomposed_weight.__init__ (HM70A device, wrist part).
    Weight branch: value=None -> all params ~ randn.
    Bias branch:   value=0.01 -> base ~ randn, others = 0.01 * scale * ones."""
    k = jax.random.split(key, 8)
    wshape = (out_features, in_features)
    return {
        "w_base":  jax.random.normal(k[0], wshape, jnp.float32),
        "w_ultra": jax.random.normal(k[1], wshape, jnp.float32),
        "w_dev":   scale * jax.random.normal(k[2], wshape, jnp.float32),
        "w_part":  scale * jax.random.normal(k[3], wshape, jnp.float32),
        "b_base":  jax.random.normal(k[4], (out_features,), jnp.float32),
        "b_ultra": jnp.full((out_features,), 0.01, jnp.float32),
        "b_dev":   jnp.full((out_features,), 0.01 * scale, jnp.float32),
        "b_part":  jnp.full((out_features,), 0.01 * scale, jnp.float32),
    }


def add_linear_reference(x, p):
    """Pure-JAX reference matching the PyTorch forward exactly."""
    w = p["w_base"] * jax.nn.sigmoid(p["w_ultra"] + p["w_dev"] * p["w_part"])
    b = p["b_base"] * jax.nn.sigmoid(p["b_ultra"] + p["b_dev"] * p["b_part"])
    return x @ w.T + b.reshape(1, -1)


if __name__ == "__main__":
    key = jax.random.PRNGKey(0)
    k_p1, k_x1, k_p2, k_x2, k_p3, k_x3 = jax.random.split(key, 6)

    # Test 1: multi-k / multi-n grid, single m-tile -> fused kernel path.
    batch, in_f, out_f = 16, 512, 512
    params = init_add_linear_params(k_p1, in_f, out_f, scale=1.0)
    prep = prepare_add_linear_params(params)            # one-time weight prep
    x = jax.random.normal(k_x1, (batch, in_f), jnp.float32)
    out = jax.block_until_ready(add_linear_pallas(x, prep))
    ref = add_linear_reference(x, params)
    assert out.shape == ref.shape
    assert jnp.allclose(out, ref, atol=2e-4, rtol=2e-4), "mismatch (fused)"

    # Test 2: small, non-(8,128)-aligned shapes -> padding path.
    b2, i2, o2 = 5, 40, 24
    params2 = init_add_linear_params(k_p2, i2, o2, scale=1.0)
    prep2 = prepare_add_linear_params(params2)
    x2 = jax.random.normal(k_x2, (b2, i2), jnp.float32)
    out2 = jax.block_until_ready(add_linear_pallas(x2, prep2))
    ref2 = add_linear_reference(x2, params2)
    assert out2.shape == ref2.shape
    assert jnp.allclose(out2, ref2, atol=2e-4, rtol=2e-4), "mismatch (padded)"

    # Test 3: batch spans >= 2 m-tiles -> two-pass (precompose + matmul) path.
    b3, i3, o3 = 272, 256, 384
    params3 = init_add_linear_params(k_p3, i3, o3, scale=1.0)
    prep3 = prepare_add_linear_params(params3)
    x3 = jax.random.normal(k_x3, (b3, i3), jnp.float32)
    out3 = jax.block_until_ready(add_linear_pallas(x3, prep3))
    ref3 = add_linear_reference(x3, params3)
    assert out3.shape == ref3.shape
    assert jnp.allclose(out3, ref3, atol=2e-4, rtol=2e-4), "mismatch (two-pass)"

    print("KERNEL_OK")
</pallas_src>

<mosaic_0001>
module attributes {stable_mosaic.version = 11 : i64} {
  func.func @_fused_add_linear_kernel(%arg0: i32, %arg1: i32, %arg2: i32, %arg3: memref<16x512xf32, #tpu.memory_space<vmem>>, %arg4: memref<512x256xf32, #tpu.memory_space<vmem>>, %arg5: memref<512x256xf32, #tpu.memory_space<vmem>>, %arg6: memref<512x256xf32, #tpu.memory_space<vmem>>, %arg7: memref<512x256xf32, #tpu.memory_space<vmem>>, %arg8: memref<1x256xf32, #tpu.memory_space<vmem>>, %arg9: memref<16x256xf32, #tpu.memory_space<vmem>>) attributes {dimension_semantics = [#tpu.dimension_semantics<parallel>, #tpu.dimension_semantics<parallel>, #tpu.dimension_semantics<arbitrary>], iteration_bounds = array<i64: 1, 2, 1>, scalar_prefetch = 0 : i64, scratch_operands = 0 : i64, tpu.core_type = #tpu.core_type<tc>, window_params = [{transform_indices = @transform_0, window_bounds = array<i64: 16, 512>}, {transform_indices = @transform_1, window_bounds = array<i64: 512, 256>}, {transform_indices = @transform_2, window_bounds = array<i64: 512, 256>}, {transform_indices = @transform_3, window_bounds = array<i64: 512, 256>}, {transform_indices = @transform_4, window_bounds = array<i64: 512, 256>}, {transform_indices = @transform_5, window_bounds = array<i64: 1, 256>}, {transform_indices = @transform_6, window_bounds = array<i64: 16, 256>}]} {
    %c0_i32 = arith.constant 0 : i32
    %0 = arith.cmpi eq, %arg2, %c0_i32 : i32
    %1 = arith.extui %0 : i1 to i32
    %c0_i32_0 = arith.constant 0 : i32
    %2 = arith.cmpi ne, %1, %c0_i32_0 : i32
    scf.if %2 {
      %cst_17 = arith.constant 0.000000e+00 : f32
      %23 = vector.broadcast %cst_17 : f32 to vector<16x256xf32>
      %c0_18 = arith.constant 0 : index
      %c0_19 = arith.constant 0 : index
      %24 = vector.load %arg9[%c0_18, %c0_19] : memref<16x256xf32, #tpu.memory_space<vmem>>, vector<16x256xf32>
      tpu.vector_store %arg9[%c0_18, %c0_19], %23 {strides = array<i32>} : memref<16x256xf32, #tpu.memory_space<vmem>>, vector<16x256xf32>,
    } else {
    }
    %c0 = arith.constant 0 : index
    %c0_1 = arith.constant 0 : index
    %3 = vector.load %arg5[%c0, %c0_1] : memref<512x256xf32, #tpu.memory_space<vmem>>, vector<512x256xf32>
    %c0_2 = arith.constant 0 : index
    %c0_3 = arith.constant 0 : index
    %4 = vector.load %arg6[%c0_2, %c0_3] : memref<512x256xf32, #tpu.memory_space<vmem>>, vector<512x256xf32>
    %c0_4 = arith.constant 0 : index
    %c0_5 = arith.constant 0 : index
    %5 = vector.load %arg7[%c0_4, %c0_5] : memref<512x256xf32, #tpu.memory_space<vmem>>, vector<512x256xf32>
    %6 = arith.mulf %4, %5 : vector<512x256xf32>
    %7 = arith.addf %3, %6 : vector<512x256xf32>
    %8 = arith.negf %7 : vector<512x256xf32>
    %9 = math.exp %8 : vector<512x256xf32>
    %cst = arith.constant 1.000000e+00 : f32
    %10 = vector.broadcast %cst : f32 to vector<512x256xf32>
    %11 = arith.addf %10, %9 : vector<512x256xf32>
    %12 = arith.divf %10, %11 : vector<512x256xf32>
    %c0_6 = arith.constant 0 : index
    %c0_7 = arith.constant 0 : index
    %13 = vector.load %arg4[%c0_6, %c0_7] : memref<512x256xf32, #tpu.memory_space<vmem>>, vector<512x256xf32>
    %14 = arith.mulf %13, %12 : vector<512x256xf32>
    %c0_8 = arith.constant 0 : index
    %c0_9 = arith.constant 0 : index
    %15 = vector.load %arg9[%c0_8, %c0_9] : memref<16x256xf32, #tpu.memory_space<vmem>>, vector<16x256xf32>
    %c0_10 = arith.constant 0 : index
    %c0_11 = arith.constant 0 : index
    %16 = vector.load %arg3[%c0_10, %c0_11] : memref<16x512xf32, #tpu.memory_space<vmem>>, vector<16x512xf32>
    %cst_12 = arith.constant dense<0.000000e+00> : vector<16x256xf32>
    %17 = tpu.matmul %16, %14, %cst_12 {dimension_numbers = #tpu.dot_dimension_numbers<[1], [0], [0], [1], [0, 0, 1, 1], [], []>} : vector<16x512xf32>, vector<512x256xf32>, vector<16x256xf32> -> vector<16x256xf32>
    %18 = arith.addf %15, %17 : vector<16x256xf32>
    %c0_13 = arith.constant 0 : index
    %c0_14 = arith.constant 0 : index
    %19 = vector.load %arg9[%c0_13, %c0_14] : memref<16x256xf32, #tpu.memory_space<vmem>>, vector<16x256xf32>
    tpu.vector_store %arg9[%c0_13, %c0_14], %18 {strides = array<i32>} : memref<16x256xf32, #tpu.memory_space<vmem>>, vector<16x256xf32>,
    %c0_i32_15 = arith.constant 0 : i32
    %20 = arith.cmpi eq, %arg2, %c0_i32_15 : i32
    %21 = arith.extui %20 : i1 to i32
    %c0_i32_16 = arith.constant 0 : i32
    %22 = arith.cmpi ne, %21, %c0_i32_16 : i32
    scf.if %22 {
      %c0_17 = arith.constant 0 : index
      %c0_18 = arith.constant 0 : index
      %23 = vector.load %arg9[%c0_17, %c0_18] : memref<16x256xf32, #tpu.memory_space<vmem>>, vector<16x256xf32>
      %c0_19 = arith.constant 0 : index
      %c0_20 = arith.constant 0 : index
      %24 = vector.load %arg8[%c0_19, %c0_20] : memref<1x256xf32, #tpu.memory_space<vmem>>, vector<1x256xf32>
      %25 = vector.broadcast %24 : vector<1x256xf32> to vector<16x256xf32>
      %26 = arith.addf %23, %25 : vector<16x256xf32>
      %c0_21 = arith.constant 0 : index
      %c0_22 = arith.constant 0 : index
      %27 = vector.load %arg9[%c0_21, %c0_22] : memref<16x256xf32, #tpu.memory_space<vmem>>, vector<16x256xf32>
      tpu.vector_store %arg9[%c0_21, %c0_22], %26 {strides = array<i32>} : memref<16x256xf32, #tpu.memory_space<vmem>>, vector<16x256xf32>,
    } else {
    }
    return
  }
  func.func @transform_0(%arg0: i32, %arg1: i32, %arg2: i32) -> (i32, i32) {
    %c0_i32 = arith.constant 0 : i32
    return %arg0, %arg2 : i32, i32
  }
  func.func @transform_1(%arg0: i32, %arg1: i32, %arg2: i32) -> (i32, i32) {
    %c0_i32 = arith.constant 0 : i32
    return %arg2, %arg1 : i32, i32
  }
  func.func @transform_2(%arg0: i32, %arg1: i32, %arg2: i32) -> (i32, i32) {
    %c0_i32 = arith.constant 0 : i32
    return %arg2, %arg1 : i32, i32
  }
  func.func @transform_3(%arg0: i32, %arg1: i32, %arg2: i32) -> (i32, i32) {
    %c0_i32 = arith.constant 0 : i32
    return %arg2, %arg1 : i32, i32
  }
  func.func @transform_4(%arg0: i32, %arg1: i32, %arg2: i32) -> (i32, i32) {
    %c0_i32 = arith.constant 0 : i32
    return %arg2, %arg1 : i32, i32
  }
  func.func @transform_5(%arg0: i32, %arg1: i32, %arg2: i32) -> (i32, i32) {
    %c0_i32 = arith.constant 0 : i32
    %c0_i32_0 = arith.constant 0 : i32
    return %c0_i32, %arg1 : i32, i32
  }
  func.func @transform_6(%arg0: i32, %arg1: i32, %arg2: i32) -> (i32, i32) {
    %c0_i32 = arith.constant 0 : i32
    return %arg0, %arg1 : i32, i32
  }
}

</mosaic_0001>

<llo_original>
// kernel: tpu_custom_call.1
$region0: #{tpu_custom_call.1}
  #allocation0 [shape = 'u32[]', space=smem, size = 0x4, offset = 0x4, fixed_abs, tag = 'smem constant byte address 0x4 - core index']
  #allocation1 [shape = 'u32[72,128]{1,0:T(1,128)}', space=vmem, size = 0x9000, scoped, tag = 'internal scratch']
  %s0 = inlined_call_operand.hbm [shape: f32[16,512], index: 0, kind: input, shape index: {}]
  %s1 = inlined_call_operand.hbm [shape: f32[512,512], index: 1, kind: input, shape index: {}]
  %s2 = inlined_call_operand.hbm [shape: f32[512,512], index: 2, kind: input, shape index: {}]
  %s3 = inlined_call_operand.hbm [shape: f32[512,512], index: 3, kind: input, shape index: {}]
  %s4 = inlined_call_operand.hbm [shape: f32[512,512], index: 4, kind: input, shape index: {}]
  %s5 = inlined_call_operand.vmem [shape: f32[1,512], index: 5, kind: input, shape index: {}]
  %s6 = inlined_call_operand.hbm [shape: f32[16,512], index: 6, kind: output, shape index: {}]
  %s7 = sld [smem:[#allocation0]]
  $region85: #{tpu_custom_call.1} parent=0
    _
  %s9 = ssub.s32 1, %s7
  %s10 = scalar_select 0, %s9, %s7
  $region1: #{tpu_custom_call.1} parent=0
    #allocation2 [shape = 'u8[32768]{0}', space=vmem, size = 0x8000, scoped, tag = 'input window, operand 0, single buffered']
    #allocation3 [shape = 's32[2]{0}', space=sflag, size = 0x8, scoped, tag = 'scoped memory for tpu_custom_call.1']
    #allocation4 [shape = 's32[2]{0}', space=sflag, size = 0x8, scoped, tag = 'scoped memory for tpu_custom_call.1']
    #allocation5 [shape = 'u8[1048576]{0}', space=vmem, size = 0x100000, scoped, tag = 'input window, operand 1']
    #allocation6 [shape = 's32[2]{0}', space=sflag, size = 0x8, scoped, tag = 'scoped memory for tpu_custom_call.1']
    #allocation7 [shape = 'u8[1048576]{0}', space=vmem, size = 0x100000, scoped, tag = 'input window, operand 2']
    #allocation8 [shape = 'u8[1048576]{0}', space=vmem, size = 0x100000, scoped, tag = 'input window, operand 3']
    #allocation9 [shape = 's32[2]{0}', space=sflag, size = 0x8, scoped, tag = 'scoped memory for tpu_custom_call.1']
    #allocation10 [shape = 'u8[1048576]{0}', space=vmem, size = 0x100000, scoped, tag = 'input window, operand 4']
    #allocation11 [shape = 'u8[32768]{0}', space=vmem, size = 0x8000, scoped, tag = 'output window, operand 0']
    %11 = vsyncpa [#allocation3], 0
    %12 = vsyncpa [#allocation6], 0
    %s13 = scalar_lea.sflag [#allocation6], 1
    %14 = vsyncpa %s13, 0
    %15 = vsyncpa [#allocation9], 0
    %s16 = scalar_lea.sflag [#allocation9], 1
    %17 = vsyncpa %s16, 0
    %18 = vsyncpa [#allocation4], 0
    %s19 = scalar_lea.sflag [#allocation4], 1
    %20 = vsyncpa %s19, 0
    loop: start=0, step=1, limit=4
    $region2: #{tpu_custom_call.1} parent=1 // loop_pre_header
      _
    $region3: #{tpu_custom_call.1} parent=1 // loop_header
      %s22 = sphi 0, %s26
      %p23 = scmp.ge.s32.totalorder %s22, 4
      %s29 = sphi 0, %s48
      %s30 = sphi 0, %s44
      %s31 = sphi 0, %s40
      %s32 = sphi 0, %s29
      %s33 = sphi 0, %s30
      %s34 = sphi 0, %s31
      %s35 = sphi 0, %s32
      %s36 = sphi 0, %s33
      %s37 = sphi 0, %s34
      %s53 = sphi 0, %s55
      %s56 = sphi 0, %s53
      %s57 = sphi 0, %s56
      %s73 = sphi 0, %s57
      %s81 = sphi 0, %s83
      %s84 = sphi 0, %s81
      %s85 = sphi 0, %s84
      %s101 = sphi 0, %s85
      %s109 = sphi 0, %s111
      %s112 = sphi 0, %s109
      %s113 = sphi 0, %s112
      %s129 = sphi 0, %s113
      %s137 = sphi 0, %s139
      %s140 = sphi 0, %s137
      %s141 = sphi 0, %s140
      %s157 = sphi 0, %s141
      %s165 = sphi 0, %s167
      %s168 = sphi 0, %s165
      %s169 = sphi 0, %s168
      %s185 = sphi 0, %s169
      %s191 = sphi 0, %s193
      %s194 = sphi 0, %s191
      %s195 = sphi 0, %s194
      %s211 = sphi 0, %s195
      %s219 = sphi 0, %s221
      %s222 = sphi 0, %s219
      %s223 = sphi 0, %s222
      %s239 = sphi 0, %s223
    $region4: #{tpu_custom_call.1} parent=1 // loop_header_branch
      %25 = sbr.rel (%p23) target = $region8
    $region5: #{tpu_custom_call.1} parent=1 // loop_body
      %s27 = ssub.s32 %s22, 1
      %s28 = ssub.s32 %s22, 2
      %s38 = sadd.s32 1, %s31
      %p39 = scmp.ge.s32.totalorder %s38, 1
      %s40 = scalar_select %p39, 0, %s38
      %s41 = sadd.s32 1, %s30
      %s42 = scalar_select %p39, %s41, %s30
      %p43 = scmp.ge.s32.totalorder %s42, 2
      %s44 = scalar_select %p43, 0, %s42
      %s45 = sadd.s32 1, %s29
      %s46 = scalar_select %p43, %s45, %s29
      %p47 = scmp.ge.s32.totalorder %s46, 1
      %s48 = scalar_select %p47, 0, %s46
      %s49 = ssub.s32 %s29, %s48
      %s50 = ssub.s32 %s31, %s40
      %s51 = sor.u32 %s49, %s50
      %p52 = scmp.eq.s32.totalorder %s51, 0
      %s54 = sadd.s32 %s53, 1
      %s55 = scalar_select %p52, %s53, %s54
      %p58 = pneg %p52
      %p59 = scmp.eq.s32.totalorder %s22, 1
      %p60 = por %p58, %p59
      %p61 = scmp.ne.s32.totalorder %s53, %s56
      %p62 = scmp.eq.s32.totalorder %s22, 0
      %p63 = por %p61, %p62
      %p64 = scmp.ne.s32.totalorder %s53, %s56
      %p65 = scmp.eq.s32.totalorder %s27, 1
      %p66 = por %p64, %p65
      %p67 = scmp.ne.s32.totalorder %s56, %s57
      %p68 = scmp.eq.s32.totalorder %s27, 0
      %p69 = por %p67, %p68
      %p70 = scmp.ne.s32.totalorder %s56, %s57
      %p71 = scmp.eq.s32.totalorder %s28, 1
      %p72 = por %p70, %p71
      %p74 = scmp.ne.s32.totalorder %s57, %s73
      %p75 = scmp.eq.s32.totalorder %s28, 0
      %p76 = por %p74, %p75
      %s77 = ssub.s32 %s31, %s40
      %s78 = ssub.s32 %s30, %s44
      %s79 = sor.u32 %s77, %s78
      %p80 = scmp.eq.s32.totalorder %s79, 0
      %s82 = sadd.s32 %s81, 1
      %s83 = scalar_select %p80, %s81, %s82
      %p86 = pneg %p80
      %p87 = scmp.eq.s32.totalorder %s22, 1
      %p88 = por %p86, %p87
      %p89 = scmp.ne.s32.totalorder %s81, %s84
      %p90 = scmp.eq.s32.totalorder %s22, 0
      %p91 = por %p89, %p90
      %p92 = scmp.ne.s32.totalorder %s81, %s84
      %p93 = scmp.eq.s32.totalorder %s27, 1
      %p94 = por %p92, %p93
      %p95 = scmp.ne.s32.totalorder %s84, %s85
      %p96 = scmp.eq.s32.totalorder %s27, 0
      %p97 = por %p95, %p96
      %p98 = scmp.ne.s32.totalorder %s84, %s85
      %p99 = scmp.eq.s32.totalorder %s28, 1
      %p100 = por %p98, %p99
      %p102 = scmp.ne.s32.totalorder %s85, %s101
      %p103 = scmp.eq.s32.totalorder %s28, 0
      %p104 = por %p102, %p103
      %s105 = ssub.s32 %s31, %s40
      %s106 = ssub.s32 %s30, %s44
      %s107 = sor.u32 %s105, %s106
      %p108 = scmp.eq.s32.totalorder %s107, 0
      %s110 = sadd.s32 %s109, 1
      %s111 = scalar_select %p108, %s109, %s110
      %p114 = pneg %p108
      %p115 = scmp.eq.s32.totalorder %s22, 1
      %p116 = por %p114, %p115
      %p117 = scmp.ne.s32.totalorder %s109, %s112
      %p118 = scmp.eq.s32.totalorder %s22, 0
      %p119 = por %p117, %p118
      %p120 = scmp.ne.s32.totalorder %s109, %s112
      %p121 = scmp.eq.s32.totalorder %s27, 1
      %p122 = por %p120, %p121
      %p123 = scmp.ne.s32.totalorder %s112, %s113
      %p124 = scmp.eq.s32.totalorder %s27, 0
      %p125 = por %p123, %p124
      %p126 = scmp.ne.s32.totalorder %s112, %s113
      %p127 = scmp.eq.s32.totalorder %s28, 1
      %p128 = por %p126, %p127
      %p130 = scmp.ne.s32.totalorder %s113, %s129
      %p131 = scmp.eq.s32.totalorder %s28, 0
      %p132 = por %p130, %p131
      %s133 = ssub.s32 %s31, %s40
      %s134 = ssub.s32 %s30, %s44
      %s135 = sor.u32 %s133, %s134
      %p136 = scmp.eq.s32.totalorder %s135, 0
      %s138 = sadd.s32 %s137, 1
      %s139 = scalar_select %p136, %s137, %s138
      %p142 = pneg %p136
      %p143 = scmp.eq.s32.totalorder %s22, 1
      %p144 = por %p142, %p143
      %p145 = scmp.ne.s32.totalorder %s137, %s140
      %p146 = scmp.eq.s32.totalorder %s22, 0
      %p147 = por %p145, %p146
      %p148 = scmp.ne.s32.totalorder %s137, %s140
      %p149 = scmp.eq.s32.totalorder %s27, 1
      %p150 = por %p148, %p149
      %p151 = scmp.ne.s32.totalorder %s140, %s141
      %p152 = scmp.eq.s32.totalorder %s27, 0
      %p153 = por %p151, %p152
      %p154 = scmp.ne.s32.totalorder %s140, %s141
      %p155 = scmp.eq.s32.totalorder %s28, 1
      %p156 = por %p154, %p155
      %p158 = scmp.ne.s32.totalorder %s141, %s157
      %p159 = scmp.eq.s32.totalorder %s28, 0
      %p160 = por %p158, %p159
      %s161 = ssub.s32 %s31, %s40
      %s162 = ssub.s32 %s30, %s44
      %s163 = sor.u32 %s161, %s162
      %p164 = scmp.eq.s32.totalorder %s163, 0
      %s166 = sadd.s32 %s165, 1
      %s167 = scalar_select %p164, %s165, %s166
      %p170 = pneg %p164
      %p171 = scmp.eq.s32.totalorder %s22, 1
      %p172 = por %p170, %p171
      %p173 = scmp.ne.s32.totalorder %s165, %s168
      %p174 = scmp.eq.s32.totalorder %s22, 0
      %p175 = por %p173, %p174
      %p176 = scmp.ne.s32.totalorder %s165, %s168
      %p177 = scmp.eq.s32.totalorder %s27, 1
      %p178 = por %p176, %p177
      %p179 = scmp.ne.s32.totalorder %s168, %s169
      %p180 = scmp.eq.s32.totalorder %s27, 0
      %p181 = por %p179, %p180
      %p182 = scmp.ne.s32.totalorder %s168, %s169
      %p183 = scmp.eq.s32.totalorder %s28, 1
      %p184 = por %p182, %p183
      %p186 = scmp.ne.s32.totalorder %s169, %s185
      %p187 = scmp.eq.s32.totalorder %s28, 0
      %p188 = por %p186, %p187
      %s189 = ssub.s32 %s30, %s44
      %p190 = scmp.eq.s32.totalorder %s189, 0
      %s192 = sadd.s32 %s191, 1
      %s193 = scalar_select %p190, %s191, %s192
      %p196 = pneg %p190
      %p197 = scmp.eq.s32.totalorder %s22, 1
      %p198 = por %p196, %p197
      %p199 = scmp.ne.s32.totalorder %s191, %s194
      %p200 = scmp.eq.s32.totalorder %s22, 0
      %p201 = por %p199, %p200
      %p202 = scmp.ne.s32.totalorder %s191, %s194
      %p203 = scmp.eq.s32.totalorder %s27, 1
      %p204 = por %p202, %p203
      %p205 = scmp.ne.s32.totalorder %s194, %s195
      %p206 = scmp.eq.s32.totalorder %s27, 0
      %p207 = por %p205, %p206
      %p208 = scmp.ne.s32.totalorder %s194, %s195
      %p209 = scmp.eq.s32.totalorder %s28, 1
      %p210 = por %p208, %p209
      %p212 = scmp.ne.s32.totalorder %s195, %s211
      %p213 = scmp.eq.s32.totalorder %s28, 0
      %p214 = por %p212, %p213
      %s215 = ssub.s32 %s29, %s48
      %s216 = ssub.s32 %s30, %s44
      %s217 = sor.u32 %s215, %s216
      %p218 = scmp.eq.s32.totalorder %s217, 0
      %s220 = sadd.s32 %s219, 1
      %s221 = scalar_select %p218, %s219, %s220
      %p224 = pneg %p218
      %p225 = scmp.eq.s32.totalorder %s22, 1
      %p226 = por %p224, %p225
      %p227 = scmp.ne.s32.totalorder %s219, %s222
      %p228 = scmp.eq.s32.totalorder %s22, 0
      %p229 = por %p227, %p228
      %p230 = scmp.ne.s32.totalorder %s219, %s222
      %p231 = scmp.eq.s32.totalorder %s27, 1
      %p232 = por %p230, %p231
      %p233 = scmp.ne.s32.totalorder %s222, %s223
      %p234 = scmp.eq.s32.totalorder %s27, 0
      %p235 = por %p233, %p234
      %p236 = scmp.ne.s32.totalorder %s222, %s223
      %p237 = scmp.eq.s32.totalorder %s28, 1
      %p238 = por %p236, %p237
      %p240 = scmp.ne.s32.totalorder %s223, %s239
      %p241 = scmp.eq.s32.totalorder %s28, 0
      %p242 = por %p240, %p241
      %p243 = scmp.le.s32.totalorder 1, %s22
      %p244 = scmp.lt.s32.totalorder %s22, 3
      %p245 = pnand %p243, %p244
      %p246 = pneg %p245
      // Predicated region
      $region9: #{tpu_custom_call.1} parent=5 // pred_check
        _
      $region10: #{tpu_custom_call.1} parent=5 // pred_check_branch
        %248 = sbr.rel (%p245) target = $region12
      $region11: #{tpu_custom_call.1} parent=5 // pred_region
        %s249 = ssub.s32 %s22, 1
        // Predicated region
        $region13: #{tpu_custom_call.1} parent=11 // pred_check
          %p250 = pneg %p69
        $region14: #{tpu_custom_call.1} parent=11 // pred_check_branch
          %252 = sbr.rel (%p250) target = $region16
        $region15: #{tpu_custom_call.1} parent=11 // pred_region
          %s253 = smul.u32 2, %s32
          %s254 = smul.u32 4, %s34
          %256 = vsyncadd [#allocation3], 0
          %s257 = smul.addr %s253, 4
          %s258 = sadd.s32 %s254, %s257
          %s259 = smul.addr %s258, 8
          %s260 = scalar_lea.hbm %s0, %s259
          %s261 = sshll.u32 %s260, 4
          %s262 = int_to_ptr.hbm [resolvable:$true] %s261
          %s263 = sshll.u32 [#allocation2], 4
          %s264 = int_to_ptr.vmem [resolvable:$true] %s263
          %269 = dma.hbm_to_vmem [thread:$0]  %s262, 1024, %s264, [#allocation3], 512, 512, 32
        $region16: #{tpu_custom_call.1} parent=11 // pred_fallthru
          _
      $region12: #{tpu_custom_call.1} parent=5 // pred_fallthru
        _
      %p270 = scmp.lt.s32.totalorder %s22, 2
      // Predicated region
      $region17: #{tpu_custom_call.1} parent=5 // pred_check
        %p271 = pneg %p270
      $region18: #{tpu_custom_call.1} parent=5 // pred_check_branch
        %273 = sbr.rel (%p271) target = $region20
      $region19: #{tpu_custom_call.1} parent=5 // pred_region
        // Predicated region
        $region21: #{tpu_custom_call.1} parent=19 // pred_check
          %p274 = pneg %p91
        $region22: #{tpu_custom_call.1} parent=19 // pred_check_branch
          %276 = sbr.rel (%p274) target = $region24
        $region23: #{tpu_custom_call.1} parent=19 // pred_region
          %s277 = sand.u32 %s22, 1
          %s278 = scalar_lea.sflag [#allocation6], %s277
          %s279 = sand.u32 %s81, 1
          %s280 = smul.addr %s279, 1024
          %s281 = scalar_lea.vmem [#allocation5], %s280
          %s282 = smul.u32 64, %s31
          %s283 = smul.u32 2, %s30
          %285 = vsyncadd %s278, 0
          %s286 = smul.addr %s282, 4
          %s287 = sadd.s32 %s283, %s286
          %s288 = smul.addr %s287, 8
          %s289 = scalar_lea.hbm %s1, %s288
          %s290 = sshll.u32 %s289, 4
          %s291 = int_to_ptr.hbm [resolvable:$true] %s290
          %s292 = sshll.u32 %s281, 4
          %s293 = int_to_ptr.vmem [resolvable:$true] %s292
          %298 = dma.hbm_to_vmem [thread:$0]  %s291, 16384, %s293, %s278, 512, 256, 16
        $region24: #{tpu_custom_call.1} parent=19 // pred_fallthru
          _
        // Predicated region
        $region25: #{tpu_custom_call.1} parent=19 // pred_check
          %p299 = pneg %p119
        $region26: #{tpu_custom_call.1} parent=19 // pred_check_branch
          %301 = sbr.rel (%p299) target = $region28
        $region27: #{tpu_custom_call.1} parent=19 // pred_region
          %s302 = sand.u32 %s22, 1
          %s303 = scalar_lea.sflag [#allocation6], %s302
          %s304 = sand.u32 %s109, 1
          %s305 = smul.addr %s304, 1024
          %s306 = scalar_lea.vmem [#allocation7], %s305
          %s307 = smul.u32 64, %s31
          %s308 = smul.u32 2, %s30
          %310 = vsyncadd %s303, 0
          %s311 = smul.addr %s307, 4
          %s312 = sadd.s32 %s308, %s311
          %s313 = smul.addr %s312, 8
          %s314 = scalar_lea.hbm %s2, %s313
          %s315 = sshll.u32 %s314, 4
          %s316 = int_to_ptr.hbm [resolvable:$true] %s315
          %s317 = sshll.u32 %s306, 4
          %s318 = int_to_ptr.vmem [resolvable:$true] %s317
          %323 = dma.hbm_to_vmem [thread:$0]  %s316, 16384, %s318, %s303, 512, 256, 16
        $region28: #{tpu_custom_call.1} parent=19 // pred_fallthru
          _
        // Predicated region
        $region29: #{tpu_custom_call.1} parent=19 // pred_check
          %p324 = pneg %p147
        $region30: #{tpu_custom_call.1} parent=19 // pred_check_branch
          %326 = sbr.rel (%p324) target = $region32
        $region31: #{tpu_custom_call.1} parent=19 // pred_region
          %s327 = sand.u32 %s22, 1
          %s328 = scalar_lea.sflag [#allocation9], %s327
          %s329 = sand.u32 %s137, 1
          %s330 = smul.addr %s329, 1024
          %s331 = scalar_lea.vmem [#allocation8], %s330
          %s332 = smul.u32 64, %s31
          %s333 = smul.u32 2, %s30
          %335 = vsyncadd %s328, 0
          %s336 = smul.addr %s332, 4
          %s337 = sadd.s32 %s333, %s336
          %s338 = smul.addr %s337, 8
          %s339 = scalar_lea.hbm %s3, %s338
          %s340 = sshll.u32 %s339, 4
          %s341 = int_to_ptr.hbm [resolvable:$true] %s340
          %s342 = sshll.u32 %s331, 4
          %s343 = int_to_ptr.vmem [resolvable:$true] %s342
          %348 = dma.hbm_to_vmem [thread:$0]  %s341, 16384, %s343, %s328, 512, 256, 16
        $region32: #{tpu_custom_call.1} parent=19 // pred_fallthru
          _
        // Predicated region
        $region33: #{tpu_custom_call.1} parent=19 // pred_check
          %p349 = pneg %p175
        $region34: #{tpu_custom_call.1} parent=19 // pred_check_branch
          %351 = sbr.rel (%p349) target = $region36
        $region35: #{tpu_custom_call.1} parent=19 // pred_region
          %s352 = sand.u32 %s22, 1
          %s353 = scalar_lea.sflag [#allocation9], %s352
          %s354 = sand.u32 %s165, 1
          %s355 = smul.addr %s354, 1024
          %s356 = scalar_lea.vmem [#allocation10], %s355
          %s357 = smul.u32 64, %s31
          %s358 = smul.u32 2, %s30
          %360 = vsyncadd %s353, 0
          %s361 = smul.addr %s357, 4
          %s362 = sadd.s32 %s358, %s361
          %s363 = smul.addr %s362, 8
          %s364 = scalar_lea.hbm %s4, %s363
          %s365 = sshll.u32 %s364, 4
          %s366 = int_to_ptr.hbm [resolvable:$true] %s365
          %s367 = sshll.u32 %s356, 4
          %s368 = int_to_ptr.vmem [resolvable:$true] %s367
          %373 = dma.hbm_to_vmem [thread:$0]  %s366, 16384, %s368, %s353, 512, 256, 16
        $region36: #{tpu_custom_call.1} parent=19 // pred_fallthru
          _
        // Predicated region
        $region37: #{tpu_custom_call.1} parent=19 // pred_check
          %p374 = pneg %p201
        $region38: #{tpu_custom_call.1} parent=19 // pred_check_branch
          %376 = sbr.rel (%p374) target = $region40
        $region39: #{tpu_custom_call.1} parent=19 // pred_region
          %s377 = smul.u32 2, %s30
          %p378 = scmp.lt.s32.totalorder %s377, 3
          %s379 = scalar_select %p378, %s377, 3
          %s380 = scalar_lea.vmem %s5, %s379
          %s381 = smul.u32 2, %s30
        $region40: #{tpu_custom_call.1} parent=19 // pred_fallthru
          _
      $region20: #{tpu_custom_call.1} parent=5 // pred_fallthru
        _
      %p382 = scmp.le.s32.totalorder 1, %s22
      %p383 = scmp.lt.s32.totalorder %s22, 3
      %p384 = pnand %p382, %p383
      %p385 = pneg %p384
      // Predicated region
      $region41: #{tpu_custom_call.1} parent=5 // pred_check
        _
      $region42: #{tpu_custom_call.1} parent=5 // pred_check_branch
        %387 = sbr.rel (%p384) target = $region44
      $region43: #{tpu_custom_call.1} parent=5 // pred_region
        %s388 = ssub.s32 %s22, 1
        // Predicated region
        $region45: #{tpu_custom_call.1} parent=43 // pred_check
          %p389 = pneg %p69
        $region46: #{tpu_custom_call.1} parent=43 // pred_check_branch
          %391 = sbr.rel (%p389) target = $region48
        $region47: #{tpu_custom_call.1} parent=43 // pred_region
          %393 = dma.done [#allocation3], 1024
        $region48: #{tpu_custom_call.1} parent=43 // pred_fallthru
          _
        %s394 = sand.u32 %s27, 1
        %s395 = scalar_lea.sflag [#allocation6], %s394
        %s396 = sand.u32 %s84, 1
        %s397 = smul.addr %s396, 1024
        %s398 = scalar_lea.vmem [#allocation5], %s397
        // Predicated region
        $region49: #{tpu_custom_call.1} parent=43 // pred_check
          %p399 = pneg %p97
        $region50: #{tpu_custom_call.1} parent=43 // pred_check_branch
          %401 = sbr.rel (%p399) target = $region52
        $region51: #{tpu_custom_call.1} parent=43 // pred_region
          %403 = dma.done %s395, 16384
        $region52: #{tpu_custom_call.1} parent=43 // pred_fallthru
          _
        %s404 = sand.u32 %s27, 1
        %s405 = scalar_lea.sflag [#allocation6], %s404
        %s406 = sand.u32 %s112, 1
        %s407 = smul.addr %s406, 1024
        %s408 = scalar_lea.vmem [#allocation7], %s407
        // Predicated region
        $region53: #{tpu_custom_call.1} parent=43 // pred_check
          %p409 = pneg %p125
        $region54: #{tpu_custom_call.1} parent=43 // pred_check_branch
          %411 = sbr.rel (%p409) target = $region56
        $region55: #{tpu_custom_call.1} parent=43 // pred_region
          %413 = dma.done %s405, 16384
        $region56: #{tpu_custom_call.1} parent=43 // pred_fallthru
          _
        %s414 = sand.u32 %s27, 1
        %s415 = scalar_lea.sflag [#allocation9], %s414
        %s416 = sand.u32 %s140, 1
        %s417 = smul.addr %s416, 1024
        %s418 = scalar_lea.vmem [#allocation8], %s417
        // Predicated region
        $region57: #{tpu_custom_call.1} parent=43 // pred_check
          %p419 = pneg %p153
        $region58: #{tpu_custom_call.1} parent=43 // pred_check_branch
          %421 = sbr.rel (%p419) target = $region60
        $region59: #{tpu_custom_call.1} parent=43 // pred_region
          %423 = dma.done %s415, 16384
        $region60: #{tpu_custom_call.1} parent=43 // pred_fallthru
          _
        %s424 = sand.u32 %s27, 1
        %s425 = scalar_lea.sflag [#allocation9], %s424
        %s426 = sand.u32 %s168, 1
        %s427 = smul.addr %s426, 1024
        %s428 = scalar_lea.vmem [#allocation10], %s427
        // Predicated region
        $region61: #{tpu_custom_call.1} parent=43 // pred_check
          %p429 = pneg %p181
        $region62: #{tpu_custom_call.1} parent=43 // pred_check_branch
          %431 = sbr.rel (%p429) target = $region64
        $region63: #{tpu_custom_call.1} parent=43 // pred_region
          %433 = dma.done %s425, 16384
        $region64: #{tpu_custom_call.1} parent=43 // pred_fallthru
          _
        %p434 = pneg %p69
        %p435 = pneg %p66
        %s436 = sand.u32 %s27, 1
        %s437 = scalar_lea.sflag [#allocation6], %s436
        %s438 = sand.u32 %s84, 1
        %s439 = smul.addr %s438, 1024
        %s440 = scalar_lea.vmem [#allocation5], %s439
        %p441 = pneg %p97
        %p442 = pneg %p94
        %s443 = sand.u32 %s27, 1
        %s444 = scalar_lea.sflag [#allocation6], %s443
        %s445 = sand.u32 %s112, 1
        %s446 = smul.addr %s445, 1024
        %s447 = scalar_lea.vmem [#allocation7], %s446
        %p448 = pneg %p125
        %p449 = pneg %p122
        %s450 = sand.u32 %s27, 1
        %s451 = scalar_lea.sflag [#allocation9], %s450
        %s452 = sand.u32 %s140, 1
        %s453 = smul.addr %s452, 1024
        %s454 = scalar_lea.vmem [#allocation8], %s453
        %p455 = pneg %p153
        %p456 = pneg %p150
        %s457 = sand.u32 %s27, 1
        %s458 = scalar_lea.sflag [#allocation9], %s457
        %s459 = sand.u32 %s168, 1
        %s460 = smul.addr %s459, 1024
        %s461 = scalar_lea.vmem [#allocation10], %s460
        %p462 = pneg %p181
        %p463 = pneg %p178
        %s464 = smul.u32 2, %s33
        %p465 = scmp.lt.s32.totalorder %s464, 3
        %s466 = scalar_select %p465, %s464, 3
        %s467 = scalar_lea.vmem %s5, %s466
        %p468 = pneg %p207
        %p469 = pneg %p204
        %p470 = pneg %p235
        %p471 = pneg %p232
        %s472 = sand.u32 %s222, 1
        %s473 = scalar_lea.sflag [#allocation4], %s472
        %s474 = sand.u32 %s222, 1
        %s475 = smul.addr %s474, 32
        %s476 = scalar_lea.vmem [#allocation11], %s475
        %s477 = smul.u32 2, %s32
        %s478 = smul.u32 4, %s34
        %s479 = smul.u32 64, %s34
        %s480 = smul.u32 2, %s33
        %s481 = smul.u32 64, %s34
        %s482 = smul.u32 2, %s33
        %s483 = smul.u32 64, %s34
        %s484 = smul.u32 2, %s33
        %s485 = smul.u32 64, %s34
        %s486 = smul.u32 2, %s33
        %s487 = smul.u32 2, %s33
        %p488 = scmp.lt.s32.totalorder %s487, 3
        %s489 = scalar_select %p488, %s487, 3
        %s490 = scalar_lea.vmem %s5, %s489
        %s491 = smul.u32 2, %s33
        %s492 = smul.u32 2, %s32
        %s493 = smul.u32 2, %s33
        %p494 = scmp.eq.s32.totalorder %s34, 0
        // Predicated region
        $region65: #{tpu_custom_call.1} parent=43 // pred_check
          %p495 = pneg %p494
        $region66: #{tpu_custom_call.1} parent=43 // pred_check_branch
          %497 = sbr.rel (%p495) target = $region68
        $region67: #{tpu_custom_call.1} parent=43 // pred_region
          %498 = vst [vmem:[%s476] sm:$0xff] 0.0
          %499 = vst [vmem:[%s476 + $0x8] sm:$0xff] 0.0
          %500 = vst [vmem:[%s476 + $0x10] sm:$0xff] 0.0
          %501 = vst [vmem:[%s476 + $0x18] sm:$0xff] 0.0
        $region68: #{tpu_custom_call.1} parent=43 // pred_fallthru
          _
        %v502 = vld [vmem:[%s408] sm:$0xff]
        %v503 = vld [vmem:[%s408 + $0x8] sm:$0xff]
        %v504 = vld [vmem:[%s408 + $0x10] sm:$0xff]
        %v505 = vld [vmem:[%s408 + $0x18] sm:$0xff]
        %v506 = vld [vmem:[%s408 + $0x20] sm:$0xff]
        %v507 = vld [vmem:[%s408 + $0x28] sm:$0xff]
        %v508 = vld [vmem:[%s408 + $0x30] sm:$0xff]
        %v509 = vld [vmem:[%s408 + $0x38] sm:$0xff]
        %v510 = vld [vmem:[%s408 + $0x40] sm:$0xff]
        %v511 = vld [vmem:[%s408 + $0x48] sm:$0xff]
        %v512 = vld [vmem:[%s408 + $0x50] sm:$0xff]
        %v513 = vld [vmem:[%s408 + $0x58] sm:$0xff]
        %v514 = vld [vmem:[%s408 + $0x60] sm:$0xff]
        %v515 = vld [vmem:[%s408 + $0x68] sm:$0xff]
        %v516 = vld [vmem:[%s408 + $0x70] sm:$0xff]
        %v517 = vld [vmem:[%s408 + $0x78] sm:$0xff]
        %v518 = vld [vmem:[%s408 + $0x80] sm:$0xff]
        %v519 = vld [vmem:[%s408 + $0x88] sm:$0xff]
        %v520 = vld [vmem:[%s408 + $0x90] sm:$0xff]
        %v521 = vld [vmem:[%s408 + $0x98] sm:$0xff]
        %v522 = vld [vmem:[%s408 + $0xa0] sm:$0xff]
        %v523 = vld [vmem:[%s408 + $0xa8] sm:$0xff]
        %v524 = vld [vmem:[%s408 + $0xb0] sm:$0xff]
        %v525 = vld [vmem:[%s408 + $0xb8] sm:$0xff]
        %v526 = vld [vmem:[%s408 + $0xc0] sm:$0xff]
        %v527 = vld [vmem:[%s408 + $0xc8] sm:$0xff]
        %v528 = vld [vmem:[%s408 + $0xd0] sm:$0xff]
        %v529 = vld [vmem:[%s408 + $0xd8] sm:$0xff]
        %v530 = vld [vmem:[%s408 + $0xe0] sm:$0xff]
        %v531 = vld [vmem:[%s408 + $0xe8] sm:$0xff]
        %v532 = vld [vmem:[%s408 + $0xf0] sm:$0xff]
        %v533 = vld [vmem:[%s408 + $0xf8] sm:$0xff]
        %v534 = vld [vmem:[%s408 + $0x100] sm:$0xff]
        %v535 = vld [vmem:[%s408 + $0x108] sm:$0xff]
        %v536 = vld [vmem:[%s408 + $0x110] sm:$0xff]
        %v537 = vld [vmem:[%s408 + $0x118] sm:$0xff]
        %v538 = vld [vmem:[%s408 + $0x120] sm:$0xff]
        %v539 = vld [vmem:[%s408 + $0x128] sm:$0xff]
        %v540 = vld [vmem:[%s408 + $0x130] sm:$0xff]
        %v541 = vld [vmem:[%s408 + $0x138] sm:$0xff]
        %v542 = vld [vmem:[%s408 + $0x140] sm:$0xff]
        %v543 = vld [vmem:[%s408 + $0x148] sm:$0xff]
        %v544 = vld [vmem:[%s408 + $0x150] sm:$0xff]
        %v545 = vld [vmem:[%s408 + $0x158] sm:$0xff]
        %v546 = vld [vmem:[%s408 + $0x160] sm:$0xff]
        %v547 = vld [vmem:[%s408 + $0x168] sm:$0xff]
        %v548 = vld [vmem:[%s408 + $0x170] sm:$0xff]
        %v549 = vld [vmem:[%s408 + $0x178] sm:$0xff]
        %v550 = vld [vmem:[%s408 + $0x180] sm:$0xff]
        %v551 = vld [vmem:[%s408 + $0x188] sm:$0xff]
        %v552 = vld [vmem:[%s408 + $0x190] sm:$0xff]
        %v553 = vld [vmem:[%s408 + $0x198] sm:$0xff]
        %v554 = vld [vmem:[%s408 + $0x1a0] sm:$0xff]
        %v555 = vld [vmem:[%s408 + $0x1a8] sm:$0xff]
        %v556 = vld [vmem:[%s408 + $0x1b0] sm:$0xff]
        %v557 = vld [vmem:[%s408 + $0x1b8] sm:$0xff]
        %v558 = vld [vmem:[%s408 + $0x1c0] sm:$0xff]
        %v559 = vld [vmem:[%s408 + $0x1c8] sm:$0xff]
        %v560 = vld [vmem:[%s408 + $0x1d0] sm:$0xff]
        %v561 = vld [vmem:[%s408 + $0x1d8] sm:$0xff]
        %v562 = vld [vmem:[%s408 + $0x1e0] sm:$0xff]
        %v563 = vld [vmem:[%s408 + $0x1e8] sm:$0xff]
        %v564 = vld [vmem:[%s408 + $0x1f0] sm:$0xff]
        %v565 = vld [vmem:[%s408 + $0x1f8] sm:$0xff]
        %v566 = vld [vmem:[%s408 + $0x200] sm:$0xff]
        %v567 = vld [vmem:[%s408 + $0x208] sm:$0xff]
        %v568 = vld [vmem:[%s408 + $0x210] sm:$0xff]
        %v569 = vld [vmem:[%s408 + $0x218] sm:$0xff]
        %v570 = vld [vmem:[%s408 + $0x220] sm:$0xff]
        %v571 = vld [vmem:[%s408 + $0x228] sm:$0xff]
        %v572 = vld [vmem:[%s408 + $0x230] sm:$0xff]
        %v573 = vld [vmem:[%s408 + $0x238] sm:$0xff]
        %v574 = vld [vmem:[%s408 + $0x240] sm:$0xff]
        %v575 = vld [vmem:[%s408 + $0x248] sm:$0xff]
        %v576 = vld [vmem:[%s408 + $0x250] sm:$0xff]
        %v577 = vld [vmem:[%s408 + $0x258] sm:$0xff]
        %v578 = vld [vmem:[%s408 + $0x260] sm:$0xff]
        %v579 = vld [vmem:[%s408 + $0x268] sm:$0xff]
        %v580 = vld [vmem:[%s408 + $0x270] sm:$0xff]
        %v581 = vld [vmem:[%s408 + $0x278] sm:$0xff]
        %v582 = vld [vmem:[%s408 + $0x280] sm:$0xff]
        %v583 = vld [vmem:[%s408 + $0x288] sm:$0xff]
        %v584 = vld [vmem:[%s408 + $0x290] sm:$0xff]
        %v585 = vld [vmem:[%s408 + $0x298] sm:$0xff]
        %v586 = vld [vmem:[%s408 + $0x2a0] sm:$0xff]
        %v587 = vld [vmem:[%s408 + $0x2a8] sm:$0xff]
        %v588 = vld [vmem:[%s408 + $0x2b0] sm:$0xff]
        %v589 = vld [vmem:[%s408 + $0x2b8] sm:$0xff]
        %v590 = vld [vmem:[%s408 + $0x2c0] sm:$0xff]
        %v591 = vld [vmem:[%s408 + $0x2c8] sm:$0xff]
        %v592 = vld [vmem:[%s408 + $0x2d0] sm:$0xff]
        %v593 = vld [vmem:[%s408 + $0x2d8] sm:$0xff]
        %v594 = vld [vmem:[%s408 + $0x2e0] sm:$0xff]
        %v595 = vld [vmem:[%s408 + $0x2e8] sm:$0xff]
        %v596 = vld [vmem:[%s408 + $0x2f0] sm:$0xff]
        %v597 = vld [vmem:[%s408 + $0x2f8] sm:$0xff]
        %v598 = vld [vmem:[%s408 + $0x300] sm:$0xff]
        %v599 = vld [vmem:[%s408 + $0x308] sm:$0xff]
        %v600 = vld [vmem:[%s408 + $0x310] sm:$0xff]
        %v601 = vld [vmem:[%s408 + $0x318] sm:$0xff]
        %v602 = vld [vmem:[%s408 + $0x320] sm:$0xff]
        %v603 = vld [vmem:[%s408 + $0x328] sm:$0xff]
        %v604 = vld [vmem:[%s408 + $0x330] sm:$0xff]
        %v605 = vld [vmem:[%s408 + $0x338] sm:$0xff]
        %v606 = vld [vmem:[%s408 + $0x340] sm:$0xff]
        %v607 = vld [vmem:[%s408 + $0x348] sm:$0xff]
        %v608 = vld [vmem:[%s408 + $0x350] sm:$0xff]
        %v609 = vld [vmem:[%s408 + $0x358] sm:$0xff]
        %v610 = vld [vmem:[%s408 + $0x360] sm:$0xff]
        %v611 = vld [vmem:[%s408 + $0x368] sm:$0xff]
        %v612 = vld [vmem:[%s408 + $0x370] sm:$0xff]
        %v613 = vld [vmem:[%s408 + $0x378] sm:$0xff]
        %v614 = vld [vmem:[%s408 + $0x380] sm:$0xff]
        %v615 = vld [vmem:[%s408 + $0x388] sm:$0xff]
        %v616 = vld [vmem:[%s408 + $0x390] sm:$0xff]
        %v617 = vld [vmem:[%s408 + $0x398] sm:$0xff]
        %v618 = vld [vmem:[%s408 + $0x3a0] sm:$0xff]
        %v619 = vld [vmem:[%s408 + $0x3a8] sm:$0xff]
        %v620 = vld [vmem:[%s408 + $0x3b0] sm:$0xff]
        %v621 = vld [vmem:[%s408 + $0x3b8] sm:$0xff]
        %v622 = vld [vmem:[%s408 + $0x3c0] sm:$0xff]
        %v623 = vld [vmem:[%s408 + $0x3c8] sm:$0xff]
        %v624 = vld [vmem:[%s408 + $0x3d0] sm:$0xff]
        %v625 = vld [vmem:[%s408 + $0x3d8] sm:$0xff]
        %v626 = vld [vmem:[%s408 + $0x3e0] sm:$0xff]
        %v627 = vld [vmem:[%s408 + $0x3e8] sm:$0xff]
        %v628 = vld [vmem:[%s408 + $0x3f0] sm:$0xff]
        %v629 = vld [vmem:[%s408 + $0x3f8] sm:$0xff]
        %v630 = vld [vmem:[%s418] sm:$0xff]
        %v631 = vld [vmem:[%s418 + $0x8] sm:$0xff]
        %v632 = vld [vmem:[%s418 + $0x10] sm:$0xff]
        %v633 = vld [vmem:[%s418 + $0x18] sm:$0xff]
        %v634 = vld [vmem:[%s418 + $0x20] sm:$0xff]
        %v635 = vld [vmem:[%s418 + $0x28] sm:$0xff]
        %v636 = vld [vmem:[%s418 + $0x30] sm:$0xff]
        %v637 = vld [vmem:[%s418 + $0x38] sm:$0xff]
        %v638 = vld [vmem:[%s418 + $0x40] sm:$0xff]
        %v639 = vld [vmem:[%s418 + $0x48] sm:$0xff]
        %v640 = vld [vmem:[%s418 + $0x50] sm:$0xff]
        %v641 = vld [vmem:[%s418 + $0x58] sm:$0xff]
        %v642 = vld [vmem:[%s418 + $0x60] sm:$0xff]
        %v643 = vld [vmem:[%s418 + $0x68] sm:$0xff]
        %v644 = vld [vmem:[%s418 + $0x70] sm:$0xff]
        %v645 = vld [vmem:[%s418 + $0x78] sm:$0xff]
        %v646 = vld [vmem:[%s418 + $0x80] sm:$0xff]
        %v647 = vld [vmem:[%s418 + $0x88] sm:$0xff]
        %v648 = vld [vmem:[%s418 + $0x90] sm:$0xff]
        %v649 = vld [vmem:[%s418 + $0x98] sm:$0xff]
        %v650 = vld [vmem:[%s418 + $0xa0] sm:$0xff]
        %v651 = vld [vmem:[%s418 + $0xa8] sm:$0xff]
        %v652 = vld [vmem:[%s418 + $0xb0] sm:$0xff]
        %v653 = vld [vmem:[%s418 + $0xb8] sm:$0xff]
        %v654 = vld [vmem:[%s418 + $0xc0] sm:$0xff]
        %v655 = vld [vmem:[%s418 + $0xc8] sm:$0xff]
        %v656 = vld [vmem:[%s418 + $0xd0] sm:$0xff]
        %v657 = vld [vmem:[%s418 + $0xd8] sm:$0xff]
        %v658 = vld [vmem:[%s418 + $0xe0] sm:$0xff]
        %v659 = vld [vmem:[%s418 + $0xe8] sm:$0xff]
        %v660 = vld [vmem:[%s418 + $0xf0] sm:$0xff]
        %v661 = vld [vmem:[%s418 + $0xf8] sm:$0xff]
        %v662 = vld [vmem:[%s418 + $0x100] sm:$0xff]
        %v663 = vld [vmem:[%s418 + $0x108] sm:$0xff]
        %v664 = vld [vmem:[%s418 + $0x110] sm:$0xff]
        %v665 = vld [vmem:[%s418 + $0x118] sm:$0xff]
        %v666 = vld [vmem:[%s418 + $0x120] sm:$0xff]
        %v667 = vld [vmem:[%s418 + $0x128] sm:$0xff]
        %v668 = vld [vmem:[%s418 + $0x130] sm:$0xff]
        %v669 = vld [vmem:[%s418 + $0x138] sm:$0xff]
        %v670 = vld [vmem:[%s418 + $0x140] sm:$0xff]
        %v671 = vld [vmem:[%s418 + $0x148] sm:$0xff]
        %v672 = vld [vmem:[%s418 + $0x150] sm:$0xff]
        %v673 = vld [vmem:[%s418 + $0x158] sm:$0xff]
        %v674 = vld [vmem:[%s418 + $0x160] sm:$0xff]
        %v675 = vld [vmem:[%s418 + $0x168] sm:$0xff]
        %v676 = vld [vmem:[%s418 + $0x170] sm:$0xff]
        %v677 = vld [vmem:[%s418 + $0x178] sm:$0xff]
        %v678 = vld [vmem:[%s418 + $0x180] sm:$0xff]
        %v679 = vld [vmem:[%s418 + $0x188] sm:$0xff]
        %v680 = vld [vmem:[%s418 + $0x190] sm:$0xff]
        %v681 = vld [vmem:[%s418 + $0x198] sm:$0xff]
        %v682 = vld [vmem:[%s418 + $0x1a0] sm:$0xff]
        %v683 = vld [vmem:[%s418 + $0x1a8] sm:$0xff]
        %v684 = vld [vmem:[%s418 + $0x1b0] sm:$0xff]
        %v685 = vld [vmem:[%s418 + $0x1b8] sm:$0xff]
        %v686 = vld [vmem:[%s418 + $0x1c0] sm:$0xff]
        %v687 = vld [vmem:[%s418 + $0x1c8] sm:$0xff]
        %v688 = vld [vmem:[%s418 + $0x1d0] sm:$0xff]
        %v689 = vld [vmem:[%s418 + $0x1d8] sm:$0xff]
        %v690 = vld [vmem:[%s418 + $0x1e0] sm:$0xff]
        %v691 = vld [vmem:[%s418 + $0x1e8] sm:$0xff]
        %v692 = vld [vmem:[%s418 + $0x1f0] sm:$0xff]
        %v693 = vld [vmem:[%s418 + $0x1f8] sm:$0xff]
        %v694 = vld [vmem:[%s418 + $0x200] sm:$0xff]
        %v695 = vld [vmem:[%s418 + $0x208] sm:$0xff]
        %v696 = vld [vmem:[%s418 + $0x210] sm:$0xff]
        %v697 = vld [vmem:[%s418 + $0x218] sm:$0xff]
        %v698 = vld [vmem:[%s418 + $0x220] sm:$0xff]
        %v699 = vld [vmem:[%s418 + $0x228] sm:$0xff]
        %v700 = vld [vmem:[%s418 + $0x230] sm:$0xff]
        %v701 = vld [vmem:[%s418 + $0x238] sm:$0xff]
        %v702 = vld [vmem:[%s418 + $0x240] sm:$0xff]
        %v703 = vld [vmem:[%s418 + $0x248] sm:$0xff]
        %v704 = vld [vmem:[%s418 + $0x250] sm:$0xff]
        %v705 = vld [vmem:[%s418 + $0x258] sm:$0xff]
        %v706 = vld [vmem:[%s418 + $0x260] sm:$0xff]
        %v707 = vld [vmem:[%s418 + $0x268] sm:$0xff]
        %v708 = vld [vmem:[%s418 + $0x270] sm:$0xff]
        %v709 = vld [vmem:[%s418 + $0x278] sm:$0xff]
        %v710 = vld [vmem:[%s418 + $0x280] sm:$0xff]
        %v711 = vld [vmem:[%s418 + $0x288] sm:$0xff]
        %v712 = vld [vmem:[%s418 + $0x290] sm:$0xff]
        %v713 = vld [vmem:[%s418 + $0x298] sm:$0xff]
        %v714 = vld [vmem:[%s418 + $0x2a0] sm:$0xff]
        %v715 = vld [vmem:[%s418 + $0x2a8] sm:$0xff]
        %v716 = vld [vmem:[%s418 + $0x2b0] sm:$0xff]
        %v717 = vld [vmem:[%s418 + $0x2b8] sm:$0xff]
        %v718 = vld [vmem:[%s418 + $0x2c0] sm:$0xff]
        %v719 = vld [vmem:[%s418 + $0x2c8] sm:$0xff]
        %v720 = vld [vmem:[%s418 + $0x2d0] sm:$0xff]
        %v721 = vld [vmem:[%s418 + $0x2d8] sm:$0xff]
        %v722 = vld [vmem:[%s418 + $0x2e0] sm:$0xff]
        %v723 = vld [vmem:[%s418 + $0x2e8] sm:$0xff]
        %v724 = vld [vmem:[%s418 + $0x2f0] sm:$0xff]
        %v725 = vld [vmem:[%s418 + $0x2f8] sm:$0xff]
        %v726 = vld [vmem:[%s418 + $0x300] sm:$0xff]
        %v727 = vld [vmem:[%s418 + $0x308] sm:$0xff]
        %v728 = vld [vmem:[%s418 + $0x310] sm:$0xff]
        %v729 = vld [vmem:[%s418 + $0x318] sm:$0xff]
        %v730 = vld [vmem:[%s418 + $0x320] sm:$0xff]
        %v731 = vld [vmem:[%s418 + $0x328] sm:$0xff]
        %v732 = vld [vmem:[%s418 + $0x330] sm:$0xff]
        %v733 = vld [vmem:[%s418 + $0x338] sm:$0xff]
        %v734 = vld [vmem:[%s418 + $0x340] sm:$0xff]
        %v735 = vld [vmem:[%s418 + $0x348] sm:$0xff]
        %v736 = vld [vmem:[%s418 + $0x350] sm:$0xff]
        %v737 = vld [vmem:[%s418 + $0x358] sm:$0xff]
        %v738 = vld [vmem:[%s418 + $0x360] sm:$0xff]
        %v739 = vld [vmem:[%s418 + $0x368] sm:$0xff]
        %v740 = vld [vmem:[%s418 + $0x370] sm:$0xff]
        %v741 = vld [vmem:[%s418 + $0x378] sm:$0xff]
        %v742 = vld [vmem:[%s418 + $0x380] sm:$0xff]
        %v743 = vld [vmem:[%s418 + $0x388] sm:$0xff]
        %v744 = vld [vmem:[%s418 + $0x390] sm:$0xff]
        %v745 = vld [vmem:[%s418 + $0x398] sm:$0xff]
        %v746 = vld [vmem:[%s418 + $0x3a0] sm:$0xff]
        %v747 = vld [vmem:[%s418 + $0x3a8] sm:$0xff]
        %v748 = vld [vmem:[%s418 + $0x3b0] sm:$0xff]
        %v749 = vld [vmem:[%s418 + $0x3b8] sm:$0xff]
        %v750 = vld [vmem:[%s418 + $0x3c0] sm:$0xff]
        %v751 = vld [vmem:[%s418 + $0x3c8] sm:$0xff]
        %v752 = vld [vmem:[%s418 + $0x3d0] sm:$0xff]
        %v753 = vld [vmem:[%s418 + $0x3d8] sm:$0xff]
        %v754 = vld [vmem:[%s418 + $0x3e0] sm:$0xff]
        %v755 = vld [vmem:[%s418 + $0x3e8] sm:$0xff]
        %v756 = vld [vmem:[%s418 + $0x3f0] sm:$0xff]
        %v757 = vld [vmem:[%s418 + $0x3f8] sm:$0xff]
        %v758 = vld [vmem:[%s428] sm:$0xff]
        %v759 = vld [vmem:[%s428 + $0x8] sm:$0xff]
        %v760 = vld [vmem:[%s428 + $0x10] sm:$0xff]
        %v761 = vld [vmem:[%s428 + $0x18] sm:$0xff]
        %v762 = vld [vmem:[%s428 + $0x20] sm:$0xff]
        %v763 = vld [vmem:[%s428 + $0x28] sm:$0xff]
        %v764 = vld [vmem:[%s428 + $0x30] sm:$0xff]
        %v765 = vld [vmem:[%s428 + $0x38] sm:$0xff]
        %v766 = vld [vmem:[%s428 + $0x40] sm:$0xff]
        %v767 = vld [vmem:[%s428 + $0x48] sm:$0xff]
        %v768 = vld [vmem:[%s428 + $0x50] sm:$0xff]
        %v769 = vld [vmem:[%s428 + $0x58] sm:$0xff]
        %v770 = vld [vmem:[%s428 + $0x60] sm:$0xff]
        %v771 = vld [vmem:[%s428 + $0x68] sm:$0xff]
        %v772 = vld [vmem:[%s428 + $0x70] sm:$0xff]
        %v773 = vld [vmem:[%s428 + $0x78] sm:$0xff]
        %v774 = vld [vmem:[%s428 + $0x80] sm:$0xff]
        %v775 = vld [vmem:[%s428 + $0x88] sm:$0xff]
        %v776 = vld [vmem:[%s428 + $0x90] sm:$0xff]
        %v777 = vld [vmem:[%s428 + $0x98] sm:$0xff]
        %v778 = vld [vmem:[%s428 + $0xa0] sm:$0xff]
        %v779 = vld [vmem:[%s428 + $0xa8] sm:$0xff]
        %v780 = vld [vmem:[%s428 + $0xb0] sm:$0xff]
        %v781 = vld [vmem:[%s428 + $0xb8] sm:$0xff]
        %v782 = vld [vmem:[%s428 + $0xc0] sm:$0xff]
        %v783 = vld [vmem:[%s428 + $0xc8] sm:$0xff]
        %v784 = vld [vmem:[%s428 + $0xd0] sm:$0xff]
        %v785 = vld [vmem:[%s428 + $0xd8] sm:$0xff]
        %v786 = vld [vmem:[%s428 + $0xe0] sm:$0xff]
        %v787 = vld [vmem:[%s428 + $0xe8] sm:$0xff]
        %v788 = vld [vmem:[%s428 + $0xf0] sm:$0xff]
        %v789 = vld [vmem:[%s428 + $0xf8] sm:$0xff]
        %v790 = vld [vmem:[%s428 + $0x100] sm:$0xff]
        %v791 = vld [vmem:[%s428 + $0x108] sm:$0xff]
        %v792 = vld [vmem:[%s428 + $0x110] sm:$0xff]
        %v793 = vld [vmem:[%s428 + $0x118] sm:$0xff]
        %v794 = vld [vmem:[%s428 + $0x120] sm:$0xff]
        %v795 = vld [vmem:[%s428 + $0x128] sm:$0xff]
        %v796 = vld [vmem:[%s428 + $0x130] sm:$0xff]
        %v797 = vld [vmem:[%s428 + $0x138] sm:$0xff]
        %v798 = vld [vmem:[%s428 + $0x140] sm:$0xff]
        %v799 = vld [vmem:[%s428 + $0x148] sm:$0xff]
        %v800 = vld [vmem:[%s428 + $0x150] sm:$0xff]
        %v801 = vld [vmem:[%s428 + $0x158] sm:$0xff]
        %v802 = vld [vmem:[%s428 + $0x160] sm:$0xff]
        %v803 = vld [vmem:[%s428 + $0x168] sm:$0xff]
        %v804 = vld [vmem:[%s428 + $0x170] sm:$0xff]
        %v805 = vld [vmem:[%s428 + $0x178] sm:$0xff]
        %v806 = vld [vmem:[%s428 + $0x180] sm:$0xff]
        %v807 = vld [vmem:[%s428 + $0x188] sm:$0xff]
        %v808 = vld [vmem:[%s428 + $0x190] sm:$0xff]
        %v809 = vld [vmem:[%s428 + $0x198] sm:$0xff]
        %v810 = vld [vmem:[%s428 + $0x1a0] sm:$0xff]
        %v811 = vld [vmem:[%s428 + $0x1a8] sm:$0xff]
        %v812 = vld [vmem:[%s428 + $0x1b0] sm:$0xff]
        %v813 = vld [vmem:[%s428 + $0x1b8] sm:$0xff]
        %v814 = vld [vmem:[%s428 + $0x1c0] sm:$0xff]
        %v815 = vld [vmem:[%s428 + $0x1c8] sm:$0xff]
        %v816 = vld [vmem:[%s428 + $0x1d0] sm:$0xff]
        %v817 = vld [vmem:[%s428 + $0x1d8] sm:$0xff]
        %v818 = vld [vmem:[%s428 + $0x1e0] sm:$0xff]
        %v819 = vld [vmem:[%s428 + $0x1e8] sm:$0xff]
        %v820 = vld [vmem:[%s428 + $0x1f0] sm:$0xff]
        %v821 = vld [vmem:[%s428 + $0x1f8] sm:$0xff]
        %v822 = vld [vmem:[%s428 + $0x200] sm:$0xff]
        %v823 = vld [vmem:[%s428 + $0x208] sm:$0xff]
        %v824 = vld [vmem:[%s428 + $0x210] sm:$0xff]
        %v825 = vld [vmem:[%s428 + $0x218] sm:$0xff]
        %v826 = vld [vmem:[%s428 + $0x220] sm:$0xff]
        %v827 = vld [vmem:[%s428 + $0x228] sm:$0xff]
        %v828 = vld [vmem:[%s428 + $0x230] sm:$0xff]
        %v829 = vld [vmem:[%s428 + $0x238] sm:$0xff]
        %v830 = vld [vmem:[%s428 + $0x240] sm:$0xff]
        %v831 = vld [vmem:[%s428 + $0x248] sm:$0xff]
        %v832 = vld [vmem:[%s428 + $0x250] sm:$0xff]
        %v833 = vld [vmem:[%s428 + $0x258] sm:$0xff]
        %v834 = vld [vmem:[%s428 + $0x260] sm:$0xff]
        %v835 = vld [vmem:[%s428 + $0x268] sm:$0xff]
        %v836 = vld [vmem:[%s428 + $0x270] sm:$0xff]
        %v837 = vld [vmem:[%s428 + $0x278] sm:$0xff]
        %v838 = vld [vmem:[%s428 + $0x280] sm:$0xff]
        %v839 = vld [vmem:[%s428 + $0x288] sm:$0xff]
        %v840 = vld [vmem:[%s428 + $0x290] sm:$0xff]
        %v841 = vld [vmem:[%s428 + $0x298] sm:$0xff]
        %v842 = vld [vmem:[%s428 + $0x2a0] sm:$0xff]
        %v843 = vld [vmem:[%s428 + $0x2a8] sm:$0xff]
        %v844 = vld [vmem:[%s428 + $0x2b0] sm:$0xff]
        %v845 = vld [vmem:[%s428 + $0x2b8] sm:$0xff]
        %v846 = vld [vmem:[%s428 + $0x2c0] sm:$0xff]
        %v847 = vld [vmem:[%s428 + $0x2c8] sm:$0xff]
        %v848 = vld [vmem:[%s428 + $0x2d0] sm:$0xff]
        %v849 = vld [vmem:[%s428 + $0x2d8] sm:$0xff]
        %v850 = vld [vmem:[%s428 + $0x2e0] sm:$0xff]
        %v851 = vld [vmem:[%s428 + $0x2e8] sm:$0xff]
        %v852 = vld [vmem:[%s428 + $0x2f0] sm:$0xff]
        %v853 = vld [vmem:[%s428 + $0x2f8] sm:$0xff]
        %v854 = vld [vmem:[%s428 + $0x300] sm:$0xff]
        %v855 = vld [vmem:[%s428 + $0x308] sm:$0xff]
        %v856 = vld [vmem:[%s428 + $0x310] sm:$0xff]
        %v857 = vld [vmem:[%s428 + $0x318] sm:$0xff]
        %v858 = vld [vmem:[%s428 + $0x320] sm:$0xff]
        %v859 = vld [vmem:[%s428 + $0x328] sm:$0xff]
        %v860 = vld [vmem:[%s428 + $0x330] sm:$0xff]
        %v861 = vld [vmem:[%s428 + $0x338] sm:$0xff]
        %v862 = vld [vmem:[%s428 + $0x340] sm:$0xff]
        %v863 = vld [vmem:[%s428 + $0x348] sm:$0xff]
        %v864 = vld [vmem:[%s428 + $0x350] sm:$0xff]
        %v865 = vld [vmem:[%s428 + $0x358] sm:$0xff]
        %v866 = vld [vmem:[%s428 + $0x360] sm:$0xff]
        %v867 = vld [vmem:[%s428 + $0x368] sm:$0xff]
        %v868 = vld [vmem:[%s428 + $0x370] sm:$0xff]
        %v869 = vld [vmem:[%s428 + $0x378] sm:$0xff]
        %v870 = vld [vmem:[%s428 + $0x380] sm:$0xff]
        %v871 = vld [vmem:[%s428 + $0x388] sm:$0xff]
        %v872 = vld [vmem:[%s428 + $0x390] sm:$0xff]
        %v873 = vld [vmem:[%s428 + $0x398] sm:$0xff]
        %v874 = vld [vmem:[%s428 + $0x3a0] sm:$0xff]
        %v875 = vld [vmem:[%s428 + $0x3a8] sm:$0xff]
        %v876 = vld [vmem:[%s428 + $0x3b0] sm:$0xff]
        %v877 = vld [vmem:[%s428 + $0x3b8] sm:$0xff]
        %v878 = vld [vmem:[%s428 + $0x3c0] sm:$0xff]
        %v879 = vld [vmem:[%s428 + $0x3c8] sm:$0xff]
        %v880 = vld [vmem:[%s428 + $0x3d0] sm:$0xff]
        %v881 = vld [vmem:[%s428 + $0x3d8] sm:$0xff]
        %v882 = vld [vmem:[%s428 + $0x3e0] sm:$0xff]
        %v883 = vld [vmem:[%s428 + $0x3e8] sm:$0xff]
        %v884 = vld [vmem:[%s428 + $0x3f0] sm:$0xff]
        %v885 = vld [vmem:[%s428 + $0x3f8] sm:$0xff]
        %v886 = vmul.f32 %v630, %v758
        %v887 = vmul.f32 %v631, %v759
        %v888 = vmul.f32 %v632, %v760
        %v889 = vmul.f32 %v633, %v761
        %v890 = vmul.f32 %v634, %v762
        %v891 = vmul.f32 %v635, %v763
        %v892 = vmul.f32 %v636, %v764
        %v893 = vmul.f32 %v637, %v765
        %v894 = vmul.f32 %v638, %v766
        %v895 = vmul.f32 %v639, %v767
        %v896 = vmul.f32 %v640, %v768
        %v897 = vmul.f32 %v641, %v769
        %v898 = vmul.f32 %v642, %v770
        %v899 = vmul.f32 %v643, %v771
        %v900 = vmul.f32 %v644, %v772
        %v901 = vmul.f32 %v645, %v773
        %v902 = vmul.f32 %v646, %v774
        %v903 = vmul.f32 %v647, %v775
        %v904 = vmul.f32 %v648, %v776
        %v905 = vmul.f32 %v649, %v777
        %v906 = vmul.f32 %v650, %v778
        %v907 = vmul.f32 %v651, %v779
        %v908 = vmul.f32 %v652, %v780
        %v909 = vmul.f32 %v653, %v781
        %v910 = vmul.f32 %v654, %v782
        %v911 = vmul.f32 %v655, %v783
        %v912 = vmul.f32 %v656, %v784
        %v913 = vmul.f32 %v657, %v785
        %v914 = vmul.f32 %v658, %v786
        %v915 = vmul.f32 %v659, %v787
        %v916 = vmul.f32 %v660, %v788
        %v917 = vmul.f32 %v661, %v789
        %v918 = vmul.f32 %v662, %v790
        %v919 = vmul.f32 %v663, %v791
        %v920 = vmul.f32 %v664, %v792
        %v921 = vmul.f32 %v665, %v793
        %v922 = vmul.f32 %v666, %v794
        %v923 = vmul.f32 %v667, %v795
        %v924 = vmul.f32 %v668, %v796
        %v925 = vmul.f32 %v669, %v797
        %v926 = vmul.f32 %v670, %v798
        %v927 = vmul.f32 %v671, %v799
        %v928 = vmul.f32 %v672, %v800
        %v929 = vmul.f32 %v673, %v801
        %v930 = vmul.f32 %v674, %v802
        %v931 = vmul.f32 %v675, %v803
        %v932 = vmul.f32 %v676, %v804
        %v933 = vmul.f32 %v677, %v805
        %v934 = vmul.f32 %v678, %v806
        %v935 = vmul.f32 %v679, %v807
        %v936 = vmul.f32 %v680, %v808
        %v937 = vmul.f32 %v681, %v809
        %v938 = vmul.f32 %v682, %v810
        %v939 = vmul.f32 %v683, %v811
        %v940 = vmul.f32 %v684, %v812
        %v941 = vmul.f32 %v685, %v813
        %v942 = vmul.f32 %v686, %v814
        %v943 = vmul.f32 %v687, %v815
        %v944 = vmul.f32 %v688, %v816
        %v945 = vmul.f32 %v689, %v817
        %v946 = vmul.f32 %v690, %v818
        %v947 = vmul.f32 %v691, %v819
        %v948 = vmul.f32 %v692, %v820
        %v949 = vmul.f32 %v693, %v821
        %v950 = vmul.f32 %v694, %v822
        %v951 = vmul.f32 %v695, %v823
        %v952 = vmul.f32 %v696, %v824
        %v953 = vmul.f32 %v697, %v825
        %v954 = vmul.f32 %v698, %v826
        %v955 = vmul.f32 %v699, %v827
        %v956 = vmul.f32 %v700, %v828
        %v957 = vmul.f32 %v701, %v829
        %v958 = vmul.f32 %v702, %v830
        %v959 = vmul.f32 %v703, %v831
        %v960 = vmul.f32 %v704, %v832
        %v961 = vmul.f32 %v705, %v833
        %v962 = vmul.f32 %v706, %v834
        %v963 = vmul.f32 %v707, %v835
        %v964 = vmul.f32 %v708, %v836
        %v965 = vmul.f32 %v709, %v837
        %v966 = vmul.f32 %v710, %v838
        %v967 = vmul.f32 %v711, %v839
        %v968 = vmul.f32 %v712, %v840
        %v969 = vmul.f32 %v713, %v841
        %v970 = vmul.f32 %v714, %v842
        %v971 = vmul.f32 %v715, %v843
        %v972 = vmul.f32 %v716, %v844
        %v973 = vmul.f32 %v717, %v845
        %v974 = vmul.f32 %v718, %v846
        %v975 = vmul.f32 %v719, %v847
        %v976 = vmul.f32 %v720, %v848
        %v977 = vmul.f32 %v721, %v849
        %v978 = vmul.f32 %v722, %v850
        %v979 = vmul.f32 %v723, %v851
        %v980 = vmul.f32 %v724, %v852
        %v981 = vmul.f32 %v725, %v853
        %v982 = vmul.f32 %v726, %v854
        %v983 = vmul.f32 %v727, %v855
        %v984 = vmul.f32 %v728, %v856
        %v985 = vmul.f32 %v729, %v857
        %v986 = vmul.f32 %v730, %v858
        %v987 = vmul.f32 %v731, %v859
        %v988 = vmul.f32 %v732, %v860
        %v989 = vmul.f32 %v733, %v861
        %v990 = vmul.f32 %v734, %v862
        %v991 = vmul.f32 %v735, %v863
        %v992 = vmul.f32 %v736, %v864
        %v993 = vmul.f32 %v737, %v865
        %v994 = vmul.f32 %v738, %v866
        %v995 = vmul.f32 %v739, %v867
        %v996 = vmul.f32 %v740, %v868
        %v997 = vmul.f32 %v741, %v869
        %v998 = vmul.f32 %v742, %v870
        %v999 = vmul.f32 %v743, %v871
        %v1000 = vmul.f32 %v744, %v872
        %v1001 = vmul.f32 %v745, %v873
        %v1002 = vmul.f32 %v746, %v874
        %v1003 = vmul.f32 %v747, %v875
        %v1004 = vmul.f32 %v748, %v876
        %v1005 = vmul.f32 %v749, %v877
        %v1006 = vmul.f32 %v750, %v878
        %v1007 = vmul.f32 %v751, %v879
        %v1008 = vmul.f32 %v752, %v880
        %v1009 = vmul.f32 %v753, %v881
        %v1010 = vmul.f32 %v754, %v882
        %v1011 = vmul.f32 %v755, %v883
        %v1012 = vmul.f32 %v756, %v884
        %v1013 = vmul.f32 %v757, %v885
        %v1014 = vadd.f32 %v502, %v886
        %v1015 = vadd.f32 %v503, %v887
        %v1016 = vadd.f32 %v504, %v888
        %v1017 = vadd.f32 %v505, %v889
        %v1018 = vadd.f32 %v506, %v890
        %v1019 = vadd.f32 %v507, %v891
        %v1020 = vadd.f32 %v508, %v892
        %v1021 = vadd.f32 %v509, %v893
        %v1022 = vadd.f32 %v510, %v894
        %v1023 = vadd.f32 %v511, %v895
        %v1024 = vadd.f32 %v512, %v896
        %v1025 = vadd.f32 %v513, %v897
        %v1026 = vadd.f32 %v514, %v898
        %v1027 = vadd.f32 %v515, %v899
        %v1028 = vadd.f32 %v516, %v900
        %v1029 = vadd.f32 %v517, %v901
        %v1030 = vadd.f32 %v518, %v902
        %v1031 = vadd.f32 %v519, %v903
        %v1032 = vadd.f32 %v520, %v904
        %v1033 = vadd.f32 %v521, %v905
        %v1034 = vadd.f32 %v522, %v906
        %v1035 = vadd.f32 %v523, %v907
        %v1036 = vadd.f32 %v524, %v908
        %v1037 = vadd.f32 %v525, %v909
        %v1038 = vadd.f32 %v526, %v910
        %v1039 = vadd.f32 %v527, %v911
        %v1040 = vadd.f32 %v528, %v912
        %v1041 = vadd.f32 %v529, %v913
        %v1042 = vadd.f32 %v530, %v914
        %v1043 = vadd.f32 %v531, %v915
        %v1044 = vadd.f32 %v532, %v916
        %v1045 = vadd.f32 %v533, %v917
        %v1046 = vadd.f32 %v534, %v918
        %v1047 = vadd.f32 %v535, %v919
        %v1048 = vadd.f32 %v536, %v920
        %v1049 = vadd.f32 %v537, %v921
        %v1050 = vadd.f32 %v538, %v922
        %v1051 = vadd.f32 %v539, %v923
        %v1052 = vadd.f32 %v540, %v924
        %v1053 = vadd.f32 %v541, %v925
        %v1054 = vadd.f32 %v542, %v926
        %v1055 = vadd.f32 %v543, %v927
        %v1056 = vadd.f32 %v544, %v928
        %v1057 = vadd.f32 %v545, %v929
        %v1058 = vadd.f32 %v546, %v930
        %v1059 = vadd.f32 %v547, %v931
        %v1060 = vadd.f32 %v548, %v932
        %v1061 = vadd.f32 %v549, %v933
        %v1062 = vadd.f32 %v550, %v934
        %v1063 = vadd.f32 %v551, %v935
        %v1064 = vadd.f32 %v552, %v936
        %v1065 = vadd.f32 %v553, %v937
        %v1066 = vadd.f32 %v554, %v938
        %v1067 = vadd.f32 %v555, %v939
        %v1068 = vadd.f32 %v556, %v940
        %v1069 = vadd.f32 %v557, %v941
        %v1070 = vadd.f32 %v558, %v942
        %v1071 = vadd.f32 %v559, %v943
        %v1072 = vadd.f32 %v560, %v944
        %v1073 = vadd.f32 %v561, %v945
        %v1074 = vadd.f32 %v562, %v946
        %v1075 = vadd.f32 %v563, %v947
        %v1076 = vadd.f32 %v564, %v948
        %v1077 = vadd.f32 %v565, %v949
        %v1078 = vadd.f32 %v566, %v950
        %v1079 = vadd.f32 %v567, %v951
        %v1080 = vadd.f32 %v568, %v952
        %v1081 = vadd.f32 %v569, %v953
        %v1082 = vadd.f32 %v570, %v954
        %v1083 = vadd.f32 %v571, %v955
        %v1084 = vadd.f32 %v572, %v956
        %v1085 = vadd.f32 %v573, %v957
        %v1086 = vadd.f32 %v574, %v958
        %v1087 = vadd.f32 %v575, %v959
        %v1088 = vadd.f32 %v576, %v960
        %v1089 = vadd.f32 %v577, %v961
        %v1090 = vadd.f32 %v578, %v962
        %v1091 = vadd.f32 %v579, %v963
        %v1092 = vadd.f32 %v580, %v964
        %v1093 = vadd.f32 %v581, %v965
        %v1094 = vadd.f32 %v582, %v966
        %v1095 = vadd.f32 %v583, %v967
        %v1096 = vadd.f32 %v584, %v968
        %v1097 = vadd.f32 %v585, %v969
        %v1098 = vadd.f32 %v586, %v970
        %v1099 = vadd.f32 %v587, %v971
        %v1100 = vadd.f32 %v588, %v972
        %v1101 = vadd.f32 %v589, %v973
        %v1102 = vadd.f32 %v590, %v974
        %v1103 = vadd.f32 %v591, %v975
        %v1104 = vadd.f32 %v592, %v976
        %v1105 = vadd.f32 %v593, %v977
        %v1106 = vadd.f32 %v594, %v978
        %v1107 = vadd.f32 %v595, %v979
        %v1108 = vadd.f32 %v596, %v980
        %v1109 = vadd.f32 %v597, %v981
        %v1110 = vadd.f32 %v598, %v982
        %v1111 = vadd.f32 %v599, %v983
        %v1112 = vadd.f32 %v600, %v984
        %v1113 = vadd.f32 %v601, %v985
        %v1114 = vadd.f32 %v602, %v986
        %v1115 = vadd.f32 %v603, %v987
        %v1116 = vadd.f32 %v604, %v988
        %v1117 = vadd.f32 %v605, %v989
        %v1118 = vadd.f32 %v606, %v990
        %v1119 = vadd.f32 %v607, %v991
        %v1120 = vadd.f32 %v608, %v992
        %v1121 = vadd.f32 %v609, %v993
        %v1122 = vadd.f32 %v610, %v994
        %v1123 = vadd.f32 %v611, %v995
        %v1124 = vadd.f32 %v612, %v996
        %v1125 = vadd.f32 %v613, %v997
        %v1126 = vadd.f32 %v614, %v998
        %v1127 = vadd.f32 %v615, %v999
        %v1128 = vadd.f32 %v616, %v1000
        %v1129 = vadd.f32 %v617, %v1001
        %v1130 = vadd.f32 %v618, %v1002
        %v1131 = vadd.f32 %v619, %v1003
        %v1132 = vadd.f32 %v620, %v1004
        %v1133 = vadd.f32 %v621, %v1005
        %v1134 = vadd.f32 %v622, %v1006
        %v1135 = vadd.f32 %v623, %v1007
        %v1136 = vadd.f32 %v624, %v1008
        %v1137 = vadd.f32 %v625, %v1009
        %v1138 = vadd.f32 %v626, %v1010
        %v1139 = vadd.f32 %v627, %v1011
        %v1140 = vadd.f32 %v628, %v1012
        %v1141 = vadd.f32 %v629, %v1013
        %v1142 = vxor.u32 %v1014, 2147483648
        %v1143 = vxor.u32 %v1015, 2147483648
        %v1144 = vxor.u32 %v1016, 2147483648
        %v1145 = vxor.u32 %v1017, 2147483648
        %v1146 = vxor.u32 %v1018, 2147483648
        %v1147 = vxor.u32 %v1019, 2147483648
        %v1148 = vxor.u32 %v1020, 2147483648
        %v1149 = vxor.u32 %v1021, 2147483648
        %v1150 = vxor.u32 %v1022, 2147483648
        %v1151 = vxor.u32 %v1023, 2147483648
        %v1152 = vxor.u32 %v1024, 2147483648
        %v1153 = vxor.u32 %v1025, 2147483648
        %v1154 = vxor.u32 %v1026, 2147483648
        %v1155 = vxor.u32 %v1027, 2147483648
        %v1156 = vxor.u32 %v1028, 2147483648
        %v1157 = vxor.u32 %v1029, 2147483648
        %v1158 = vxor.u32 %v1030, 2147483648
        %v1159 = vxor.u32 %v1031, 2147483648
        %v1160 = vxor.u32 %v1032, 2147483648
        %v1161 = vxor.u32 %v1033, 2147483648
        %v1162 = vxor.u32 %v1034, 2147483648
        %v1163 = vxor.u32 %v1035, 2147483648
        %v1164 = vxor.u32 %v1036, 2147483648
        %v1165 = vxor.u32 %v1037, 2147483648
        %v1166 = vxor.u32 %v1038, 2147483648
        %v1167 = vxor.u32 %v1039, 2147483648
        %v1168 = vxor.u32 %v1040, 2147483648
        %v1169 = vxor.u32 %v1041, 2147483648
        %v1170 = vxor.u32 %v1042, 2147483648
        %v1171 = vxor.u32 %v1043, 2147483648
        %v1172 = vxor.u32 %v1044, 2147483648
        %v1173 = vxor.u32 %v1045, 2147483648
        %v1174 = vxor.u32 %v1046, 2147483648
        %v1175 = vxor.u32 %v1047, 2147483648
        %v1176 = vxor.u32 %v1048, 2147483648
        %v1177 = vxor.u32 %v1049, 2147483648
        %v1178 = vxor.u32 %v1050, 2147483648
        %v1179 = vxor.u32 %v1051, 2147483648
        %v1180 = vxor.u32 %v1052, 2147483648
        %v1181 = vxor.u32 %v1053, 2147483648
        %v1182 = vxor.u32 %v1054, 2147483648
        %v1183 = vxor.u32 %v1055, 2147483648
        %v1184 = vxor.u32 %v1056, 2147483648
        %v1185 = vxor.u32 %v1057, 2147483648
        %v1186 = vxor.u32 %v1058, 2147483648
        %v1187 = vxor.u32 %v1059, 2147483648
        %v1188 = vxor.u32 %v1060, 2147483648
        %v1189 = vxor.u32 %v1061, 2147483648
        %v1190 = vxor.u32 %v1062, 2147483648
        %v1191 = vxor.u32 %v1063, 2147483648
        %v1192 = vxor.u32 %v1064, 2147483648
        %v1193 = vxor.u32 %v1065, 2147483648
        %v1194 = vxor.u32 %v1066, 2147483648
        %v1195 = vxor.u32 %v1067, 2147483648
        %v1196 = vxor.u32 %v1068, 2147483648
        %v1197 = vxor.u32 %v1069, 2147483648
        %v1198 = vxor.u32 %v1070, 2147483648
        %v1199 = vxor.u32 %v1071, 2147483648
        %v1200 = vxor.u32 %v1072, 2147483648
        %v1201 = vxor.u32 %v1073, 2147483648
        %v1202 = vxor.u32 %v1074, 2147483648
        %v1203 = vxor.u32 %v1075, 2147483648
        %v1204 = vxor.u32 %v1076, 2147483648
        %v1205 = vxor.u32 %v1077, 2147483648
        %v1206 = vxor.u32 %v1078, 2147483648
        %v1207 = vxor.u32 %v1079, 2147483648
        %v1208 = vxor.u32 %v1080, 2147483648
        %v1209 = vxor.u32 %v1081, 2147483648
        %v1210 = vxor.u32 %v1082, 2147483648
        %v1211 = vxor.u32 %v1083, 2147483648
        %v1212 = vxor.u32 %v1084, 2147483648
        %v1213 = vxor.u32 %v1085, 2147483648
        %v1214 = vxor.u32 %v1086, 2147483648
        %v1215 = vxor.u32 %v1087, 2147483648
        %v1216 = vxor.u32 %v1088, 2147483648
        %v1217 = vxor.u32 %v1089, 2147483648
        %v1218 = vxor.u32 %v1090, 2147483648
        %v1219 = vxor.u32 %v1091, 2147483648
        %v1220 = vxor.u32 %v1092, 2147483648
        %v1221 = vxor.u32 %v1093, 2147483648
        %v1222 = vxor.u32 %v1094, 2147483648
        %v1223 = vxor.u32 %v1095, 2147483648
        %v1224 = vxor.u32 %v1096, 2147483648
        %v1225 = vxor.u32 %v1097, 2147483648
        %v1226 = vxor.u32 %v1098, 2147483648
        %v1227 = vxor.u32 %v1099, 2147483648
        %v1228 = vxor.u32 %v1100, 2147483648
        %v1229 = vxor.u32 %v1101, 2147483648
        %v1230 = vxor.u32 %v1102, 2147483648
        %v1231 = vxor.u32 %v1103, 2147483648
        %v1232 = vxor.u32 %v1104, 2147483648
        %v1233 = vxor.u32 %v1105, 2147483648
        %v1234 = vxor.u32 %v1106, 2147483648
        %v1235 = vxor.u32 %v1107, 2147483648
        %v1236 = vxor.u32 %v1108, 2147483648
        %v1237 = vxor.u32 %v1109, 2147483648
        %v1238 = vxor.u32 %v1110, 2147483648
        %v1239 = vxor.u32 %v1111, 2147483648
        %v1240 = vxor.u32 %v1112, 2147483648
        %v1241 = vxor.u32 %v1113, 2147483648
        %v1242 = vxor.u32 %v1114, 2147483648
        %v1243 = vxor.u32 %v1115, 2147483648
        %v1244 = vxor.u32 %v1116, 2147483648
        %v1245 = vxor.u32 %v1117, 2147483648
        %v1246 = vxor.u32 %v1118, 2147483648
        %v1247 = vxor.u32 %v1119, 2147483648
        %v1248 = vxor.u32 %v1120, 2147483648
        %v1249 = vxor.u32 %v1121, 2147483648
        %v1250 = vxor.u32 %v1122, 2147483648
        %v1251 = vxor.u32 %v1123, 2147483648
        %v1252 = vxor.u32 %v1124, 2147483648
        %v1253 = vxor.u32 %v1125, 2147483648
        %v1254 = vxor.u32 %v1126, 2147483648
        %v1255 = vxor.u32 %v1127, 2147483648
        %v1256 = vxor.u32 %v1128, 2147483648
        %v1257 = vxor.u32 %v1129, 2147483648
        %v1258 = vxor.u32 %v1130, 2147483648
        %v1259 = vxor.u32 %v1131, 2147483648
        %v1260 = vxor.u32 %v1132, 2147483648
        %v1261 = vxor.u32 %v1133, 2147483648
        %v1262 = vxor.u32 %v1134, 2147483648
        %v1263 = vxor.u32 %v1135, 2147483648
        %v1264 = vxor.u32 %v1136, 2147483648
        %v1265 = vxor.u32 %v1137, 2147483648
        %v1266 = vxor.u32 %v1138, 2147483648
        %v1267 = vxor.u32 %v1139, 2147483648
        %v1268 = vxor.u32 %v1140, 2147483648
        %v1269 = vxor.u32 %v1141, 2147483648
        %v1270 = vmul.f32 %v1142, 1.442695
        %v1271 = vpow.pop %v1270
        %v1272 = vmul.f32 %v1143, 1.442695
        %v1273 = vpow.pop %v1272
        %v1274 = vmul.f32 %v1144, 1.442695
        %v1275 = vpow.pop %v1274
        %v1276 = vmul.f32 %v1145, 1.442695
        %v1277 = vpow.pop %v1276
        %v1278 = vmul.f32 %v1146, 1.442695
        %v1279 = vpow.pop %v1278
        %v1280 = vmul.f32 %v1147, 1.442695
        %v1281 = vpow.pop %v1280
        %v1282 = vmul.f32 %v1148, 1.442695
        %v1283 = vpow.pop %v1282
        %v1284 = vmul.f32 %v1149, 1.442695
        %v1285 = vpow.pop %v1284
        %v1286 = vmul.f32 %v1150, 1.442695
        %v1287 = vpow.pop %v1286
        %v1288 = vmul.f32 %v1151, 1.442695
        %v1289 = vpow.pop %v1288
        %v1290 = vmul.f32 %v1152, 1.442695
        %v1291 = vpow.pop %v1290
        %v1292 = vmul.f32 %v1153, 1.442695
        %v1293 = vpow.pop %v1292
        %v1294 = vmul.f32 %v1154, 1.442695
        %v1295 = vpow.pop %v1294
        %v1296 = vmul.f32 %v1155, 1.442695
        %v1297 = vpow.pop %v1296
        %v1298 = vmul.f32 %v1156, 1.442695
        %v1299 = vpow.pop %v1298
        %v1300 = vmul.f32 %v1157, 1.442695
        %v1301 = vpow.pop %v1300
        %v1302 = vmul.f32 %v1158, 1.442695
        %v1303 = vpow.pop %v1302
        %v1304 = vmul.f32 %v1159, 1.442695
        %v1305 = vpow.pop %v1304
        %v1306 = vmul.f32 %v1160, 1.442695
        %v1307 = vpow.pop %v1306
        %v1308 = vmul.f32 %v1161, 1.442695
        %v1309 = vpow.pop %v1308
        %v1310 = vmul.f32 %v1162, 1.442695
        %v1311 = vpow.pop %v1310
        %v1312 = vmul.f32 %v1163, 1.442695
        %v1313 = vpow.pop %v1312
        %v1314 = vmul.f32 %v1164, 1.442695
        %v1315 = vpow.pop %v1314
        %v1316 = vmul.f32 %v1165, 1.442695
        %v1317 = vpow.pop %v1316
        %v1318 = vmul.f32 %v1166, 1.442695
        %v1319 = vpow.pop %v1318
        %v1320 = vmul.f32 %v1167, 1.442695
        %v1321 = vpow.pop %v1320
        %v1322 = vmul.f32 %v1168, 1.442695
        %v1323 = vpow.pop %v1322
        %v1324 = vmul.f32 %v1169, 1.442695
        %v1325 = vpow.pop %v1324
        %v1326 = vmul.f32 %v1170, 1.442695
        %v1327 = vpow.pop %v1326
        %v1328 = vmul.f32 %v1171, 1.442695
        %v1329 = vpow.pop %v1328
        %v1330 = vmul.f32 %v1172, 1.442695
        %v1331 = vpow.pop %v1330
        %v1332 = vmul.f32 %v1173, 1.442695
        %v1333 = vpow.pop %v1332
        %v1334 = vmul.f32 %v1174, 1.442695
        %v1335 = vpow.pop %v1334
        %v1336 = vmul.f32 %v1175, 1.442695
        %v1337 = vpow.pop %v1336
        %v1338 = vmul.f32 %v1176, 1.442695
        %v1339 = vpow.pop %v1338
        %v1340 = vmul.f32 %v1177, 1.442695
        %v1341 = vpow.pop %v1340
        %v1342 = vmul.f32 %v1178, 1.442695
        %v1343 = vpow.pop %v1342
        %v1344 = vmul.f32 %v1179, 1.442695
        %v1345 = vpow.pop %v1344
        %v1346 = vmul.f32 %v1180, 1.442695
        %v1347 = vpow.pop %v1346
        %v1348 = vmul.f32 %v1181, 1.442695
        %v1349 = vpow.pop %v1348
        %v1350 = vmul.f32 %v1182, 1.442695
        %v1351 = vpow.pop %v1350
        %v1352 = vmul.f32 %v1183, 1.442695
        %v1353 = vpow.pop %v1352
        %v1354 = vmul.f32 %v1184, 1.442695
        %v1355 = vpow.pop %v1354
        %v1356 = vmul.f32 %v1185, 1.442695
        %v1357 = vpow.pop %v1356
        %v1358 = vmul.f32 %v1186, 1.442695
        %v1359 = vpow.pop %v1358
        %v1360 = vmul.f32 %v1187, 1.442695
        %v1361 = vpow.pop %v1360
        %v1362 = vmul.f32 %v1188, 1.442695
        %v1363 = vpow.pop %v1362
        %v1364 = vmul.f32 %v1189, 1.442695
        %v1365 = vpow.pop %v1364
        %v1366 = vmul.f32 %v1190, 1.442695
        %v1367 = vpow.pop %v1366
        %v1368 = vmul.f32 %v1191, 1.442695
        %v1369 = vpow.pop %v1368
        %v1370 = vmul.f32 %v1192, 1.442695
        %v1371 = vpow.pop %v1370
        %v1372 = vmul.f32 %v1193, 1.442695
        %v1373 = vpow.pop %v1372
        %v1374 = vmul.f32 %v1194, 1.442695
        %v1375 = vpow.pop %v1374
        %v1376 = vmul.f32 %v1195, 1.442695
        %v1377 = vpow.pop %v1376
        %v1378 = vmul.f32 %v1196, 1.442695
        %v1379 = vpow.pop %v1378
        %v1380 = vmul.f32 %v1197, 1.442695
        %v1381 = vpow.pop %v1380
        %v1382 = vmul.f32 %v1198, 1.442695
        %v1383 = vpow.pop %v1382
        %v1384 = vmul.f32 %v1199, 1.442695
        %v1385 = vpow.pop %v1384
        %v1386 = vmul.f32 %v1200, 1.442695
        %v1387 = vpow.pop %v1386
        %v1388 = vmul.f32 %v1201, 1.442695
        %v1389 = vpow.pop %v1388
        %v1390 = vmul.f32 %v1202, 1.442695
        %v1391 = vpow.pop %v1390
        %v1392 = vmul.f32 %v1203, 1.442695
        %v1393 = vpow.pop %v1392
        %v1394 = vmul.f32 %v1204, 1.442695
        %v1395 = vpow.pop %v1394
        %v1396 = vmul.f32 %v1205, 1.442695
        %v1397 = vpow.pop %v1396
        %v1398 = vmul.f32 %v1206, 1.442695
        %v1399 = vpow.pop %v1398
        %v1400 = vmul.f32 %v1207, 1.442695
        %v1401 = vpow.pop %v1400
        %v1402 = vmul.f32 %v1208, 1.442695
        %v1403 = vpow.pop %v1402
        %v1404 = vmul.f32 %v1209, 1.442695
        %v1405 = vpow.pop %v1404
        %v1406 = vmul.f32 %v1210, 1.442695
        %v1407 = vpow.pop %v1406
        %v1408 = vmul.f32 %v1211, 1.442695
        %v1409 = vpow.pop %v1408
        %v1410 = vmul.f32 %v1212, 1.442695
        %v1411 = vpow.pop %v1410
        %v1412 = vmul.f32 %v1213, 1.442695
        %v1413 = vpow.pop %v1412
        %v1414 = vmul.f32 %v1214, 1.442695
        %v1415 = vpow.pop %v1414
        %v1416 = vmul.f32 %v1215, 1.442695
        %v1417 = vpow.pop %v1416
        %v1418 = vmul.f32 %v1216, 1.442695
        %v1419 = vpow.pop %v1418
        %v1420 = vmul.f32 %v1217, 1.442695
        %v1421 = vpow.pop %v1420
        %v1422 = vmul.f32 %v1218, 1.442695
        %v1423 = vpow.pop %v1422
        %v1424 = vmul.f32 %v1219, 1.442695
        %v1425 = vpow.pop %v1424
        %v1426 = vmul.f32 %v1220, 1.442695
        %v1427 = vpow.pop %v1426
        %v1428 = vmul.f32 %v1221, 1.442695
        %v1429 = vpow.pop %v1428
        %v1430 = vmul.f32 %v1222, 1.442695
        %v1431 = vpow.pop %v1430
        %v1432 = vmul.f32 %v1223, 1.442695
        %v1433 = vpow.pop %v1432
        %v1434 = vmul.f32 %v1224, 1.442695
        %v1435 = vpow.pop %v1434
        %v1436 = vmul.f32 %v1225, 1.442695
        %v1437 = vpow.pop %v1436
        %v1438 = vmul.f32 %v1226, 1.442695
        %v1439 = vpow.pop %v1438
        %v1440 = vmul.f32 %v1227, 1.442695
        %v1441 = vpow.pop %v1440
        %v1442 = vmul.f32 %v1228, 1.442695
        %v1443 = vpow.pop %v1442
        %v1444 = vmul.f32 %v1229, 1.442695
        %v1445 = vpow.pop %v1444
        %v1446 = vmul.f32 %v1230, 1.442695
        %v1447 = vpow.pop %v1446
        %v1448 = vmul.f32 %v1231, 1.442695
        %v1449 = vpow.pop %v1448
        %v1450 = vmul.f32 %v1232, 1.442695
        %v1451 = vpow.pop %v1450
        %v1452 = vmul.f32 %v1233, 1.442695
        %v1453 = vpow.pop %v1452
        %v1454 = vmul.f32 %v1234, 1.442695
        %v1455 = vpow.pop %v1454
        %v1456 = vmul.f32 %v1235, 1.442695
        %v1457 = vpow.pop %v1456
        %v1458 = vmul.f32 %v1236, 1.442695
        %v1459 = vpow.pop %v1458
        %v1460 = vmul.f32 %v1237, 1.442695
        %v1461 = vpow.pop %v1460
        %v1462 = vmul.f32 %v1238, 1.442695
        %v1463 = vpow.pop %v1462
        %v1464 = vmul.f32 %v1239, 1.442695
        %v1465 = vpow.pop %v1464
        %v1466 = vmul.f32 %v1240, 1.442695
        %v1467 = vpow.pop %v1466
        %v1468 = vmul.f32 %v1241, 1.442695
        %v1469 = vpow.pop %v1468
        %v1470 = vmul.f32 %v1242, 1.442695
        %v1471 = vpow.pop %v1470
        %v1472 = vmul.f32 %v1243, 1.442695
        %v1473 = vpow.pop %v1472
        %v1474 = vmul.f32 %v1244, 1.442695
        %v1475 = vpow.pop %v1474
        %v1476 = vmul.f32 %v1245, 1.442695
        %v1477 = vpow.pop %v1476
        %v1478 = vmul.f32 %v1246, 1.442695
        %v1479 = vpow.pop %v1478
        %v1480 = vmul.f32 %v1247, 1.442695
        %v1481 = vpow.pop %v1480
        %v1482 = vmul.f32 %v1248, 1.442695
        %v1483 = vpow.pop %v1482
        %v1484 = vmul.f32 %v1249, 1.442695
        %v1485 = vpow.pop %v1484
        %v1486 = vmul.f32 %v1250, 1.442695
        %v1487 = vpow.pop %v1486
        %v1488 = vmul.f32 %v1251, 1.442695
        %v1489 = vpow.pop %v1488
        %v1490 = vmul.f32 %v1252, 1.442695
        %v1491 = vpow.pop %v1490
        %v1492 = vmul.f32 %v1253, 1.442695
        %v1493 = vpow.pop %v1492
        %v1494 = vmul.f32 %v1254, 1.442695
        %v1495 = vpow.pop %v1494
        %v1496 = vmul.f32 %v1255, 1.442695
        %v1497 = vpow.pop %v1496
        %v1498 = vmul.f32 %v1256, 1.442695
        %v1499 = vpow.pop %v1498
        %v1500 = vmul.f32 %v1257, 1.442695
        %v1501 = vpow.pop %v1500
        %v1502 = vmul.f32 %v1258, 1.442695
        %v1503 = vpow.pop %v1502
        %v1504 = vmul.f32 %v1259, 1.442695
        %v1505 = vpow.pop %v1504
        %v1506 = vmul.f32 %v1260, 1.442695
        %v1507 = vpow.pop %v1506
        %v1508 = vmul.f32 %v1261, 1.442695
        %v1509 = vpow.pop %v1508
        %v1510 = vmul.f32 %v1262, 1.442695
        %v1511 = vpow.pop %v1510
        %v1512 = vmul.f32 %v1263, 1.442695
        %v1513 = vpow.pop %v1512
        %v1514 = vmul.f32 %v1264, 1.442695
        %v1515 = vpow.pop %v1514
        %v1516 = vmul.f32 %v1265, 1.442695
        %v1517 = vpow.pop %v1516
        %v1518 = vmul.f32 %v1266, 1.442695
        %v1519 = vpow.pop %v1518
        %v1520 = vmul.f32 %v1267, 1.442695
        %v1521 = vpow.pop %v1520
        %v1522 = vmul.f32 %v1268, 1.442695
        %v1523 = vpow.pop %v1522
        %v1524 = vmul.f32 %v1269, 1.442695
        %v1525 = vpow.pop %v1524
        %v1526 = vadd.f32 %v1271, 1.0
        %v1527 = vadd.f32 %v1273, 1.0
        %v1528 = vadd.f32 %v1275, 1.0
        %v1529 = vadd.f32 %v1277, 1.0
        %v1530 = vadd.f32 %v1279, 1.0
        %v1531 = vadd.f32 %v1281, 1.0
        %v1532 = vadd.f32 %v1283, 1.0
        %v1533 = vadd.f32 %v1285, 1.0
        %v1534 = vadd.f32 %v1287, 1.0
        %v1535 = vadd.f32 %v1289, 1.0
        %v1536 = vadd.f32 %v1291, 1.0
        %v1537 = vadd.f32 %v1293, 1.0
        %v1538 = vadd.f32 %v1295, 1.0
        %v1539 = vadd.f32 %v1297, 1.0
        %v1540 = vadd.f32 %v1299, 1.0
        %v1541 = vadd.f32 %v1301, 1.0
        %v1542 = vadd.f32 %v1303, 1.0
        %v1543 = vadd.f32 %v1305, 1.0
        %v1544 = vadd.f32 %v1307, 1.0
        %v1545 = vadd.f32 %v1309, 1.0
        %v1546 = vadd.f32 %v1311, 1.0
        %v1547 = vadd.f32 %v1313, 1.0
        %v1548 = vadd.f32 %v1315, 1.0
        %v1549 = vadd.f32 %v1317, 1.0
        %v1550 = vadd.f32 %v1319, 1.0
        %v1551 = vadd.f32 %v1321, 1.0
        %v1552 = vadd.f32 %v1323, 1.0
        %v1553 = vadd.f32 %v1325, 1.0
        %v1554 = vadd.f32 %v1327, 1.0
        %v1555 = vadd.f32 %v1329, 1.0
        %v1556 = vadd.f32 %v1331, 1.0
        %v1557 = vadd.f32 %v1333, 1.0
        %v1558 = vadd.f32 %v1335, 1.0
        %v1559 = vadd.f32 %v1337, 1.0
        %v1560 = vadd.f32 %v1339, 1.0
        %v1561 = vadd.f32 %v1341, 1.0
        %v1562 = vadd.f32 %v1343, 1.0
        %v1563 = vadd.f32 %v1345, 1.0
        %v1564 = vadd.f32 %v1347, 1.0
        %v1565 = vadd.f32 %v1349, 1.0
        %v1566 = vadd.f32 %v1351, 1.0
        %v1567 = vadd.f32 %v1353, 1.0
        %v1568 = vadd.f32 %v1355, 1.0
        %v1569 = vadd.f32 %v1357, 1.0
        %v1570 = vadd.f32 %v1359, 1.0
        %v1571 = vadd.f32 %v1361, 1.0
        %v1572 = vadd.f32 %v1363, 1.0
        %v1573 = vadd.f32 %v1365, 1.0
        %v1574 = vadd.f32 %v1367, 1.0
        %v1575 = vadd.f32 %v1369, 1.0
        %v1576 = vadd.f32 %v1371, 1.0
        %v1577 = vadd.f32 %v1373, 1.0
        %v1578 = vadd.f32 %v1375, 1.0
        %v1579 = vadd.f32 %v1377, 1.0
        %v1580 = vadd.f32 %v1379, 1.0
        %v1581 = vadd.f32 %v1381, 1.0
        %v1582 = vadd.f32 %v1383, 1.0
        %v1583 = vadd.f32 %v1385, 1.0
        %v1584 = vadd.f32 %v1387, 1.0
        %v1585 = vadd.f32 %v1389, 1.0
        %v1586 = vadd.f32 %v1391, 1.0
        %v1587 = vadd.f32 %v1393, 1.0
        %v1588 = vadd.f32 %v1395, 1.0
        %v1589 = vadd.f32 %v1397, 1.0
        %v1590 = vadd.f32 %v1399, 1.0
        %v1591 = vadd.f32 %v1401, 1.0
        %v1592 = vadd.f32 %v1403, 1.0
        %v1593 = vadd.f32 %v1405, 1.0
        %v1594 = vadd.f32 %v1407, 1.0
        %v1595 = vadd.f32 %v1409, 1.0
        %v1596 = vadd.f32 %v1411, 1.0
        %v1597 = vadd.f32 %v1413, 1.0
        %v1598 = vadd.f32 %v1415, 1.0
        %v1599 = vadd.f32 %v1417, 1.0
        %v1600 = vadd.f32 %v1419, 1.0
        %v1601 = vadd.f32 %v1421, 1.0
        %v1602 = vadd.f32 %v1423, 1.0
        %v1603 = vadd.f32 %v1425, 1.0
        %v1604 = vadd.f32 %v1427, 1.0
        %v1605 = vadd.f32 %v1429, 1.0
        %v1606 = vadd.f32 %v1431, 1.0
        %v1607 = vadd.f32 %v1433, 1.0
        %v1608 = vadd.f32 %v1435, 1.0
        %v1609 = vadd.f32 %v1437, 1.0
        %v1610 = vadd.f32 %v1439, 1.0
        %v1611 = vadd.f32 %v1441, 1.0
        %v1612 = vadd.f32 %v1443, 1.0
        %v1613 = vadd.f32 %v1445, 1.0
        %v1614 = vadd.f32 %v1447, 1.0
        %v1615 = vadd.f32 %v1449, 1.0
        %v1616 = vadd.f32 %v1451, 1.0
        %v1617 = vadd.f32 %v1453, 1.0
        %v1618 = vadd.f32 %v1455, 1.0
        %v1619 = vadd.f32 %v1457, 1.0
        %v1620 = vadd.f32 %v1459, 1.0
        %v1621 = vadd.f32 %v1461, 1.0
        %v1622 = vadd.f32 %v1463, 1.0
        %v1623 = vadd.f32 %v1465, 1.0
        %v1624 = vadd.f32 %v1467, 1.0
        %v1625 = vadd.f32 %v1469, 1.0
        %v1626 = vadd.f32 %v1471, 1.0
        %v1627 = vadd.f32 %v1473, 1.0
        %v1628 = vadd.f32 %v1475, 1.0
        %v1629 = vadd.f32 %v1477, 1.0
        %v1630 = vadd.f32 %v1479, 1.0
        %v1631 = vadd.f32 %v1481, 1.0
        %v1632 = vadd.f32 %v1483, 1.0
        %v1633 = vadd.f32 %v1485, 1.0
        %v1634 = vadd.f32 %v1487, 1.0
        %v1635 = vadd.f32 %v1489, 1.0
        %v1636 = vadd.f32 %v1491, 1.0
        %v1637 = vadd.f32 %v1493, 1.0
        %v1638 = vadd.f32 %v1495, 1.0
        %v1639 = vadd.f32 %v1497, 1.0
        %v1640 = vadd.f32 %v1499, 1.0
        %v1641 = vadd.f32 %v1501, 1.0
        %v1642 = vadd.f32 %v1503, 1.0
        %v1643 = vadd.f32 %v1505, 1.0
        %v1644 = vadd.f32 %v1507, 1.0
        %v1645 = vadd.f32 %v1509, 1.0
        %v1646 = vadd.f32 %v1511, 1.0
        %v1647 = vadd.f32 %v1513, 1.0
        %v1648 = vadd.f32 %v1515, 1.0
        %v1649 = vadd.f32 %v1517, 1.0
        %v1650 = vadd.f32 %v1519, 1.0
        %v1651 = vadd.f32 %v1521, 1.0
        %v1652 = vadd.f32 %v1523, 1.0
        %v1653 = vadd.f32 %v1525, 1.0
        %v1654 = vrcp.pop %v1526
        %v1655 = vmul.f32 %v1526, %v1654
        %v1656 = vsub.f32 1.0, %v1655
        %v1657 = vmul.f32 %v1654, %v1656
        %v1658 = vadd.f32 %v1654, %v1657
        %vm1659 = vweird.f32 %v1526
        %vm1660 = vweird.f32 %v1654
        %vm1661 = vmor %vm1659, %vm1660
        %v1662 = vsel %vm1661, %v1654, %v1658
        %v1663 = vand.u32 2147483647, %v1526
        %vm1664 = vcmp.eq.f32.partialorder %v1663, 8.507059e+37
        %v1665 = vand.u32 %v1526, 2147483648
        %v1666 = vor.u32 1.1754944e-38, %v1665
        %v1667 = vsel %vm1664, %v1666, %v1662
        %v1668 = vmul.f32 1.0, %v1667
        %v1669 = vrcp.pop %v1527
        %v1670 = vmul.f32 %v1527, %v1669
        %v1671 = vsub.f32 1.0, %v1670
        %v1672 = vmul.f32 %v1669, %v1671
        %v1673 = vadd.f32 %v1669, %v1672
        %vm1674 = vweird.f32 %v1527
        %vm1675 = vweird.f32 %v1669
        %vm1676 = vmor %vm1674, %vm1675
        %v1677 = vsel %vm1676, %v1669, %v1673
        %v1678 = vand.u32 2147483647, %v1527
        %vm1679 = vcmp.eq.f32.partialorder %v1678, 8.507059e+37
        %v1680 = vand.u32 %v1527, 2147483648
        %v1681 = vor.u32 1.1754944e-38, %v1680
        %v1682 = vsel %vm1679, %v1681, %v1677
        %v1683 = vmul.f32 1.0, %v1682
        %v1684 = vrcp.pop %v1528
        %v1685 = vmul.f32 %v1528, %v1684
        %v1686 = vsub.f32 1.0, %v1685
        %v1687 = vmul.f32 %v1684, %v1686
        %v1688 = vadd.f32 %v1684, %v1687
        %vm1689 = vweird.f32 %v1528
        %vm1690 = vweird.f32 %v1684
        %vm1691 = vmor %vm1689, %vm1690
        %v1692 = vsel %vm1691, %v1684, %v1688
        %v1693 = vand.u32 2147483647, %v1528
        %vm1694 = vcmp.eq.f32.partialorder %v1693, 8.507059e+37
        %v1695 = vand.u32 %v1528, 2147483648
        %v1696 = vor.u32 1.1754944e-38, %v1695
        %v1697 = vsel %vm1694, %v1696, %v1692
        %v1698 = vmul.f32 1.0, %v1697
        %v1699 = vrcp.pop %v1529
        %v1700 = vmul.f32 %v1529, %v1699
        %v1701 = vsub.f32 1.0, %v1700
        %v1702 = vmul.f32 %v1699, %v1701
        %v1703 = vadd.f32 %v1699, %v1702
        %vm1704 = vweird.f32 %v1529
        %vm1705 = vweird.f32 %v1699
        %vm1706 = vmor %vm1704, %vm1705
        %v1707 = vsel %vm1706, %v1699, %v1703
        %v1708 = vand.u32 2147483647, %v1529
        %vm1709 = vcmp.eq.f32.partialorder %v1708, 8.507059e+37
        %v1710 = vand.u32 %v1529, 2147483648
        %v1711 = vor.u32 1.1754944e-38, %v1710
        %v1712 = vsel %vm1709, %v1711, %v1707
        %v1713 = vmul.f32 1.0, %v1712
        %v1714 = vrcp.pop %v1530
        %v1715 = vmul.f32 %v1530, %v1714
        %v1716 = vsub.f32 1.0, %v1715
        %v1717 = vmul.f32 %v1714, %v1716
        %v1718 = vadd.f32 %v1714, %v1717
        %vm1719 = vweird.f32 %v1530
        %vm1720 = vweird.f32 %v1714
        %vm1721 = vmor %vm1719, %vm1720
        %v1722 = vsel %vm1721, %v1714, %v1718
        %v1723 = vand.u32 2147483647, %v1530
        %vm1724 = vcmp.eq.f32.partialorder %v1723, 8.507059e+37
        %v1725 = vand.u32 %v1530, 2147483648
        %v1726 = vor.u32 1.1754944e-38, %v1725
        %v1727 = vsel %vm1724, %v1726, %v1722
        %v1728 = vmul.f32 1.0, %v1727
        %v1729 = vrcp.pop %v1531
        %v1730 = vmul.f32 %v1531, %v1729
        %v1731 = vsub.f32 1.0, %v1730
        %v1732 = vmul.f32 %v1729, %v1731
        %v1733 = vadd.f32 %v1729, %v1732
        %vm1734 = vweird.f32 %v1531
        %vm1735 = vweird.f32 %v1729
        %vm1736 = vmor %vm1734, %vm1735
        %v1737 = vsel %vm1736, %v1729, %v1733
        %v1738 = vand.u32 2147483647, %v1531
        %vm1739 = vcmp.eq.f32.partialorder %v1738, 8.507059e+37
        %v1740 = vand.u32 %v1531, 2147483648
        %v1741 = vor.u32 1.1754944e-38, %v1740
        %v1742 = vsel %vm1739, %v1741, %v1737
        %v1743 = vmul.f32 1.0, %v1742
        %v1744 = vrcp.pop %v1532
        %v1745 = vmul.f32 %v1532, %v1744
        %v1746 = vsub.f32 1.0, %v1745
        %v1747 = vmul.f32 %v1744, %v1746
        %v1748 = vadd.f32 %v1744, %v1747
        %vm1749 = vweird.f32 %v1532
        %vm1750 = vweird.f32 %v1744
        %vm1751 = vmor %vm1749, %vm1750
        %v1752 = vsel %vm1751, %v1744, %v1748
        %v1753 = vand.u32 2147483647, %v1532
        %vm1754 = vcmp.eq.f32.partialorder %v1753, 8.507059e+37
        %v1755 = vand.u32 %v1532, 2147483648
        %v1756 = vor.u32 1.1754944e-38, %v1755
        %v1757 = vsel %vm1754, %v1756, %v1752
        %v1758 = vmul.f32 1.0, %v1757
        %v1759 = vrcp.pop %v1533
        %v1760 = vmul.f32 %v1533, %v1759
        %v1761 = vsub.f32 1.0, %v1760
        %v1762 = vmul.f32 %v1759, %v1761
        %v1763 = vadd.f32 %v1759, %v1762
        %vm1764 = vweird.f32 %v1533
        %vm1765 = vweird.f32 %v1759
        %vm1766 = vmor %vm1764, %vm1765
        %v1767 = vsel %vm1766, %v1759, %v1763
        %v1768 = vand.u32 2147483647, %v1533
        %vm1769 = vcmp.eq.f32.partialorder %v1768, 8.507059e+37
        %v1770 = vand.u32 %v1533, 2147483648
        %v1771 = vor.u32 1.1754944e-38, %v1770
        %v1772 = vsel %vm1769, %v1771, %v1767
        %v1773 = vmul.f32 1.0, %v1772
        %v1774 = vrcp.pop %v1534
        %v1775 = vmul.f32 %v1534, %v1774
        %v1776 = vsub.f32 1.0, %v1775
        %v1777 = vmul.f32 %v1774, %v1776
        %v1778 = vadd.f32 %v1774, %v1777
        %vm1779 = vweird.f32 %v1534
        %vm1780 = vweird.f32 %v1774
        %vm1781 = vmor %vm1779, %vm1780
        %v1782 = vsel %vm1781, %v1774, %v1778
        %v1783 = vand.u32 2147483647, %v1534
        %vm1784 = vcmp.eq.f32.partialorder %v1783, 8.507059e+37
        %v1785 = vand.u32 %v1534, 2147483648
        %v1786 = vor.u32 1.1754944e-38, %v1785
        %v1787 = vsel %vm1784, %v1786, %v1782
        %v1788 = vmul.f32 1.0, %v1787
        %v1789 = vrcp.pop %v1535
        %v1790 = vmul.f32 %v1535, %v1789
        %v1791 = vsub.f32 1.0, %v1790
        %v1792 = vmul.f32 %v1789, %v1791
        %v1793 = vadd.f32 %v1789, %v1792
        %vm1794 = vweird.f32 %v1535
        %vm1795 = vweird.f32 %v1789
        %vm1796 = vmor %vm1794, %vm1795
        %v1797 = vsel %vm1796, %v1789, %v1793
        %v1798 = vand.u32 2147483647, %v1535
        %vm1799 = vcmp.eq.f32.partialorder %v1798, 8.507059e+37
        %v1800 = vand.u32 %v1535, 2147483648
        %v1801 = vor.u32 1.1754944e-38, %v1800
        %v1802 = vsel %vm1799, %v1801, %v1797
        %v1803 = vmul.f32 1.0, %v1802
        %v1804 = vrcp.pop %v1536
        %v1805 = vmul.f32 %v1536, %v1804
        %v1806 = vsub.f32 1.0, %v1805
        %v1807 = vmul.f32 %v1804, %v1806
        %v1808 = vadd.f32 %v1804, %v1807
        %vm1809 = vweird.f32 %v1536
        %vm1810 = vweird.f32 %v1804
        %vm1811 = vmor %vm1809, %vm1810
        %v1812 = vsel %vm1811, %v1804, %v1808
        %v1813 = vand.u32 2147483647, %v1536
        %vm1814 = vcmp.eq.f32.partialorder %v1813, 8.507059e+37
        %v1815 = vand.u32 %v1536, 2147483648
        %v1816 = vor.u32 1.1754944e-38, %v1815
        %v1817 = vsel %vm1814, %v1816, %v1812
        %v1818 = vmul.f32 1.0, %v1817
        %v1819 = vrcp.pop %v1537
        %v1820 = vmul.f32 %v1537, %v1819
        %v1821 = vsub.f32 1.0, %v1820
        %v1822 = vmul.f32 %v1819, %v1821
        %v1823 = vadd.f32 %v1819, %v1822
        %vm1824 = vweird.f32 %v1537
        %vm1825 = vweird.f32 %v1819
        %vm1826 = vmor %vm1824, %vm1825
        %v1827 = vsel %vm1826, %v1819, %v1823
        %v1828 = vand.u32 2147483647, %v1537
        %vm1829 = vcmp.eq.f32.partialorder %v1828, 8.507059e+37
        %v1830 = vand.u32 %v1537, 2147483648
        %v1831 = vor.u32 1.1754944e-38, %v1830
        %v1832 = vsel %vm1829, %v1831, %v1827
        %v1833 = vmul.f32 1.0, %v1832
        %v1834 = vrcp.pop %v1538
        %v1835 = vmul.f32 %v1538, %v1834
        %v1836 = vsub.f32 1.0, %v1835
        %v1837 = vmul.f32 %v1834, %v1836
        %v1838 = vadd.f32 %v1834, %v1837
        %vm1839 = vweird.f32 %v1538
        %vm1840 = vweird.f32 %v1834
        %vm1841 = vmor %vm1839, %vm1840
        %v1842 = vsel %vm1841, %v1834, %v1838
        %v1843 = vand.u32 2147483647, %v1538
        %vm1844 = vcmp.eq.f32.partialorder %v1843, 8.507059e+37
        %v1845 = vand.u32 %v1538, 2147483648
        %v1846 = vor.u32 1.1754944e-38, %v1845
        %v1847 = vsel %vm1844, %v1846, %v1842
        %v1848 = vmul.f32 1.0, %v1847
        %v1849 = vrcp.pop %v1539
        %v1850 = vmul.f32 %v1539, %v1849
        %v1851 = vsub.f32 1.0, %v1850
        %v1852 = vmul.f32 %v1849, %v1851
        %v1853 = vadd.f32 %v1849, %v1852
        %vm1854 = vweird.f32 %v1539
        %vm1855 = vweird.f32 %v1849
        %vm1856 = vmor %vm1854, %vm1855
        %v1857 = vsel %vm1856, %v1849, %v1853
        %v1858 = vand.u32 2147483647, %v1539
        %vm1859 = vcmp.eq.f32.partialorder %v1858, 8.507059e+37
        %v1860 = vand.u32 %v1539, 2147483648
        %v1861 = vor.u32 1.1754944e-38, %v1860
        %v1862 = vsel %vm1859, %v1861, %v1857
        %v1863 = vmul.f32 1.0, %v1862
        %v1864 = vrcp.pop %v1540
        %v1865 = vmul.f32 %v1540, %v1864
        %v1866 = vsub.f32 1.0, %v1865
        %v1867 = vmul.f32 %v1864, %v1866
        %v1868 = vadd.f32 %v1864, %v1867
        %vm1869 = vweird.f32 %v1540
        %vm1870 = vweird.f32 %v1864
        %vm1871 = vmor %vm1869, %vm1870
        %v1872 = vsel %vm1871, %v1864, %v1868
        %v1873 = vand.u32 2147483647, %v1540
        %vm1874 = vcmp.eq.f32.partialorder %v1873, 8.507059e+37
        %v1875 = vand.u32 %v1540, 2147483648
        %v1876 = vor.u32 1.1754944e-38, %v1875
        %v1877 = vsel %vm1874, %v1876, %v1872
        %v1878 = vmul.f32 1.0, %v1877
        %v1879 = vrcp.pop %v1541
        %v1880 = vmul.f32 %v1541, %v1879
        %v1881 = vsub.f32 1.0, %v1880
        %v1882 = vmul.f32 %v1879, %v1881
        %v1883 = vadd.f32 %v1879, %v1882
        %vm1884 = vweird.f32 %v1541
        %vm1885 = vweird.f32 %v1879
        %vm1886 = vmor %vm1884, %vm1885
        %v1887 = vsel %vm1886, %v1879, %v1883
        %v1888 = vand.u32 2147483647, %v1541
        %vm1889 = vcmp.eq.f32.partialorder %v1888, 8.507059e+37
        %v1890 = vand.u32 %v1541, 2147483648
        %v1891 = vor.u32 1.1754944e-38, %v1890
        %v1892 = vsel %vm1889, %v1891, %v1887
        %v1893 = vmul.f32 1.0, %v1892
        %v1894 = vrcp.pop %v1542
        %v1895 = vmul.f32 %v1542, %v1894
        %v1896 = vsub.f32 1.0, %v1895
        %v1897 = vmul.f32 %v1894, %v1896
        %v1898 = vadd.f32 %v1894, %v1897
        %vm1899 = vweird.f32 %v1542
        %vm1900 = vweird.f32 %v1894
        %vm1901 = vmor %vm1899, %vm1900
        %v1902 = vsel %vm1901, %v1894, %v1898
        %v1903 = vand.u32 2147483647, %v1542
        %vm1904 = vcmp.eq.f32.partialorder %v1903, 8.507059e+37
        %v1905 = vand.u32 %v1542, 2147483648
        %v1906 = vor.u32 1.1754944e-38, %v1905
        %v1907 = vsel %vm1904, %v1906, %v1902
        %v1908 = vmul.f32 1.0, %v1907
        %v1909 = vrcp.pop %v1543
        %v1910 = vmul.f32 %v1543, %v1909
        %v1911 = vsub.f32 1.0, %v1910
        %v1912 = vmul.f32 %v1909, %v1911
        %v1913 = vadd.f32 %v1909, %v1912
        %vm1914 = vweird.f32 %v1543
        %vm1915 = vweird.f32 %v1909
        %vm1916 = vmor %vm1914, %vm1915
        %v1917 = vsel %vm1916, %v1909, %v1913
        %v1918 = vand.u32 2147483647, %v1543
        %vm1919 = vcmp.eq.f32.partialorder %v1918, 8.507059e+37
        %v1920 = vand.u32 %v1543, 2147483648
        %v1921 = vor.u32 1.1754944e-38, %v1920
        %v1922 = vsel %vm1919, %v1921, %v1917
        %v1923 = vmul.f32 1.0, %v1922
        %v1924 = vrcp.pop %v1544
        %v1925 = vmul.f32 %v1544, %v1924
        %v1926 = vsub.f32 1.0, %v1925
        %v1927 = vmul.f32 %v1924, %v1926
        %v1928 = vadd.f32 %v1924, %v1927
        %vm1929 = vweird.f32 %v1544
        %vm1930 = vweird.f32 %v1924
        %vm1931 = vmor %vm1929, %vm1930
        %v1932 = vsel %vm1931, %v1924, %v1928
        %v1933 = vand.u32 2147483647, %v1544
        %vm1934 = vcmp.eq.f32.partialorder %v1933, 8.507059e+37
        %v1935 = vand.u32 %v1544, 2147483648
        %v1936 = vor.u32 1.1754944e-38, %v1935
        %v1937 = vsel %vm1934, %v1936, %v1932
        %v1938 = vmul.f32 1.0, %v1937
        %v1939 = vrcp.pop %v1545
        %v1940 = vmul.f32 %v1545, %v1939
        %v1941 = vsub.f32 1.0, %v1940
        %v1942 = vmul.f32 %v1939, %v1941
        %v1943 = vadd.f32 %v1939, %v1942
        %vm1944 = vweird.f32 %v1545
        %vm1945 = vweird.f32 %v1939
        %vm1946 = vmor %vm1944, %vm1945
        %v1947 = vsel %vm1946, %v1939, %v1943
        %v1948 = vand.u32 2147483647, %v1545
        %vm1949 = vcmp.eq.f32.partialorder %v1948, 8.507059e+37
        %v1950 = vand.u32 %v1545, 2147483648
        %v1951 = vor.u32 1.1754944e-38, %v1950
        %v1952 = vsel %vm1949, %v1951, %v1947
        %v1953 = vmul.f32 1.0, %v1952
        %v1954 = vrcp.pop %v1546
        %v1955 = vmul.f32 %v1546, %v1954
        %v1956 = vsub.f32 1.0, %v1955
        %v1957 = vmul.f32 %v1954, %v1956
        %v1958 = vadd.f32 %v1954, %v1957
        %vm1959 = vweird.f32 %v1546
        %vm1960 = vweird.f32 %v1954
        %vm1961 = vmor %vm1959, %vm1960
        %v1962 = vsel %vm1961, %v1954, %v1958
        %v1963 = vand.u32 2147483647, %v1546
        %vm1964 = vcmp.eq.f32.partialorder %v1963, 8.507059e+37
        %v1965 = vand.u32 %v1546, 2147483648
        %v1966 = vor.u32 1.1754944e-38, %v1965
        %v1967 = vsel %vm1964, %v1966, %v1962
        %v1968 = vmul.f32 1.0, %v1967
        %v1969 = vrcp.pop %v1547
        %v1970 = vmul.f32 %v1547, %v1969
        %v1971 = vsub.f32 1.0, %v1970
        %v1972 = vmul.f32 %v1969, %v1971
        %v1973 = vadd.f32 %v1969, %v1972
        %vm1974 = vweird.f32 %v1547
        %vm1975 = vweird.f32 %v1969
        %vm1976 = vmor %vm1974, %vm1975
        %v1977 = vsel %vm1976, %v1969, %v1973
        %v1978 = vand.u32 2147483647, %v1547
        %vm1979 = vcmp.eq.f32.partialorder %v1978, 8.507059e+37
        %v1980 = vand.u32 %v1547, 2147483648
        %v1981 = vor.u32 1.1754944e-38, %v1980
        %v1982 = vsel %vm1979, %v1981, %v1977
        %v1983 = vmul.f32 1.0, %v1982
        %v1984 = vrcp.pop %v1548
        %v1985 = vmul.f32 %v1548, %v1984
        %v1986 = vsub.f32 1.0, %v1985
        %v1987 = vmul.f32 %v1984, %v1986
        %v1988 = vadd.f32 %v1984, %v1987
        %vm1989 = vweird.f32 %v1548
        %vm1990 = vweird.f32 %v1984
        %vm1991 = vmor %vm1989, %vm1990
        %v1992 = vsel %vm1991, %v1984, %v1988
        %v1993 = vand.u32 2147483647, %v1548
        %vm1994 = vcmp.eq.f32.partialorder %v1993, 8.507059e+37
        %v1995 = vand.u32 %v1548, 2147483648
        %v1996 = vor.u32 1.1754944e-38, %v1995
        %v1997 = vsel %vm1994, %v1996, %v1992
        %v1998 = vmul.f32 1.0, %v1997
        %v1999 = vrcp.pop %v1549
        %v2000 = vmul.f32 %v1549, %v1999
        %v2001 = vsub.f32 1.0, %v2000
        %v2002 = vmul.f32 %v1999, %v2001
        %v2003 = vadd.f32 %v1999, %v2002
        %vm2004 = vweird.f32 %v1549
        %vm2005 = vweird.f32 %v1999
        %vm2006 = vmor %vm2004, %vm2005
        %v2007 = vsel %vm2006, %v1999, %v2003
        %v2008 = vand.u32 2147483647, %v1549
        %vm2009 = vcmp.eq.f32.partialorder %v2008, 8.507059e+37
        %v2010 = vand.u32 %v1549, 2147483648
        %v2011 = vor.u32 1.1754944e-38, %v2010
        %v2012 = vsel %vm2009, %v2011, %v2007
        %v2013 = vmul.f32 1.0, %v2012
        %v2014 = vrcp.pop %v1550
        %v2015 = vmul.f32 %v1550, %v2014
        %v2016 = vsub.f32 1.0, %v2015
        %v2017 = vmul.f32 %v2014, %v2016
        %v2018 = vadd.f32 %v2014, %v2017
        %vm2019 = vweird.f32 %v1550
        %vm2020 = vweird.f32 %v2014
        %vm2021 = vmor %vm2019, %vm2020
        %v2022 = vsel %vm2021, %v2014, %v2018
        %v2023 = vand.u32 2147483647, %v1550
        %vm2024 = vcmp.eq.f32.partialorder %v2023, 8.507059e+37
        %v2025 = vand.u32 %v1550, 2147483648
        %v2026 = vor.u32 1.1754944e-38, %v2025
        %v2027 = vsel %vm2024, %v2026, %v2022
        %v2028 = vmul.f32 1.0, %v2027
        %v2029 = vrcp.pop %v1551
        %v2030 = vmul.f32 %v1551, %v2029
        %v2031 = vsub.f32 1.0, %v2030
        %v2032 = vmul.f32 %v2029, %v2031
        %v2033 = vadd.f32 %v2029, %v2032
        %vm2034 = vweird.f32 %v1551
        %vm2035 = vweird.f32 %v2029
        %vm2036 = vmor %vm2034, %vm2035
        %v2037 = vsel %vm2036, %v2029, %v2033
        %v2038 = vand.u32 2147483647, %v1551
        %vm2039 = vcmp.eq.f32.partialorder %v2038, 8.507059e+37
        %v2040 = vand.u32 %v1551, 2147483648
        %v2041 = vor.u32 1.1754944e-38, %v2040
        %v2042 = vsel %vm2039, %v2041, %v2037
        %v2043 = vmul.f32 1.0, %v2042
        %v2044 = vrcp.pop %v1552
        %v2045 = vmul.f32 %v1552, %v2044
        %v2046 = vsub.f32 1.0, %v2045
        %v2047 = vmul.f32 %v2044, %v2046
        %v2048 = vadd.f32 %v2044, %v2047
        %vm2049 = vweird.f32 %v1552
        %vm2050 = vweird.f32 %v2044
        %vm2051 = vmor %vm2049, %vm2050
        %v2052 = vsel %vm2051, %v2044, %v2048
        %v2053 = vand.u32 2147483647, %v1552
        %vm2054 = vcmp.eq.f32.partialorder %v2053, 8.507059e+37
        %v2055 = vand.u32 %v1552, 2147483648
        %v2056 = vor.u32 1.1754944e-38, %v2055
        %v2057 = vsel %vm2054, %v2056, %v2052
        %v2058 = vmul.f32 1.0, %v2057
        %v2059 = vrcp.pop %v1553
        %v2060 = vmul.f32 %v1553, %v2059
        %v2061 = vsub.f32 1.0, %v2060
        %v2062 = vmul.f32 %v2059, %v2061
        %v2063 = vadd.f32 %v2059, %v2062
        %vm2064 = vweird.f32 %v1553
        %vm2065 = vweird.f32 %v2059
        %vm2066 = vmor %vm2064, %vm2065
        %v2067 = vsel %vm2066, %v2059, %v2063
        %v2068 = vand.u32 2147483647, %v1553
        %vm2069 = vcmp.eq.f32.partialorder %v2068, 8.507059e+37
        %v2070 = vand.u32 %v1553, 2147483648
        %v2071 = vor.u32 1.1754944e-38, %v2070
        %v2072 = vsel %vm2069, %v2071, %v2067
        %v2073 = vmul.f32 1.0, %v2072
        %v2074 = vrcp.pop %v1554
        %v2075 = vmul.f32 %v1554, %v2074
        %v2076 = vsub.f32 1.0, %v2075
        %v2077 = vmul.f32 %v2074, %v2076
        %v2078 = vadd.f32 %v2074, %v2077
        %vm2079 = vweird.f32 %v1554
        %vm2080 = vweird.f32 %v2074
        %vm2081 = vmor %vm2079, %vm2080
        %v2082 = vsel %vm2081, %v2074, %v2078
        %v2083 = vand.u32 2147483647, %v1554
        %vm2084 = vcmp.eq.f32.partialorder %v2083, 8.507059e+37
        %v2085 = vand.u32 %v1554, 2147483648
        %v2086 = vor.u32 1.1754944e-38, %v2085
        %v2087 = vsel %vm2084, %v2086, %v2082
        %v2088 = vmul.f32 1.0, %v2087
        %v2089 = vrcp.pop %v1555
        %v2090 = vmul.f32 %v1555, %v2089
        %v2091 = vsub.f32 1.0, %v2090
        %v2092 = vmul.f32 %v2089, %v2091
        %v2093 = vadd.f32 %v2089, %v2092
        %vm2094 = vweird.f32 %v1555
        %vm2095 = vweird.f32 %v2089
        %vm2096 = vmor %vm2094, %vm2095
        %v2097 = vsel %vm2096, %v2089, %v2093
        %v2098 = vand.u32 2147483647, %v1555
        %vm2099 = vcmp.eq.f32.partialorder %v2098, 8.507059e+37
        %v2100 = vand.u32 %v1555, 2147483648
        %v2101 = vor.u32 1.1754944e-38, %v2100
        %v2102 = vsel %vm2099, %v2101, %v2097
        %v2103 = vmul.f32 1.0, %v2102
        %v2104 = vrcp.pop %v1556
        %v2105 = vmul.f32 %v1556, %v2104
        %v2106 = vsub.f32 1.0, %v2105
        %v2107 = vmul.f32 %v2104, %v2106
        %v2108 = vadd.f32 %v2104, %v2107
        %vm2109 = vweird.f32 %v1556
        %vm2110 = vweird.f32 %v2104
        %vm2111 = vmor %vm2109, %vm2110
        %v2112 = vsel %vm2111, %v2104, %v2108
        %v2113 = vand.u32 2147483647, %v1556
        %vm2114 = vcmp.eq.f32.partialorder %v2113, 8.507059e+37
        %v2115 = vand.u32 %v1556, 2147483648
        %v2116 = vor.u32 1.1754944e-38, %v2115
        %v2117 = vsel %vm2114, %v2116, %v2112
        %v2118 = vmul.f32 1.0, %v2117
        %v2119 = vrcp.pop %v1557
        %v2120 = vmul.f32 %v1557, %v2119
        %v2121 = vsub.f32 1.0, %v2120
        %v2122 = vmul.f32 %v2119, %v2121
        %v2123 = vadd.f32 %v2119, %v2122
        %vm2124 = vweird.f32 %v1557
        %vm2125 = vweird.f32 %v2119
        %vm2126 = vmor %vm2124, %vm2125
        %v2127 = vsel %vm2126, %v2119, %v2123
        %v2128 = vand.u32 2147483647, %v1557
        %vm2129 = vcmp.eq.f32.partialorder %v2128, 8.507059e+37
        %v2130 = vand.u32 %v1557, 2147483648
        %v2131 = vor.u32 1.1754944e-38, %v2130
        %v2132 = vsel %vm2129, %v2131, %v2127
        %v2133 = vmul.f32 1.0, %v2132
        %v2134 = vrcp.pop %v1558
        %v2135 = vmul.f32 %v1558, %v2134
        %v2136 = vsub.f32 1.0, %v2135
        %v2137 = vmul.f32 %v2134, %v2136
        %v2138 = vadd.f32 %v2134, %v2137
        %vm2139 = vweird.f32 %v1558
        %vm2140 = vweird.f32 %v2134
        %vm2141 = vmor %vm2139, %vm2140
        %v2142 = vsel %vm2141, %v2134, %v2138
        %v2143 = vand.u32 2147483647, %v1558
        %vm2144 = vcmp.eq.f32.partialorder %v2143, 8.507059e+37
        %v2145 = vand.u32 %v1558, 2147483648
        %v2146 = vor.u32 1.1754944e-38, %v2145
        %v2147 = vsel %vm2144, %v2146, %v2142
        %v2148 = vmul.f32 1.0, %v2147
        %v2149 = vrcp.pop %v1559
        %v2150 = vmul.f32 %v1559, %v2149
        %v2151 = vsub.f32 1.0, %v2150
        %v2152 = vmul.f32 %v2149, %v2151
        %v2153 = vadd.f32 %v2149, %v2152
        %vm2154 = vweird.f32 %v1559
        %vm2155 = vweird.f32 %v2149
        %vm2156 = vmor %vm2154, %vm2155
        %v2157 = vsel %vm2156, %v2149, %v2153
        %v2158 = vand.u32 2147483647, %v1559
        %vm2159 = vcmp.eq.f32.partialorder %v2158, 8.507059e+37
        %v2160 = vand.u32 %v1559, 2147483648
        %v2161 = vor.u32 1.1754944e-38, %v2160
        %v2162 = vsel %vm2159, %v2161, %v2157
        %v2163 = vmul.f32 1.0, %v2162
        %v2164 = vrcp.pop %v1560
        %v2165 = vmul.f32 %v1560, %v2164
        %v2166 = vsub.f32 1.0, %v2165
        %v2167 = vmul.f32 %v2164, %v2166
        %v2168 = vadd.f32 %v2164, %v2167
        %vm2169 = vweird.f32 %v1560
        %vm2170 = vweird.f32 %v2164
        %vm2171 = vmor %vm2169, %vm2170
        %v2172 = vsel %vm2171, %v2164, %v2168
        %v2173 = vand.u32 2147483647, %v1560
        %vm2174 = vcmp.eq.f32.partialorder %v2173, 8.507059e+37
        %v2175 = vand.u32 %v1560, 2147483648
        %v2176 = vor.u32 1.1754944e-38, %v2175
        %v2177 = vsel %vm2174, %v2176, %v2172
        %v2178 = vmul.f32 1.0, %v2177
        %v2179 = vrcp.pop %v1561
        %v2180 = vmul.f32 %v1561, %v2179
        %v2181 = vsub.f32 1.0, %v2180
        %v2182 = vmul.f32 %v2179, %v2181
        %v2183 = vadd.f32 %v2179, %v2182
        %vm2184 = vweird.f32 %v1561
        %vm2185 = vweird.f32 %v2179
        %vm2186 = vmor %vm2184, %vm2185
        %v2187 = vsel %vm2186, %v2179, %v2183
        %v2188 = vand.u32 2147483647, %v1561
        %vm2189 = vcmp.eq.f32.partialorder %v2188, 8.507059e+37
        %v2190 = vand.u32 %v1561, 2147483648
        %v2191 = vor.u32 1.1754944e-38, %v2190
        %v2192 = vsel %vm2189, %v2191, %v2187
        %v2193 = vmul.f32 1.0, %v2192
        %v2194 = vrcp.pop %v1562
        %v2195 = vmul.f32 %v1562, %v2194
        %v2196 = vsub.f32 1.0, %v2195
        %v2197 = vmul.f32 %v2194, %v2196
        %v2198 = vadd.f32 %v2194, %v2197
        %vm2199 = vweird.f32 %v1562
        %vm2200 = vweird.f32 %v2194
        %vm2201 = vmor %vm2199, %vm2200
        %v2202 = vsel %vm2201, %v2194, %v2198
        %v2203 = vand.u32 2147483647, %v1562
        %vm2204 = vcmp.eq.f32.partialorder %v2203, 8.507059e+37
        %v2205 = vand.u32 %v1562, 2147483648
        %v2206 = vor.u32 1.1754944e-38, %v2205
        %v2207 = vsel %vm2204, %v2206, %v2202
        %v2208 = vmul.f32 1.0, %v2207
        %v2209 = vrcp.pop %v1563
        %v2210 = vmul.f32 %v1563, %v2209
        %v2211 = vsub.f32 1.0, %v2210
        %v2212 = vmul.f32 %v2209, %v2211
        %v2213 = vadd.f32 %v2209, %v2212
        %vm2214 = vweird.f32 %v1563
        %vm2215 = vweird.f32 %v2209
        %vm2216 = vmor %vm2214, %vm2215
        %v2217 = vsel %vm2216, %v2209, %v2213
        %v2218 = vand.u32 2147483647, %v1563
        %vm2219 = vcmp.eq.f32.partialorder %v2218, 8.507059e+37
        %v2220 = vand.u32 %v1563, 2147483648
        %v2221 = vor.u32 1.1754944e-38, %v2220
        %v2222 = vsel %vm2219, %v2221, %v2217
        %v2223 = vmul.f32 1.0, %v2222
        %v2224 = vrcp.pop %v1564
        %v2225 = vmul.f32 %v1564, %v2224
        %v2226 = vsub.f32 1.0, %v2225
        %v2227 = vmul.f32 %v2224, %v2226
        %v2228 = vadd.f32 %v2224, %v2227
        %vm2229 = vweird.f32 %v1564
        %vm2230 = vweird.f32 %v2224
        %vm2231 = vmor %vm2229, %vm2230
        %v2232 = vsel %vm2231, %v2224, %v2228
        %v2233 = vand.u32 2147483647, %v1564
        %vm2234 = vcmp.eq.f32.partialorder %v2233, 8.507059e+37
        %v2235 = vand.u32 %v1564, 2147483648
        %v2236 = vor.u32 1.1754944e-38, %v2235
        %v2237 = vsel %vm2234, %v2236, %v2232
        %v2238 = vmul.f32 1.0, %v2237
        %v2239 = vrcp.pop %v1565
        %v2240 = vmul.f32 %v1565, %v2239
        %v2241 = vsub.f32 1.0, %v2240
        %v2242 = vmul.f32 %v2239, %v2241
        %v2243 = vadd.f32 %v2239, %v2242
        %vm2244 = vweird.f32 %v1565
        %vm2245 = vweird.f32 %v2239
        %vm2246 = vmor %vm2244, %vm2245
        %v2247 = vsel %vm2246, %v2239, %v2243
        %v2248 = vand.u32 2147483647, %v1565
        %vm2249 = vcmp.eq.f32.partialorder %v2248, 8.507059e+37
        %v2250 = vand.u32 %v1565, 2147483648
        %v2251 = vor.u32 1.1754944e-38, %v2250
        %v2252 = vsel %vm2249, %v2251, %v2247
        %v2253 = vmul.f32 1.0, %v2252
        %v2254 = vrcp.pop %v1566
        %v2255 = vmul.f32 %v1566, %v2254
        %v2256 = vsub.f32 1.0, %v2255
        %v2257 = vmul.f32 %v2254, %v2256
        %v2258 = vadd.f32 %v2254, %v2257
        %vm2259 = vweird.f32 %v1566
        %vm2260 = vweird.f32 %v2254
        %vm2261 = vmor %vm2259, %vm2260
        %v2262 = vsel %vm2261, %v2254, %v2258
        %v2263 = vand.u32 2147483647, %v1566
        %vm2264 = vcmp.eq.f32.partialorder %v2263, 8.507059e+37
        %v2265 = vand.u32 %v1566, 2147483648
        %v2266 = vor.u32 1.1754944e-38, %v2265
        %v2267 = vsel %vm2264, %v2266, %v2262
        %v2268 = vmul.f32 1.0, %v2267
        %v2269 = vrcp.pop %v1567
        %v2270 = vmul.f32 %v1567, %v2269
        %v2271 = vsub.f32 1.0, %v2270
        %v2272 = vmul.f32 %v2269, %v2271
        %v2273 = vadd.f32 %v2269, %v2272
        %vm2274 = vweird.f32 %v1567
        %vm2275 = vweird.f32 %v2269
        %vm2276 = vmor %vm2274, %vm2275
        %v2277 = vsel %vm2276, %v2269, %v2273
        %v2278 = vand.u32 2147483647, %v1567
        %vm2279 = vcmp.eq.f32.partialorder %v2278, 8.507059e+37
        %v2280 = vand.u32 %v1567, 2147483648
        %v2281 = vor.u32 1.1754944e-38, %v2280
        %v2282 = vsel %vm2279, %v2281, %v2277
        %v2283 = vmul.f32 1.0, %v2282
        %v2284 = vrcp.pop %v1568
        %v2285 = vmul.f32 %v1568, %v2284
        %v2286 = vsub.f32 1.0, %v2285
        %v2287 = vmul.f32 %v2284, %v2286
        %v2288 = vadd.f32 %v2284, %v2287
        %vm2289 = vweird.f32 %v1568
        %vm2290 = vweird.f32 %v2284
        %vm2291 = vmor %vm2289, %vm2290
        %v2292 = vsel %vm2291, %v2284, %v2288
        %v2293 = vand.u32 2147483647, %v1568
        %vm2294 = vcmp.eq.f32.partialorder %v2293, 8.507059e+37
        %v2295 = vand.u32 %v1568, 2147483648
        %v2296 = vor.u32 1.1754944e-38, %v2295
        %v2297 = vsel %vm2294, %v2296, %v2292
        %v2298 = vmul.f32 1.0, %v2297
        %v2299 = vrcp.pop %v1569
        %v2300 = vmul.f32 %v1569, %v2299
        %v2301 = vsub.f32 1.0, %v2300
        %v2302 = vmul.f32 %v2299, %v2301
        %v2303 = vadd.f32 %v2299, %v2302
        %vm2304 = vweird.f32 %v1569
        %vm2305 = vweird.f32 %v2299
        %vm2306 = vmor %vm2304, %vm2305
        %v2307 = vsel %vm2306, %v2299, %v2303
        %v2308 = vand.u32 2147483647, %v1569
        %vm2309 = vcmp.eq.f32.partialorder %v2308, 8.507059e+37
        %v2310 = vand.u32 %v1569, 2147483648
        %v2311 = vor.u32 1.1754944e-38, %v2310
        %v2312 = vsel %vm2309, %v2311, %v2307
        %v2313 = vmul.f32 1.0, %v2312
        %v2314 = vrcp.pop %v1570
        %v2315 = vmul.f32 %v1570, %v2314
        %v2316 = vsub.f32 1.0, %v2315
        %v2317 = vmul.f32 %v2314, %v2316
        %v2318 = vadd.f32 %v2314, %v2317
        %vm2319 = vweird.f32 %v1570
        %vm2320 = vweird.f32 %v2314
        %vm2321 = vmor %vm2319, %vm2320
        %v2322 = vsel %vm2321, %v2314, %v2318
        %v2323 = vand.u32 2147483647, %v1570
        %vm2324 = vcmp.eq.f32.partialorder %v2323, 8.507059e+37
        %v2325 = vand.u32 %v1570, 2147483648
        %v2326 = vor.u32 1.1754944e-38, %v2325
        %v2327 = vsel %vm2324, %v2326, %v2322
        %v2328 = vmul.f32 1.0, %v2327
        %v2329 = vrcp.pop %v1571
        %v2330 = vmul.f32 %v1571, %v2329
        %v2331 = vsub.f32 1.0, %v2330
        %v2332 = vmul.f32 %v2329, %v2331
        %v2333 = vadd.f32 %v2329, %v2332
        %vm2334 = vweird.f32 %v1571
        %vm2335 = vweird.f32 %v2329
        %vm2336 = vmor %vm2334, %vm2335
        %v2337 = vsel %vm2336, %v2329, %v2333
        %v2338 = vand.u32 2147483647, %v1571
        %vm2339 = vcmp.eq.f32.partialorder %v2338, 8.507059e+37
        %v2340 = vand.u32 %v1571, 2147483648
        %v2341 = vor.u32 1.1754944e-38, %v2340
        %v2342 = vsel %vm2339, %v2341, %v2337
        %v2343 = vmul.f32 1.0, %v2342
        %v2344 = vrcp.pop %v1572
        %v2345 = vmul.f32 %v1572, %v2344
        %v2346 = vsub.f32 1.0, %v2345
        %v2347 = vmul.f32 %v2344, %v2346
        %v2348 = vadd.f32 %v2344, %v2347
        %vm2349 = vweird.f32 %v1572
        %vm2350 = vweird.f32 %v2344
        %vm2351 = vmor %vm2349, %vm2350
        %v2352 = vsel %vm2351, %v2344, %v2348
        %v2353 = vand.u32 2147483647, %v1572
        %vm2354 = vcmp.eq.f32.partialorder %v2353, 8.507059e+37
        %v2355 = vand.u32 %v1572, 2147483648
        %v2356 = vor.u32 1.1754944e-38, %v2355
        %v2357 = vsel %vm2354, %v2356, %v2352
        %v2358 = vmul.f32 1.0, %v2357
        %v2359 = vrcp.pop %v1573
        %v2360 = vmul.f32 %v1573, %v2359
        %v2361 = vsub.f32 1.0, %v2360
        %v2362 = vmul.f32 %v2359, %v2361
        %v2363 = vadd.f32 %v2359, %v2362
        %vm2364 = vweird.f32 %v1573
        %vm2365 = vweird.f32 %v2359
        %vm2366 = vmor %vm2364, %vm2365
        %v2367 = vsel %vm2366, %v2359, %v2363
        %v2368 = vand.u32 2147483647, %v1573
        %vm2369 = vcmp.eq.f32.partialorder %v2368, 8.507059e+37
        %v2370 = vand.u32 %v1573, 2147483648
        %v2371 = vor.u32 1.1754944e-38, %v2370
        %v2372 = vsel %vm2369, %v2371, %v2367
        %v2373 = vmul.f32 1.0, %v2372
        %v2374 = vrcp.pop %v1574
        %v2375 = vmul.f32 %v1574, %v2374
        %v2376 = vsub.f32 1.0, %v2375
        %v2377 = vmul.f32 %v2374, %v2376
        %v2378 = vadd.f32 %v2374, %v2377
        %vm2379 = vweird.f32 %v1574
        %vm2380 = vweird.f32 %v2374
        %vm2381 = vmor %vm2379, %vm2380
        %v2382 = vsel %vm2381, %v2374, %v2378
        %v2383 = vand.u32 2147483647, %v1574
        %vm2384 = vcmp.eq.f32.partialorder %v2383, 8.507059e+37
        %v2385 = vand.u32 %v1574, 2147483648
        %v2386 = vor.u32 1.1754944e-38, %v2385
        %v2387 = vsel %vm2384, %v2386, %v2382
        %v2388 = vmul.f32 1.0, %v2387
        %v2389 = vrcp.pop %v1575
        %v2390 = vmul.f32 %v1575, %v2389
        %v2391 = vsub.f32 1.0, %v2390
        %v2392 = vmul.f32 %v2389, %v2391
        %v2393 = vadd.f32 %v2389, %v2392
        %vm2394 = vweird.f32 %v1575
        %vm2395 = vweird.f32 %v2389
        %vm2396 = vmor %vm2394, %vm2395
        %v2397 = vsel %vm2396, %v2389, %v2393
        %v2398 = vand.u32 2147483647, %v1575
        %vm2399 = vcmp.eq.f32.partialorder %v2398, 8.507059e+37
        %v2400 = vand.u32 %v1575, 2147483648
        %v2401 = vor.u32 1.1754944e-38, %v2400
        %v2402 = vsel %vm2399, %v2401, %v2397
        %v2403 = vmul.f32 1.0, %v2402
        %v2404 = vrcp.pop %v1576
        %v2405 = vmul.f32 %v1576, %v2404
        %v2406 = vsub.f32 1.0, %v2405
        %v2407 = vmul.f32 %v2404, %v2406
        %v2408 = vadd.f32 %v2404, %v2407
        %vm2409 = vweird.f32 %v1576
        %vm2410 = vweird.f32 %v2404
        %vm2411 = vmor %vm2409, %vm2410
        %v2412 = vsel %vm2411, %v2404, %v2408
        %v2413 = vand.u32 2147483647, %v1576
        %vm2414 = vcmp.eq.f32.partialorder %v2413, 8.507059e+37
        %v2415 = vand.u32 %v1576, 2147483648
        %v2416 = vor.u32 1.1754944e-38, %v2415
        %v2417 = vsel %vm2414, %v2416, %v2412
        %v2418 = vmul.f32 1.0, %v2417
        %v2419 = vrcp.pop %v1577
        %v2420 = vmul.f32 %v1577, %v2419
        %v2421 = vsub.f32 1.0, %v2420
        %v2422 = vmul.f32 %v2419, %v2421
        %v2423 = vadd.f32 %v2419, %v2422
        %vm2424 = vweird.f32 %v1577
        %vm2425 = vweird.f32 %v2419
        %vm2426 = vmor %vm2424, %vm2425
        %v2427 = vsel %vm2426, %v2419, %v2423
        %v2428 = vand.u32 2147483647, %v1577
        %vm2429 = vcmp.eq.f32.partialorder %v2428, 8.507059e+37
        %v2430 = vand.u32 %v1577, 2147483648
        %v2431 = vor.u32 1.1754944e-38, %v2430
        %v2432 = vsel %vm2429, %v2431, %v2427
        %v2433 = vmul.f32 1.0, %v2432
        %v2434 = vrcp.pop %v1578
        %v2435 = vmul.f32 %v1578, %v2434
        %v2436 = vsub.f32 1.0, %v2435
        %v2437 = vmul.f32 %v2434, %v2436
        %v2438 = vadd.f32 %v2434, %v2437
        %vm2439 = vweird.f32 %v1578
        %vm2440 = vweird.f32 %v2434
        %vm2441 = vmor %vm2439, %vm2440
        %v2442 = vsel %vm2441, %v2434, %v2438
        %v2443 = vand.u32 2147483647, %v1578
        %vm2444 = vcmp.eq.f32.partialorder %v2443, 8.507059e+37
        %v2445 = vand.u32 %v1578, 2147483648
        %v2446 = vor.u32 1.1754944e-38, %v2445
        %v2447 = vsel %vm2444, %v2446, %v2442
        %v2448 = vmul.f32 1.0, %v2447
        %v2449 = vrcp.pop %v1579
        %v2450 = vmul.f32 %v1579, %v2449
        %v2451 = vsub.f32 1.0, %v2450
        %v2452 = vmul.f32 %v2449, %v2451
        %v2453 = vadd.f32 %v2449, %v2452
        %vm2454 = vweird.f32 %v1579
        %vm2455 = vweird.f32 %v2449
        %vm2456 = vmor %vm2454, %vm2455
        %v2457 = vsel %vm2456, %v2449, %v2453
        %v2458 = vand.u32 2147483647, %v1579
        %vm2459 = vcmp.eq.f32.partialorder %v2458, 8.507059e+37
        %v2460 = vand.u32 %v1579, 2147483648
        %v2461 = vor.u32 1.1754944e-38, %v2460
        %v2462 = vsel %vm2459, %v2461, %v2457
        %v2463 = vmul.f32 1.0, %v2462
        %v2464 = vrcp.pop %v1580
        %v2465 = vmul.f32 %v1580, %v2464
        %v2466 = vsub.f32 1.0, %v2465
        %v2467 = vmul.f32 %v2464, %v2466
        %v2468 = vadd.f32 %v2464, %v2467
        %vm2469 = vweird.f32 %v1580
        %vm2470 = vweird.f32 %v2464
        %vm2471 = vmor %vm2469, %vm2470
        %v2472 = vsel %vm2471, %v2464, %v2468
        %v2473 = vand.u32 2147483647, %v1580
        %vm2474 = vcmp.eq.f32.partialorder %v2473, 8.507059e+37
        %v2475 = vand.u32 %v1580, 2147483648
        %v2476 = vor.u32 1.1754944e-38, %v2475
        %v2477 = vsel %vm2474, %v2476, %v2472
        %v2478 = vmul.f32 1.0, %v2477
        %v2479 = vrcp.pop %v1581
        %v2480 = vmul.f32 %v1581, %v2479
        %v2481 = vsub.f32 1.0, %v2480
        %v2482 = vmul.f32 %v2479, %v2481
        %v2483 = vadd.f32 %v2479, %v2482
        %vm2484 = vweird.f32 %v1581
        %vm2485 = vweird.f32 %v2479
        %vm2486 = vmor %vm2484, %vm2485
        %v2487 = vsel %vm2486, %v2479, %v2483
        %v2488 = vand.u32 2147483647, %v1581
        %vm2489 = vcmp.eq.f32.partialorder %v2488, 8.507059e+37
        %v2490 = vand.u32 %v1581, 2147483648
        %v2491 = vor.u32 1.1754944e-38, %v2490
        %v2492 = vsel %vm2489, %v2491, %v2487
        %v2493 = vmul.f32 1.0, %v2492
        %v2494 = vrcp.pop %v1582
        %v2495 = vmul.f32 %v1582, %v2494
        %v2496 = vsub.f32 1.0, %v2495
        %v2497 = vmul.f32 %v2494, %v2496
        %v2498 = vadd.f32 %v2494, %v2497
        %vm2499 = vweird.f32 %v1582
        %vm2500 = vweird.f32 %v2494
        %vm2501 = vmor %vm2499, %vm2500
        %v2502 = vsel %vm2501, %v2494, %v2498
        %v2503 = vand.u32 2147483647, %v1582
        %vm2504 = vcmp.eq.f32.partialorder %v2503, 8.507059e+37
        %v2505 = vand.u32 %v1582, 2147483648
        %v2506 = vor.u32 1.1754944e-38, %v2505
        %v2507 = vsel %vm2504, %v2506, %v2502
        %v2508 = vmul.f32 1.0, %v2507
        %v2509 = vrcp.pop %v1583
        %v2510 = vmul.f32 %v1583, %v2509
        %v2511 = vsub.f32 1.0, %v2510
        %v2512 = vmul.f32 %v2509, %v2511
        %v2513 = vadd.f32 %v2509, %v2512
        %vm2514 = vweird.f32 %v1583
        %vm2515 = vweird.f32 %v2509
        %vm2516 = vmor %vm2514, %vm2515
        %v2517 = vsel %vm2516, %v2509, %v2513
        %v2518 = vand.u32 2147483647, %v1583
        %vm2519 = vcmp.eq.f32.partialorder %v2518, 8.507059e+37
        %v2520 = vand.u32 %v1583, 2147483648
        %v2521 = vor.u32 1.1754944e-38, %v2520
        %v2522 = vsel %vm2519, %v2521, %v2517
        %v2523 = vmul.f32 1.0, %v2522
        %v2524 = vrcp.pop %v1584
        %v2525 = vmul.f32 %v1584, %v2524
        %v2526 = vsub.f32 1.0, %v2525
        %v2527 = vmul.f32 %v2524, %v2526
        %v2528 = vadd.f32 %v2524, %v2527
        %vm2529 = vweird.f32 %v1584
        %vm2530 = vweird.f32 %v2524
        %vm2531 = vmor %vm2529, %vm2530
        %v2532 = vsel %vm2531, %v2524, %v2528
        %v2533 = vand.u32 2147483647, %v1584
        %vm2534 = vcmp.eq.f32.partialorder %v2533, 8.507059e+37
        %v2535 = vand.u32 %v1584, 2147483648
        %v2536 = vor.u32 1.1754944e-38, %v2535
        %v2537 = vsel %vm2534, %v2536, %v2532
        %v2538 = vmul.f32 1.0, %v2537
        %v2539 = vrcp.pop %v1585
        %v2540 = vmul.f32 %v1585, %v2539
        %v2541 = vsub.f32 1.0, %v2540
        %v2542 = vmul.f32 %v2539, %v2541
        %v2543 = vadd.f32 %v2539, %v2542
        %vm2544 = vweird.f32 %v1585
        %vm2545 = vweird.f32 %v2539
        %vm2546 = vmor %vm2544, %vm2545
        %v2547 = vsel %vm2546, %v2539, %v2543
        %v2548 = vand.u32 2147483647, %v1585
        %vm2549 = vcmp.eq.f32.partialorder %v2548, 8.507059e+37
        %v2550 = vand.u32 %v1585, 2147483648
        %v2551 = vor.u32 1.1754944e-38, %v2550
        %v2552 = vsel %vm2549, %v2551, %v2547
        %v2553 = vmul.f32 1.0, %v2552
        %v2554 = vrcp.pop %v1586
        %v2555 = vmul.f32 %v1586, %v2554
        %v2556 = vsub.f32 1.0, %v2555
        %v2557 = vmul.f32 %v2554, %v2556
        %v2558 = vadd.f32 %v2554, %v2557
        %vm2559 = vweird.f32 %v1586
        %vm2560 = vweird.f32 %v2554
        %vm2561 = vmor %vm2559, %vm2560
        %v2562 = vsel %vm2561, %v2554, %v2558
        %v2563 = vand.u32 2147483647, %v1586
        %vm2564 = vcmp.eq.f32.partialorder %v2563, 8.507059e+37
        %v2565 = vand.u32 %v1586, 2147483648
        %v2566 = vor.u32 1.1754944e-38, %v2565
        %v2567 = vsel %vm2564, %v2566, %v2562
        %v2568 = vmul.f32 1.0, %v2567
        %v2569 = vrcp.pop %v1587
        %v2570 = vmul.f32 %v1587, %v2569
        %v2571 = vsub.f32 1.0, %v2570
        %v2572 = vmul.f32 %v2569, %v2571
        %v2573 = vadd.f32 %v2569, %v2572
        %vm2574 = vweird.f32 %v1587
        %vm2575 = vweird.f32 %v2569
        %vm2576 = vmor %vm2574, %vm2575
        %v2577 = vsel %vm2576, %v2569, %v2573
        %v2578 = vand.u32 2147483647, %v1587
        %vm2579 = vcmp.eq.f32.partialorder %v2578, 8.507059e+37
        %v2580 = vand.u32 %v1587, 2147483648
        %v2581 = vor.u32 1.1754944e-38, %v2580
        %v2582 = vsel %vm2579, %v2581, %v2577
        %v2583 = vmul.f32 1.0, %v2582
        %v2584 = vrcp.pop %v1588
        %v2585 = vmul.f32 %v1588, %v2584
        %v2586 = vsub.f32 1.0, %v2585
        %v2587 = vmul.f32 %v2584, %v2586
        %v2588 = vadd.f32 %v2584, %v2587
        %vm2589 = vweird.f32 %v1588
        %vm2590 = vweird.f32 %v2584
        %vm2591 = vmor %vm2589, %vm2590
        %v2592 = vsel %vm2591, %v2584, %v2588
        %v2593 = vand.u32 2147483647, %v1588
        %vm2594 = vcmp.eq.f32.partialorder %v2593, 8.507059e+37
        %v2595 = vand.u32 %v1588, 2147483648
        %v2596 = vor.u32 1.1754944e-38, %v2595
        %v2597 = vsel %vm2594, %v2596, %v2592
        %v2598 = vmul.f32 1.0, %v2597
        %v2599 = vrcp.pop %v1589
        %v2600 = vmul.f32 %v1589, %v2599
        %v2601 = vsub.f32 1.0, %v2600
        %v2602 = vmul.f32 %v2599, %v2601
        %v2603 = vadd.f32 %v2599, %v2602
        %vm2604 = vweird.f32 %v1589
        %vm2605 = vweird.f32 %v2599
        %vm2606 = vmor %vm2604, %vm2605
        %v2607 = vsel %vm2606, %v2599, %v2603
        %v2608 = vand.u32 2147483647, %v1589
        %vm2609 = vcmp.eq.f32.partialorder %v2608, 8.507059e+37
        %v2610 = vand.u32 %v1589, 2147483648
        %v2611 = vor.u32 1.1754944e-38, %v2610
        %v2612 = vsel %vm2609, %v2611, %v2607
        %v2613 = vmul.f32 1.0, %v2612
        %v2614 = vrcp.pop %v1590
        %v2615 = vmul.f32 %v1590, %v2614
        %v2616 = vsub.f32 1.0, %v2615
        %v2617 = vmul.f32 %v2614, %v2616
        %v2618 = vadd.f32 %v2614, %v2617
        %vm2619 = vweird.f32 %v1590
        %vm2620 = vweird.f32 %v2614
        %vm2621 = vmor %vm2619, %vm2620
        %v2622 = vsel %vm2621, %v2614, %v2618
        %v2623 = vand.u32 2147483647, %v1590
        %vm2624 = vcmp.eq.f32.partialorder %v2623, 8.507059e+37
        %v2625 = vand.u32 %v1590, 2147483648
        %v2626 = vor.u32 1.1754944e-38, %v2625
        %v2627 = vsel %vm2624, %v2626, %v2622
        %v2628 = vmul.f32 1.0, %v2627
        %v2629 = vrcp.pop %v1591
        %v2630 = vmul.f32 %v1591, %v2629
        %v2631 = vsub.f32 1.0, %v2630
        %v2632 = vmul.f32 %v2629, %v2631
        %v2633 = vadd.f32 %v2629, %v2632
        %vm2634 = vweird.f32 %v1591
        %vm2635 = vweird.f32 %v2629
        %vm2636 = vmor %vm2634, %vm2635
        %v2637 = vsel %vm2636, %v2629, %v2633
        %v2638 = vand.u32 2147483647, %v1591
        %vm2639 = vcmp.eq.f32.partialorder %v2638, 8.507059e+37
        %v2640 = vand.u32 %v1591, 2147483648
        %v2641 = vor.u32 1.1754944e-38, %v2640
        %v2642 = vsel %vm2639, %v2641, %v2637
        %v2643 = vmul.f32 1.0, %v2642
        %v2644 = vrcp.pop %v1592
        %v2645 = vmul.f32 %v1592, %v2644
        %v2646 = vsub.f32 1.0, %v2645
        %v2647 = vmul.f32 %v2644, %v2646
        %v2648 = vadd.f32 %v2644, %v2647
        %vm2649 = vweird.f32 %v1592
        %vm2650 = vweird.f32 %v2644
        %vm2651 = vmor %vm2649, %vm2650
        %v2652 = vsel %vm2651, %v2644, %v2648
        %v2653 = vand.u32 2147483647, %v1592
        %vm2654 = vcmp.eq.f32.partialorder %v2653, 8.507059e+37
        %v2655 = vand.u32 %v1592, 2147483648
        %v2656 = vor.u32 1.1754944e-38, %v2655
        %v2657 = vsel %vm2654, %v2656, %v2652
        %v2658 = vmul.f32 1.0, %v2657
        %v2659 = vrcp.pop %v1593
        %v2660 = vmul.f32 %v1593, %v2659
        %v2661 = vsub.f32 1.0, %v2660
        %v2662 = vmul.f32 %v2659, %v2661
        %v2663 = vadd.f32 %v2659, %v2662
        %vm2664 = vweird.f32 %v1593
        %vm2665 = vweird.f32 %v2659
        %vm2666 = vmor %vm2664, %vm2665
        %v2667 = vsel %vm2666, %v2659, %v2663
        %v2668 = vand.u32 2147483647, %v1593
        %vm2669 = vcmp.eq.f32.partialorder %v2668, 8.507059e+37
        %v2670 = vand.u32 %v1593, 2147483648
        %v2671 = vor.u32 1.1754944e-38, %v2670
        %v2672 = vsel %vm2669, %v2671, %v2667
        %v2673 = vmul.f32 1.0, %v2672
        %v2674 = vrcp.pop %v1594
        %v2675 = vmul.f32 %v1594, %v2674
        %v2676 = vsub.f32 1.0, %v2675
        %v2677 = vmul.f32 %v2674, %v2676
        %v2678 = vadd.f32 %v2674, %v2677
        %vm2679 = vweird.f32 %v1594
        %vm2680 = vweird.f32 %v2674
        %vm2681 = vmor %vm2679, %vm2680
        %v2682 = vsel %vm2681, %v2674, %v2678
        %v2683 = vand.u32 2147483647, %v1594
        %vm2684 = vcmp.eq.f32.partialorder %v2683, 8.507059e+37
        %v2685 = vand.u32 %v1594, 2147483648
        %v2686 = vor.u32 1.1754944e-38, %v2685
        %v2687 = vsel %vm2684, %v2686, %v2682
        %v2688 = vmul.f32 1.0, %v2687
        %v2689 = vrcp.pop %v1595
        %v2690 = vmul.f32 %v1595, %v2689
        %v2691 = vsub.f32 1.0, %v2690
        %v2692 = vmul.f32 %v2689, %v2691
        %v2693 = vadd.f32 %v2689, %v2692
        %vm2694 = vweird.f32 %v1595
        %vm2695 = vweird.f32 %v2689
        %vm2696 = vmor %vm2694, %vm2695
        %v2697 = vsel %vm2696, %v2689, %v2693
        %v2698 = vand.u32 2147483647, %v1595
        %vm2699 = vcmp.eq.f32.partialorder %v2698, 8.507059e+37
        %v2700 = vand.u32 %v1595, 2147483648
        %v2701 = vor.u32 1.1754944e-38, %v2700
        %v2702 = vsel %vm2699, %v2701, %v2697
        %v2703 = vmul.f32 1.0, %v2702
        %v2704 = vrcp.pop %v1596
        %v2705 = vmul.f32 %v1596, %v2704
        %v2706 = vsub.f32 1.0, %v2705
        %v2707 = vmul.f32 %v2704, %v2706
        %v2708 = vadd.f32 %v2704, %v2707
        %vm2709 = vweird.f32 %v1596
        %vm2710 = vweird.f32 %v2704
        %vm2711 = vmor %vm2709, %vm2710
        %v2712 = vsel %vm2711, %v2704, %v2708
        %v2713 = vand.u32 2147483647, %v1596
        %vm2714 = vcmp.eq.f32.partialorder %v2713, 8.507059e+37
        %v2715 = vand.u32 %v1596, 2147483648
        %v2716 = vor.u32 1.1754944e-38, %v2715
        %v2717 = vsel %vm2714, %v2716, %v2712
        %v2718 = vmul.f32 1.0, %v2717
        %v2719 = vrcp.pop %v1597
        %v2720 = vmul.f32 %v1597, %v2719
        %v2721 = vsub.f32 1.0, %v2720
        %v2722 = vmul.f32 %v2719, %v2721
        %v2723 = vadd.f32 %v2719, %v2722
        %vm2724 = vweird.f32 %v1597
        %vm2725 = vweird.f32 %v2719
        %vm2726 = vmor %vm2724, %vm2725
        %v2727 = vsel %vm2726, %v2719, %v2723
        %v2728 = vand.u32 2147483647, %v1597
        %vm2729 = vcmp.eq.f32.partialorder %v2728, 8.507059e+37
        %v2730 = vand.u32 %v1597, 2147483648
        %v2731 = vor.u32 1.1754944e-38, %v2730
        %v2732 = vsel %vm2729, %v2731, %v2727
        %v2733 = vmul.f32 1.0, %v2732
        %v2734 = vrcp.pop %v1598
        %v2735 = vmul.f32 %v1598, %v2734
        %v2736 = vsub.f32 1.0, %v2735
        %v2737 = vmul.f32 %v2734, %v2736
        %v2738 = vadd.f32 %v2734, %v2737
        %vm2739 = vweird.f32 %v1598
        %vm2740 = vweird.f32 %v2734
        %vm2741 = vmor %vm2739, %vm2740
        %v2742 = vsel %vm2741, %v2734, %v2738
        %v2743 = vand.u32 2147483647, %v1598
        %vm2744 = vcmp.eq.f32.partialorder %v2743, 8.507059e+37
        %v2745 = vand.u32 %v1598, 2147483648
        %v2746 = vor.u32 1.1754944e-38, %v2745
        %v2747 = vsel %vm2744, %v2746, %v2742
        %v2748 = vmul.f32 1.0, %v2747
        %v2749 = vrcp.pop %v1599
        %v2750 = vmul.f32 %v1599, %v2749
        %v2751 = vsub.f32 1.0, %v2750
        %v2752 = vmul.f32 %v2749, %v2751
        %v2753 = vadd.f32 %v2749, %v2752
        %vm2754 = vweird.f32 %v1599
        %vm2755 = vweird.f32 %v2749
        %vm2756 = vmor %vm2754, %vm2755
        %v2757 = vsel %vm2756, %v2749, %v2753
        %v2758 = vand.u32 2147483647, %v1599
        %vm2759 = vcmp.eq.f32.partialorder %v2758, 8.507059e+37
        %v2760 = vand.u32 %v1599, 2147483648
        %v2761 = vor.u32 1.1754944e-38, %v2760
        %v2762 = vsel %vm2759, %v2761, %v2757
        %v2763 = vmul.f32 1.0, %v2762
        %v2764 = vrcp.pop %v1600
        %v2765 = vmul.f32 %v1600, %v2764
        %v2766 = vsub.f32 1.0, %v2765
        %v2767 = vmul.f32 %v2764, %v2766
        %v2768 = vadd.f32 %v2764, %v2767
        %vm2769 = vweird.f32 %v1600
        %vm2770 = vweird.f32 %v2764
        %vm2771 = vmor %vm2769, %vm2770
        %v2772 = vsel %vm2771, %v2764, %v2768
        %v2773 = vand.u32 2147483647, %v1600
        %vm2774 = vcmp.eq.f32.partialorder %v2773, 8.507059e+37
        %v2775 = vand.u32 %v1600, 2147483648
        %v2776 = vor.u32 1.1754944e-38, %v2775
        %v2777 = vsel %vm2774, %v2776, %v2772
        %v2778 = vmul.f32 1.0, %v2777
        %v2779 = vrcp.pop %v1601
        %v2780 = vmul.f32 %v1601, %v2779
        %v2781 = vsub.f32 1.0, %v2780
        %v2782 = vmul.f32 %v2779, %v2781
        %v2783 = vadd.f32 %v2779, %v2782
        %vm2784 = vweird.f32 %v1601
        %vm2785 = vweird.f32 %v2779
        %vm2786 = vmor %vm2784, %vm2785
        %v2787 = vsel %vm2786, %v2779, %v2783
        %v2788 = vand.u32 2147483647, %v1601
        %vm2789 = vcmp.eq.f32.partialorder %v2788, 8.507059e+37
        %v2790 = vand.u32 %v1601, 2147483648
        %v2791 = vor.u32 1.1754944e-38, %v2790
        %v2792 = vsel %vm2789, %v2791, %v2787
        %v2793 = vmul.f32 1.0, %v2792
        %v2794 = vrcp.pop %v1602
        %v2795 = vmul.f32 %v1602, %v2794
        %v2796 = vsub.f32 1.0, %v2795
        %v2797 = vmul.f32 %v2794, %v2796
        %v2798 = vadd.f32 %v2794, %v2797
        %vm2799 = vweird.f32 %v1602
        %vm2800 = vweird.f32 %v2794
        %vm2801 = vmor %vm2799, %vm2800
        %v2802 = vsel %vm2801, %v2794, %v2798
        %v2803 = vand.u32 2147483647, %v1602
        %vm2804 = vcmp.eq.f32.partialorder %v2803, 8.507059e+37
        %v2805 = vand.u32 %v1602, 2147483648
        %v2806 = vor.u32 1.1754944e-38, %v2805
        %v2807 = vsel %vm2804, %v2806, %v2802
        %v2808 = vmul.f32 1.0, %v2807
        %v2809 = vrcp.pop %v1603
        %v2810 = vmul.f32 %v1603, %v2809
        %v2811 = vsub.f32 1.0, %v2810
        %v2812 = vmul.f32 %v2809, %v2811
        %v2813 = vadd.f32 %v2809, %v2812
        %vm2814 = vweird.f32 %v1603
        %vm2815 = vweird.f32 %v2809
        %vm2816 = vmor %vm2814, %vm2815
        %v2817 = vsel %vm2816, %v2809, %v2813
        %v2818 = vand.u32 2147483647, %v1603
        %vm2819 = vcmp.eq.f32.partialorder %v2818, 8.507059e+37
        %v2820 = vand.u32 %v1603, 2147483648
        %v2821 = vor.u32 1.1754944e-38, %v2820
        %v2822 = vsel %vm2819, %v2821, %v2817
        %v2823 = vmul.f32 1.0, %v2822
        %v2824 = vrcp.pop %v1604
        %v2825 = vmul.f32 %v1604, %v2824
        %v2826 = vsub.f32 1.0, %v2825
        %v2827 = vmul.f32 %v2824, %v2826
        %v2828 = vadd.f32 %v2824, %v2827
        %vm2829 = vweird.f32 %v1604
        %vm2830 = vweird.f32 %v2824
        %vm2831 = vmor %vm2829, %vm2830
        %v2832 = vsel %vm2831, %v2824, %v2828
        %v2833 = vand.u32 2147483647, %v1604
        %vm2834 = vcmp.eq.f32.partialorder %v2833, 8.507059e+37
        %v2835 = vand.u32 %v1604, 2147483648
        %v2836 = vor.u32 1.1754944e-38, %v2835
        %v2837 = vsel %vm2834, %v2836, %v2832
        %v2838 = vmul.f32 1.0, %v2837
        %v2839 = vrcp.pop %v1605
        %v2840 = vmul.f32 %v1605, %v2839
        %v2841 = vsub.f32 1.0, %v2840
        %v2842 = vmul.f32 %v2839, %v2841
        %v2843 = vadd.f32 %v2839, %v2842
        %vm2844 = vweird.f32 %v1605
        %vm2845 = vweird.f32 %v2839
        %vm2846 = vmor %vm2844, %vm2845
        %v2847 = vsel %vm2846, %v2839, %v2843
        %v2848 = vand.u32 2147483647, %v1605
        %vm2849 = vcmp.eq.f32.partialorder %v2848, 8.507059e+37
        %v2850 = vand.u32 %v1605, 2147483648
        %v2851 = vor.u32 1.1754944e-38, %v2850
        %v2852 = vsel %vm2849, %v2851, %v2847
        %v2853 = vmul.f32 1.0, %v2852
        %v2854 = vrcp.pop %v1606
        %v2855 = vmul.f32 %v1606, %v2854
        %v2856 = vsub.f32 1.0, %v2855
        %v2857 = vmul.f32 %v2854, %v2856
        %v2858 = vadd.f32 %v2854, %v2857
        %vm2859 = vweird.f32 %v1606
        %vm2860 = vweird.f32 %v2854
        %vm2861 = vmor %vm2859, %vm2860
        %v2862 = vsel %vm2861, %v2854, %v2858
        %v2863 = vand.u32 2147483647, %v1606
        %vm2864 = vcmp.eq.f32.partialorder %v2863, 8.507059e+37
        %v2865 = vand.u32 %v1606, 2147483648
        %v2866 = vor.u32 1.1754944e-38, %v2865
        %v2867 = vsel %vm2864, %v2866, %v2862
        %v2868 = vmul.f32 1.0, %v2867
        %v2869 = vrcp.pop %v1607
        %v2870 = vmul.f32 %v1607, %v2869
        %v2871 = vsub.f32 1.0, %v2870
        %v2872 = vmul.f32 %v2869, %v2871
        %v2873 = vadd.f32 %v2869, %v2872
        %vm2874 = vweird.f32 %v1607
        %vm2875 = vweird.f32 %v2869
        %vm2876 = vmor %vm2874, %vm2875
        %v2877 = vsel %vm2876, %v2869, %v2873
        %v2878 = vand.u32 2147483647, %v1607
        %vm2879 = vcmp.eq.f32.partialorder %v2878, 8.507059e+37
        %v2880 = vand.u32 %v1607, 2147483648
        %v2881 = vor.u32 1.1754944e-38, %v2880
        %v2882 = vsel %vm2879, %v2881, %v2877
        %v2883 = vmul.f32 1.0, %v2882
        %v2884 = vrcp.pop %v1608
        %v2885 = vmul.f32 %v1608, %v2884
        %v2886 = vsub.f32 1.0, %v2885
        %v2887 = vmul.f32 %v2884, %v2886
        %v2888 = vadd.f32 %v2884, %v2887
        %vm2889 = vweird.f32 %v1608
        %vm2890 = vweird.f32 %v2884
        %vm2891 = vmor %vm2889, %vm2890
        %v2892 = vsel %vm2891, %v2884, %v2888
        %v2893 = vand.u32 2147483647, %v1608
        %vm2894 = vcmp.eq.f32.partialorder %v2893, 8.507059e+37
        %v2895 = vand.u32 %v1608, 2147483648
        %v2896 = vor.u32 1.1754944e-38, %v2895
        %v2897 = vsel %vm2894, %v2896, %v2892
        %v2898 = vmul.f32 1.0, %v2897
        %v2899 = vrcp.pop %v1609
        %v2900 = vmul.f32 %v1609, %v2899
        %v2901 = vsub.f32 1.0, %v2900
        %v2902 = vmul.f32 %v2899, %v2901
        %v2903 = vadd.f32 %v2899, %v2902
        %vm2904 = vweird.f32 %v1609
        %vm2905 = vweird.f32 %v2899
        %vm2906 = vmor %vm2904, %vm2905
        %v2907 = vsel %vm2906, %v2899, %v2903
        %v2908 = vand.u32 2147483647, %v1609
        %vm2909 = vcmp.eq.f32.partialorder %v2908, 8.507059e+37
        %v2910 = vand.u32 %v1609, 2147483648
        %v2911 = vor.u32 1.1754944e-38, %v2910
        %v2912 = vsel %vm2909, %v2911, %v2907
        %v2913 = vmul.f32 1.0, %v2912
        %v2914 = vrcp.pop %v1610
        %v2915 = vmul.f32 %v1610, %v2914
        %v2916 = vsub.f32 1.0, %v2915
        %v2917 = vmul.f32 %v2914, %v2916
        %v2918 = vadd.f32 %v2914, %v2917
        %vm2919 = vweird.f32 %v1610
        %vm2920 = vweird.f32 %v2914
        %vm2921 = vmor %vm2919, %vm2920
        %v2922 = vsel %vm2921, %v2914, %v2918
        %v2923 = vand.u32 2147483647, %v1610
        %vm2924 = vcmp.eq.f32.partialorder %v2923, 8.507059e+37
        %v2925 = vand.u32 %v1610, 2147483648
        %v2926 = vor.u32 1.1754944e-38, %v2925
        %v2927 = vsel %vm2924, %v2926, %v2922
        %v2928 = vmul.f32 1.0, %v2927
        %v2929 = vrcp.pop %v1611
        %v2930 = vmul.f32 %v1611, %v2929
        %v2931 = vsub.f32 1.0, %v2930
        %v2932 = vmul.f32 %v2929, %v2931
        %v2933 = vadd.f32 %v2929, %v2932
        %vm2934 = vweird.f32 %v1611
        %vm2935 = vweird.f32 %v2929
        %vm2936 = vmor %vm2934, %vm2935
        %v2937 = vsel %vm2936, %v2929, %v2933
        %v2938 = vand.u32 2147483647, %v1611
        %vm2939 = vcmp.eq.f32.partialorder %v2938, 8.507059e+37
        %v2940 = vand.u32 %v1611, 2147483648
        %v2941 = vor.u32 1.1754944e-38, %v2940
        %v2942 = vsel %vm2939, %v2941, %v2937
        %v2943 = vmul.f32 1.0, %v2942
        %v2944 = vrcp.pop %v1612
        %v2945 = vmul.f32 %v1612, %v2944
        %v2946 = vsub.f32 1.0, %v2945
        %v2947 = vmul.f32 %v2944, %v2946
        %v2948 = vadd.f32 %v2944, %v2947
        %vm2949 = vweird.f32 %v1612
        %vm2950 = vweird.f32 %v2944
        %vm2951 = vmor %vm2949, %vm2950
        %v2952 = vsel %vm2951, %v2944, %v2948
        %v2953 = vand.u32 2147483647, %v1612
        %vm2954 = vcmp.eq.f32.partialorder %v2953, 8.507059e+37
        %v2955 = vand.u32 %v1612, 2147483648
        %v2956 = vor.u32 1.1754944e-38, %v2955
        %v2957 = vsel %vm2954, %v2956, %v2952
        %v2958 = vmul.f32 1.0, %v2957
        %v2959 = vrcp.pop %v1613
        %v2960 = vmul.f32 %v1613, %v2959
        %v2961 = vsub.f32 1.0, %v2960
        %v2962 = vmul.f32 %v2959, %v2961
        %v2963 = vadd.f32 %v2959, %v2962
        %vm2964 = vweird.f32 %v1613
        %vm2965 = vweird.f32 %v2959
        %vm2966 = vmor %vm2964, %vm2965
        %v2967 = vsel %vm2966, %v2959, %v2963
        %v2968 = vand.u32 2147483647, %v1613
        %vm2969 = vcmp.eq.f32.partialorder %v2968, 8.507059e+37
        %v2970 = vand.u32 %v1613, 2147483648
        %v2971 = vor.u32 1.1754944e-38, %v2970
        %v2972 = vsel %vm2969, %v2971, %v2967
        %v2973 = vmul.f32 1.0, %v2972
        %v2974 = vrcp.pop %v1614
        %v2975 = vmul.f32 %v1614, %v2974
        %v2976 = vsub.f32 1.0, %v2975
        %v2977 = vmul.f32 %v2974, %v2976
        %v2978 = vadd.f32 %v2974, %v2977
        %vm2979 = vweird.f32 %v1614
        %vm2980 = vweird.f32 %v2974
        %vm2981 = vmor %vm2979, %vm2980
        %v2982 = vsel %vm2981, %v2974, %v2978
        %v2983 = vand.u32 2147483647, %v1614
        %vm2984 = vcmp.eq.f32.partialorder %v2983, 8.507059e+37
        %v2985 = vand.u32 %v1614, 2147483648
        %v2986 = vor.u32 1.1754944e-38, %v2985
        %v2987 = vsel %vm2984, %v2986, %v2982
        %v2988 = vmul.f32 1.0, %v2987
        %v2989 = vrcp.pop %v1615
        %v2990 = vmul.f32 %v1615, %v2989
        %v2991 = vsub.f32 1.0, %v2990
        %v2992 = vmul.f32 %v2989, %v2991
        %v2993 = vadd.f32 %v2989, %v2992
        %vm2994 = vweird.f32 %v1615
        %vm2995 = vweird.f32 %v2989
        %vm2996 = vmor %vm2994, %vm2995
        %v2997 = vsel %vm2996, %v2989, %v2993
        %v2998 = vand.u32 2147483647, %v1615
        %vm2999 = vcmp.eq.f32.partialorder %v2998, 8.507059e+37
        %v3000 = vand.u32 %v1615, 2147483648
        %v3001 = vor.u32 1.1754944e-38, %v3000
        %v3002 = vsel %vm2999, %v3001, %v2997
        %v3003 = vmul.f32 1.0, %v3002
        %v3004 = vrcp.pop %v1616
        %v3005 = vmul.f32 %v1616, %v3004
        %v3006 = vsub.f32 1.0, %v3005
        %v3007 = vmul.f32 %v3004, %v3006
        %v3008 = vadd.f32 %v3004, %v3007
        %vm3009 = vweird.f32 %v1616
        %vm3010 = vweird.f32 %v3004
        %vm3011 = vmor %vm3009, %vm3010
        %v3012 = vsel %vm3011, %v3004, %v3008
        %v3013 = vand.u32 2147483647, %v1616
        %vm3014 = vcmp.eq.f32.partialorder %v3013, 8.507059e+37
        %v3015 = vand.u32 %v1616, 2147483648
        %v3016 = vor.u32 1.1754944e-38, %v3015
        %v3017 = vsel %vm3014, %v3016, %v3012
        %v3018 = vmul.f32 1.0, %v3017
        %v3019 = vrcp.pop %v1617
        %v3020 = vmul.f32 %v1617, %v3019
        %v3021 = vsub.f32 1.0, %v3020
        %v3022 = vmul.f32 %v3019, %v3021
        %v3023 = vadd.f32 %v3019, %v3022
        %vm3024 = vweird.f32 %v1617
        %vm3025 = vweird.f32 %v3019
        %vm3026 = vmor %vm3024, %vm3025
        %v3027 = vsel %vm3026, %v3019, %v3023
        %v3028 = vand.u32 2147483647, %v1617
        %vm3029 = vcmp.eq.f32.partialorder %v3028, 8.507059e+37
        %v3030 = vand.u32 %v1617, 2147483648
        %v3031 = vor.u32 1.1754944e-38, %v3030
        %v3032 = vsel %vm3029, %v3031, %v3027
        %v3033 = vmul.f32 1.0, %v3032
        %v3034 = vrcp.pop %v1618
        %v3035 = vmul.f32 %v1618, %v3034
        %v3036 = vsub.f32 1.0, %v3035
        %v3037 = vmul.f32 %v3034, %v3036
        %v3038 = vadd.f32 %v3034, %v3037
        %vm3039 = vweird.f32 %v1618
        %vm3040 = vweird.f32 %v3034
        %vm3041 = vmor %vm3039, %vm3040
        %v3042 = vsel %vm3041, %v3034, %v3038
        %v3043 = vand.u32 2147483647, %v1618
        %vm3044 = vcmp.eq.f32.partialorder %v3043, 8.507059e+37
        %v3045 = vand.u32 %v1618, 2147483648
        %v3046 = vor.u32 1.1754944e-38, %v3045
        %v3047 = vsel %vm3044, %v3046, %v3042
        %v3048 = vmul.f32 1.0, %v3047
        %v3049 = vrcp.pop %v1619
        %v3050 = vmul.f32 %v1619, %v3049
        %v3051 = vsub.f32 1.0, %v3050
        %v3052 = vmul.f32 %v3049, %v3051
        %v3053 = vadd.f32 %v3049, %v3052
        %vm3054 = vweird.f32 %v1619
        %vm3055 = vweird.f32 %v3049
        %vm3056 = vmor %vm3054, %vm3055
        %v3057 = vsel %vm3056, %v3049, %v3053
        %v3058 = vand.u32 2147483647, %v1619
        %vm3059 = vcmp.eq.f32.partialorder %v3058, 8.507059e+37
        %v3060 = vand.u32 %v1619, 2147483648
        %v3061 = vor.u32 1.1754944e-38, %v3060
        %v3062 = vsel %vm3059, %v3061, %v3057
        %v3063 = vmul.f32 1.0, %v3062
        %v3064 = vrcp.pop %v1620
        %v3065 = vmul.f32 %v1620, %v3064
        %v3066 = vsub.f32 1.0, %v3065
        %v3067 = vmul.f32 %v3064, %v3066
        %v3068 = vadd.f32 %v3064, %v3067
        %vm3069 = vweird.f32 %v1620
        %vm3070 = vweird.f32 %v3064
        %vm3071 = vmor %vm3069, %vm3070
        %v3072 = vsel %vm3071, %v3064, %v3068
        %v3073 = vand.u32 2147483647, %v1620
        %vm3074 = vcmp.eq.f32.partialorder %v3073, 8.507059e+37
        %v3075 = vand.u32 %v1620, 2147483648
        %v3076 = vor.u32 1.1754944e-38, %v3075
        %v3077 = vsel %vm3074, %v3076, %v3072
        %v3078 = vmul.f32 1.0, %v3077
        %v3079 = vrcp.pop %v1621
        %v3080 = vmul.f32 %v1621, %v3079
        %v3081 = vsub.f32 1.0, %v3080
        %v3082 = vmul.f32 %v3079, %v3081
        %v3083 = vadd.f32 %v3079, %v3082
        %vm3084 = vweird.f32 %v1621
        %vm3085 = vweird.f32 %v3079
        %vm3086 = vmor %vm3084, %vm3085
        %v3087 = vsel %vm3086, %v3079, %v3083
        %v3088 = vand.u32 2147483647, %v1621
        %vm3089 = vcmp.eq.f32.partialorder %v3088, 8.507059e+37
        %v3090 = vand.u32 %v1621, 2147483648
        %v3091 = vor.u32 1.1754944e-38, %v3090
        %v3092 = vsel %vm3089, %v3091, %v3087
        %v3093 = vmul.f32 1.0, %v3092
        %v3094 = vrcp.pop %v1622
        %v3095 = vmul.f32 %v1622, %v3094
        %v3096 = vsub.f32 1.0, %v3095
        %v3097 = vmul.f32 %v3094, %v3096
        %v3098 = vadd.f32 %v3094, %v3097
        %vm3099 = vweird.f32 %v1622
        %vm3100 = vweird.f32 %v3094
        %vm3101 = vmor %vm3099, %vm3100
        %v3102 = vsel %vm3101, %v3094, %v3098
        %v3103 = vand.u32 2147483647, %v1622
        %vm3104 = vcmp.eq.f32.partialorder %v3103, 8.507059e+37
        %v3105 = vand.u32 %v1622, 2147483648
        %v3106 = vor.u32 1.1754944e-38, %v3105
        %v3107 = vsel %vm3104, %v3106, %v3102
        %v3108 = vmul.f32 1.0, %v3107
        %v3109 = vrcp.pop %v1623
        %v3110 = vmul.f32 %v1623, %v3109
        %v3111 = vsub.f32 1.0, %v3110
        %v3112 = vmul.f32 %v3109, %v3111
        %v3113 = vadd.f32 %v3109, %v3112
        %vm3114 = vweird.f32 %v1623
        %vm3115 = vweird.f32 %v3109
        %vm3116 = vmor %vm3114, %vm3115
        %v3117 = vsel %vm3116, %v3109, %v3113
        %v3118 = vand.u32 2147483647, %v1623
        %vm3119 = vcmp.eq.f32.partialorder %v3118, 8.507059e+37
        %v3120 = vand.u32 %v1623, 2147483648
        %v3121 = vor.u32 1.1754944e-38, %v3120
        %v3122 = vsel %vm3119, %v3121, %v3117
        %v3123 = vmul.f32 1.0, %v3122
        %v3124 = vrcp.pop %v1624
        %v3125 = vmul.f32 %v1624, %v3124
        %v3126 = vsub.f32 1.0, %v3125
        %v3127 = vmul.f32 %v3124, %v3126
        %v3128 = vadd.f32 %v3124, %v3127
        %vm3129 = vweird.f32 %v1624
        %vm3130 = vweird.f32 %v3124
        %vm3131 = vmor %vm3129, %vm3130
        %v3132 = vsel %vm3131, %v3124, %v3128
        %v3133 = vand.u32 2147483647, %v1624
        %vm3134 = vcmp.eq.f32.partialorder %v3133, 8.507059e+37
        %v3135 = vand.u32 %v1624, 2147483648
        %v3136 = vor.u32 1.1754944e-38, %v3135
        %v3137 = vsel %vm3134, %v3136, %v3132
        %v3138 = vmul.f32 1.0, %v3137
        %v3139 = vrcp.pop %v1625
        %v3140 = vmul.f32 %v1625, %v3139
        %v3141 = vsub.f32 1.0, %v3140
        %v3142 = vmul.f32 %v3139, %v3141
        %v3143 = vadd.f32 %v3139, %v3142
        %vm3144 = vweird.f32 %v1625
        %vm3145 = vweird.f32 %v3139
        %vm3146 = vmor %vm3144, %vm3145
        %v3147 = vsel %vm3146, %v3139, %v3143
        %v3148 = vand.u32 2147483647, %v1625
        %vm3149 = vcmp.eq.f32.partialorder %v3148, 8.507059e+37
        %v3150 = vand.u32 %v1625, 2147483648
        %v3151 = vor.u32 1.1754944e-38, %v3150
        %v3152 = vsel %vm3149, %v3151, %v3147
        %v3153 = vmul.f32 1.0, %v3152
        %v3154 = vrcp.pop %v1626
        %v3155 = vmul.f32 %v1626, %v3154
        %v3156 = vsub.f32 1.0, %v3155
        %v3157 = vmul.f32 %v3154, %v3156
        %v3158 = vadd.f32 %v3154, %v3157
        %vm3159 = vweird.f32 %v1626
        %vm3160 = vweird.f32 %v3154
        %vm3161 = vmor %vm3159, %vm3160
        %v3162 = vsel %vm3161, %v3154, %v3158
        %v3163 = vand.u32 2147483647, %v1626
        %vm3164 = vcmp.eq.f32.partialorder %v3163, 8.507059e+37
        %v3165 = vand.u32 %v1626, 2147483648
        %v3166 = vor.u32 1.1754944e-38, %v3165
        %v3167 = vsel %vm3164, %v3166, %v3162
        %v3168 = vmul.f32 1.0, %v3167
        %v3169 = vrcp.pop %v1627
        %v3170 = vmul.f32 %v1627, %v3169
        %v3171 = vsub.f32 1.0, %v3170
        %v3172 = vmul.f32 %v3169, %v3171
        %v3173 = vadd.f32 %v3169, %v3172
        %vm3174 = vweird.f32 %v1627
        %vm3175 = vweird.f32 %v3169
        %vm3176 = vmor %vm3174, %vm3175
        %v3177 = vsel %vm3176, %v3169, %v3173
        %v3178 = vand.u32 2147483647, %v1627
        %vm3179 = vcmp.eq.f32.partialorder %v3178, 8.507059e+37
        %v3180 = vand.u32 %v1627, 2147483648
        %v3181 = vor.u32 1.1754944e-38, %v3180
        %v3182 = vsel %vm3179, %v3181, %v3177
        %v3183 = vmul.f32 1.0, %v3182
        %v3184 = vrcp.pop %v1628
        %v3185 = vmul.f32 %v1628, %v3184
        %v3186 = vsub.f32 1.0, %v3185
        %v3187 = vmul.f32 %v3184, %v3186
        %v3188 = vadd.f32 %v3184, %v3187
        %vm3189 = vweird.f32 %v1628
        %vm3190 = vweird.f32 %v3184
        %vm3191 = vmor %vm3189, %vm3190
        %v3192 = vsel %vm3191, %v3184, %v3188
        %v3193 = vand.u32 2147483647, %v1628
        %vm3194 = vcmp.eq.f32.partialorder %v3193, 8.507059e+37
        %v3195 = vand.u32 %v1628, 2147483648
        %v3196 = vor.u32 1.1754944e-38, %v3195
        %v3197 = vsel %vm3194, %v3196, %v3192
        %v3198 = vmul.f32 1.0, %v3197
        %v3199 = vrcp.pop %v1629
        %v3200 = vmul.f32 %v1629, %v3199
        %v3201 = vsub.f32 1.0, %v3200
        %v3202 = vmul.f32 %v3199, %v3201
        %v3203 = vadd.f32 %v3199, %v3202
        %vm3204 = vweird.f32 %v1629
        %vm3205 = vweird.f32 %v3199
        %vm3206 = vmor %vm3204, %vm3205
        %v3207 = vsel %vm3206, %v3199, %v3203
        %v3208 = vand.u32 2147483647, %v1629
        %vm3209 = vcmp.eq.f32.partialorder %v3208, 8.507059e+37
        %v3210 = vand.u32 %v1629, 2147483648
        %v3211 = vor.u32 1.1754944e-38, %v3210
        %v3212 = vsel %vm3209, %v3211, %v3207
        %v3213 = vmul.f32 1.0, %v3212
        %v3214 = vrcp.pop %v1630
        %v3215 = vmul.f32 %v1630, %v3214
        %v3216 = vsub.f32 1.0, %v3215
        %v3217 = vmul.f32 %v3214, %v3216
        %v3218 = vadd.f32 %v3214, %v3217
        %vm3219 = vweird.f32 %v1630
        %vm3220 = vweird.f32 %v3214
        %vm3221 = vmor %vm3219, %vm3220
        %v3222 = vsel %vm3221, %v3214, %v3218
        %v3223 = vand.u32 2147483647, %v1630
        %vm3224 = vcmp.eq.f32.partialorder %v3223, 8.507059e+37
        %v3225 = vand.u32 %v1630, 2147483648
        %v3226 = vor.u32 1.1754944e-38, %v3225
        %v3227 = vsel %vm3224, %v3226, %v3222
        %v3228 = vmul.f32 1.0, %v3227
        %v3229 = vrcp.pop %v1631
        %v3230 = vmul.f32 %v1631, %v3229
        %v3231 = vsub.f32 1.0, %v3230
        %v3232 = vmul.f32 %v3229, %v3231
        %v3233 = vadd.f32 %v3229, %v3232
        %vm3234 = vweird.f32 %v1631
        %vm3235 = vweird.f32 %v3229
        %vm3236 = vmor %vm3234, %vm3235
        %v3237 = vsel %vm3236, %v3229, %v3233
        %v3238 = vand.u32 2147483647, %v1631
        %vm3239 = vcmp.eq.f32.partialorder %v3238, 8.507059e+37
        %v3240 = vand.u32 %v1631, 2147483648
        %v3241 = vor.u32 1.1754944e-38, %v3240
        %v3242 = vsel %vm3239, %v3241, %v3237
        %v3243 = vmul.f32 1.0, %v3242
        %v3244 = vrcp.pop %v1632
        %v3245 = vmul.f32 %v1632, %v3244
        %v3246 = vsub.f32 1.0, %v3245
        %v3247 = vmul.f32 %v3244, %v3246
        %v3248 = vadd.f32 %v3244, %v3247
        %vm3249 = vweird.f32 %v1632
        %vm3250 = vweird.f32 %v3244
        %vm3251 = vmor %vm3249, %vm3250
        %v3252 = vsel %vm3251, %v3244, %v3248
        %v3253 = vand.u32 2147483647, %v1632
        %vm3254 = vcmp.eq.f32.partialorder %v3253, 8.507059e+37
        %v3255 = vand.u32 %v1632, 2147483648
        %v3256 = vor.u32 1.1754944e-38, %v3255
        %v3257 = vsel %vm3254, %v3256, %v3252
        %v3258 = vmul.f32 1.0, %v3257
        %v3259 = vrcp.pop %v1633
        %v3260 = vmul.f32 %v1633, %v3259
        %v3261 = vsub.f32 1.0, %v3260
        %v3262 = vmul.f32 %v3259, %v3261
        %v3263 = vadd.f32 %v3259, %v3262
        %vm3264 = vweird.f32 %v1633
        %vm3265 = vweird.f32 %v3259
        %vm3266 = vmor %vm3264, %vm3265
        %v3267 = vsel %vm3266, %v3259, %v3263
        %v3268 = vand.u32 2147483647, %v1633
        %vm3269 = vcmp.eq.f32.partialorder %v3268, 8.507059e+37
        %v3270 = vand.u32 %v1633, 2147483648
        %v3271 = vor.u32 1.1754944e-38, %v3270
        %v3272 = vsel %vm3269, %v3271, %v3267
        %v3273 = vmul.f32 1.0, %v3272
        %v3274 = vrcp.pop %v1634
        %v3275 = vmul.f32 %v1634, %v3274
        %v3276 = vsub.f32 1.0, %v3275
        %v3277 = vmul.f32 %v3274, %v3276
        %v3278 = vadd.f32 %v3274, %v3277
        %vm3279 = vweird.f32 %v1634
        %vm3280 = vweird.f32 %v3274
        %vm3281 = vmor %vm3279, %vm3280
        %v3282 = vsel %vm3281, %v3274, %v3278
        %v3283 = vand.u32 2147483647, %v1634
        %vm3284 = vcmp.eq.f32.partialorder %v3283, 8.507059e+37
        %v3285 = vand.u32 %v1634, 2147483648
        %v3286 = vor.u32 1.1754944e-38, %v3285
        %v3287 = vsel %vm3284, %v3286, %v3282
        %v3288 = vmul.f32 1.0, %v3287
        %v3289 = vrcp.pop %v1635
        %v3290 = vmul.f32 %v1635, %v3289
        %v3291 = vsub.f32 1.0, %v3290
        %v3292 = vmul.f32 %v3289, %v3291
        %v3293 = vadd.f32 %v3289, %v3292
        %vm3294 = vweird.f32 %v1635
        %vm3295 = vweird.f32 %v3289
        %vm3296 = vmor %vm3294, %vm3295
        %v3297 = vsel %vm3296, %v3289, %v3293
        %v3298 = vand.u32 2147483647, %v1635
        %vm3299 = vcmp.eq.f32.partialorder %v3298, 8.507059e+37
        %v3300 = vand.u32 %v1635, 2147483648
        %v3301 = vor.u32 1.1754944e-38, %v3300
        %v3302 = vsel %vm3299, %v3301, %v3297
        %v3303 = vmul.f32 1.0, %v3302
        %v3304 = vrcp.pop %v1636
        %v3305 = vmul.f32 %v1636, %v3304
        %v3306 = vsub.f32 1.0, %v3305
        %v3307 = vmul.f32 %v3304, %v3306
        %v3308 = vadd.f32 %v3304, %v3307
        %vm3309 = vweird.f32 %v1636
        %vm3310 = vweird.f32 %v3304
        %vm3311 = vmor %vm3309, %vm3310
        %v3312 = vsel %vm3311, %v3304, %v3308
        %v3313 = vand.u32 2147483647, %v1636
        %vm3314 = vcmp.eq.f32.partialorder %v3313, 8.507059e+37
        %v3315 = vand.u32 %v1636, 2147483648
        %v3316 = vor.u32 1.1754944e-38, %v3315
        %v3317 = vsel %vm3314, %v3316, %v3312
        %v3318 = vmul.f32 1.0, %v3317
        %v3319 = vrcp.pop %v1637
        %v3320 = vmul.f32 %v1637, %v3319
        %v3321 = vsub.f32 1.0, %v3320
        %v3322 = vmul.f32 %v3319, %v3321
        %v3323 = vadd.f32 %v3319, %v3322
        %vm3324 = vweird.f32 %v1637
        %vm3325 = vweird.f32 %v3319
        %vm3326 = vmor %vm3324, %vm3325
        %v3327 = vsel %vm3326, %v3319, %v3323
        %v3328 = vand.u32 2147483647, %v1637
        %vm3329 = vcmp.eq.f32.partialorder %v3328, 8.507059e+37
        %v3330 = vand.u32 %v1637, 2147483648
        %v3331 = vor.u32 1.1754944e-38, %v3330
        %v3332 = vsel %vm3329, %v3331, %v3327
        %v3333 = vmul.f32 1.0, %v3332
        %v3334 = vrcp.pop %v1638
        %v3335 = vmul.f32 %v1638, %v3334
        %v3336 = vsub.f32 1.0, %v3335
        %v3337 = vmul.f32 %v3334, %v3336
        %v3338 = vadd.f32 %v3334, %v3337
        %vm3339 = vweird.f32 %v1638
        %vm3340 = vweird.f32 %v3334
        %vm3341 = vmor %vm3339, %vm3340
        %v3342 = vsel %vm3341, %v3334, %v3338
        %v3343 = vand.u32 2147483647, %v1638
        %vm3344 = vcmp.eq.f32.partialorder %v3343, 8.507059e+37
        %v3345 = vand.u32 %v1638, 2147483648
        %v3346 = vor.u32 1.1754944e-38, %v3345
        %v3347 = vsel %vm3344, %v3346, %v3342
        %v3348 = vmul.f32 1.0, %v3347
        %v3349 = vrcp.pop %v1639
        %v3350 = vmul.f32 %v1639, %v3349
        %v3351 = vsub.f32 1.0, %v3350
        %v3352 = vmul.f32 %v3349, %v3351
        %v3353 = vadd.f32 %v3349, %v3352
        %vm3354 = vweird.f32 %v1639
        %vm3355 = vweird.f32 %v3349
        %vm3356 = vmor %vm3354, %vm3355
        %v3357 = vsel %vm3356, %v3349, %v3353
        %v3358 = vand.u32 2147483647, %v1639
        %vm3359 = vcmp.eq.f32.partialorder %v3358, 8.507059e+37
        %v3360 = vand.u32 %v1639, 2147483648
        %v3361 = vor.u32 1.1754944e-38, %v3360
        %v3362 = vsel %vm3359, %v3361, %v3357
        %v3363 = vmul.f32 1.0, %v3362
        %v3364 = vrcp.pop %v1640
        %v3365 = vmul.f32 %v1640, %v3364
        %v3366 = vsub.f32 1.0, %v3365
        %v3367 = vmul.f32 %v3364, %v3366
        %v3368 = vadd.f32 %v3364, %v3367
        %vm3369 = vweird.f32 %v1640
        %vm3370 = vweird.f32 %v3364
        %vm3371 = vmor %vm3369, %vm3370
        %v3372 = vsel %vm3371, %v3364, %v3368
        %v3373 = vand.u32 2147483647, %v1640
        %vm3374 = vcmp.eq.f32.partialorder %v3373, 8.507059e+37
        %v3375 = vand.u32 %v1640, 2147483648
        %v3376 = vor.u32 1.1754944e-38, %v3375
        %v3377 = vsel %vm3374, %v3376, %v3372
        %v3378 = vmul.f32 1.0, %v3377
        %v3379 = vrcp.pop %v1641
        %v3380 = vmul.f32 %v1641, %v3379
        %v3381 = vsub.f32 1.0, %v3380
        %v3382 = vmul.f32 %v3379, %v3381
        %v3383 = vadd.f32 %v3379, %v3382
        %vm3384 = vweird.f32 %v1641
        %vm3385 = vweird.f32 %v3379
        %vm3386 = vmor %vm3384, %vm3385
        %v3387 = vsel %vm3386, %v3379, %v3383
        %v3388 = vand.u32 2147483647, %v1641
        %vm3389 = vcmp.eq.f32.partialorder %v3388, 8.507059e+37
        %v3390 = vand.u32 %v1641, 2147483648
        %v3391 = vor.u32 1.1754944e-38, %v3390
        %v3392 = vsel %vm3389, %v3391, %v3387
        %v3393 = vmul.f32 1.0, %v3392
        %v3394 = vrcp.pop %v1642
        %v3395 = vmul.f32 %v1642, %v3394
        %v3396 = vsub.f32 1.0, %v3395
        %v3397 = vmul.f32 %v3394, %v3396
        %v3398 = vadd.f32 %v3394, %v3397
        %vm3399 = vweird.f32 %v1642
        %vm3400 = vweird.f32 %v3394
        %vm3401 = vmor %vm3399, %vm3400
        %v3402 = vsel %vm3401, %v3394, %v3398
        %v3403 = vand.u32 2147483647, %v1642
        %vm3404 = vcmp.eq.f32.partialorder %v3403, 8.507059e+37
        %v3405 = vand.u32 %v1642, 2147483648
        %v3406 = vor.u32 1.1754944e-38, %v3405
        %v3407 = vsel %vm3404, %v3406, %v3402
        %v3408 = vmul.f32 1.0, %v3407
        %v3409 = vrcp.pop %v1643
        %v3410 = vmul.f32 %v1643, %v3409
        %v3411 = vsub.f32 1.0, %v3410
        %v3412 = vmul.f32 %v3409, %v3411
        %v3413 = vadd.f32 %v3409, %v3412
        %vm3414 = vweird.f32 %v1643
        %vm3415 = vweird.f32 %v3409
        %vm3416 = vmor %vm3414, %vm3415
        %v3417 = vsel %vm3416, %v3409, %v3413
        %v3418 = vand.u32 2147483647, %v1643
        %vm3419 = vcmp.eq.f32.partialorder %v3418, 8.507059e+37
        %v3420 = vand.u32 %v1643, 2147483648
        %v3421 = vor.u32 1.1754944e-38, %v3420
        %v3422 = vsel %vm3419, %v3421, %v3417
        %v3423 = vmul.f32 1.0, %v3422
        %v3424 = vrcp.pop %v1644
        %v3425 = vmul.f32 %v1644, %v3424
        %v3426 = vsub.f32 1.0, %v3425
        %v3427 = vmul.f32 %v3424, %v3426
        %v3428 = vadd.f32 %v3424, %v3427
        %vm3429 = vweird.f32 %v1644
        %vm3430 = vweird.f32 %v3424
        %vm3431 = vmor %vm3429, %vm3430
        %v3432 = vsel %vm3431, %v3424, %v3428
        %v3433 = vand.u32 2147483647, %v1644
        %vm3434 = vcmp.eq.f32.partialorder %v3433, 8.507059e+37
        %v3435 = vand.u32 %v1644, 2147483648
        %v3436 = vor.u32 1.1754944e-38, %v3435
        %v3437 = vsel %vm3434, %v3436, %v3432
        %v3438 = vmul.f32 1.0, %v3437
        %v3439 = vrcp.pop %v1645
        %v3440 = vmul.f32 %v1645, %v3439
        %v3441 = vsub.f32 1.0, %v3440
        %v3442 = vmul.f32 %v3439, %v3441
        %v3443 = vadd.f32 %v3439, %v3442
        %vm3444 = vweird.f32 %v1645
        %vm3445 = vweird.f32 %v3439
        %vm3446 = vmor %vm3444, %vm3445
        %v3447 = vsel %vm3446, %v3439, %v3443
        %v3448 = vand.u32 2147483647, %v1645
        %vm3449 = vcmp.eq.f32.partialorder %v3448, 8.507059e+37
        %v3450 = vand.u32 %v1645, 2147483648
        %v3451 = vor.u32 1.1754944e-38, %v3450
        %v3452 = vsel %vm3449, %v3451, %v3447
        %v3453 = vmul.f32 1.0, %v3452
        %v3454 = vrcp.pop %v1646
        %v3455 = vmul.f32 %v1646, %v3454
        %v3456 = vsub.f32 1.0, %v3455
        %v3457 = vmul.f32 %v3454, %v3456
        %v3458 = vadd.f32 %v3454, %v3457
        %vm3459 = vweird.f32 %v1646
        %vm3460 = vweird.f32 %v3454
        %vm3461 = vmor %vm3459, %vm3460
        %v3462 = vsel %vm3461, %v3454, %v3458
        %v3463 = vand.u32 2147483647, %v1646
        %vm3464 = vcmp.eq.f32.partialorder %v3463, 8.507059e+37
        %v3465 = vand.u32 %v1646, 2147483648
        %v3466 = vor.u32 1.1754944e-38, %v3465
        %v3467 = vsel %vm3464, %v3466, %v3462
        %v3468 = vmul.f32 1.0, %v3467
        %v3469 = vrcp.pop %v1647
        %v3470 = vmul.f32 %v1647, %v3469
        %v3471 = vsub.f32 1.0, %v3470
        %v3472 = vmul.f32 %v3469, %v3471
        %v3473 = vadd.f32 %v3469, %v3472
        %vm3474 = vweird.f32 %v1647
        %vm3475 = vweird.f32 %v3469
        %vm3476 = vmor %vm3474, %vm3475
        %v3477 = vsel %vm3476, %v3469, %v3473
        %v3478 = vand.u32 2147483647, %v1647
        %vm3479 = vcmp.eq.f32.partialorder %v3478, 8.507059e+37
        %v3480 = vand.u32 %v1647, 2147483648
        %v3481 = vor.u32 1.1754944e-38, %v3480
        %v3482 = vsel %vm3479, %v3481, %v3477
        %v3483 = vmul.f32 1.0, %v3482
        %v3484 = vrcp.pop %v1648
        %v3485 = vmul.f32 %v1648, %v3484
        %v3486 = vsub.f32 1.0, %v3485
        %v3487 = vmul.f32 %v3484, %v3486
        %v3488 = vadd.f32 %v3484, %v3487
        %vm3489 = vweird.f32 %v1648
        %vm3490 = vweird.f32 %v3484
        %vm3491 = vmor %vm3489, %vm3490
        %v3492 = vsel %vm3491, %v3484, %v3488
        %v3493 = vand.u32 2147483647, %v1648
        %vm3494 = vcmp.eq.f32.partialorder %v3493, 8.507059e+37
        %v3495 = vand.u32 %v1648, 2147483648
        %v3496 = vor.u32 1.1754944e-38, %v3495
        %v3497 = vsel %vm3494, %v3496, %v3492
        %v3498 = vmul.f32 1.0, %v3497
        %v3499 = vrcp.pop %v1649
        %v3500 = vmul.f32 %v1649, %v3499
        %v3501 = vsub.f32 1.0, %v3500
        %v3502 = vmul.f32 %v3499, %v3501
        %v3503 = vadd.f32 %v3499, %v3502
        %vm3504 = vweird.f32 %v1649
        %vm3505 = vweird.f32 %v3499
        %vm3506 = vmor %vm3504, %vm3505
        %v3507 = vsel %vm3506, %v3499, %v3503
        %v3508 = vand.u32 2147483647, %v1649
        %vm3509 = vcmp.eq.f32.partialorder %v3508, 8.507059e+37
        %v3510 = vand.u32 %v1649, 2147483648
        %v3511 = vor.u32 1.1754944e-38, %v3510
        %v3512 = vsel %vm3509, %v3511, %v3507
        %v3513 = vmul.f32 1.0, %v3512
        %v3514 = vrcp.pop %v1650
        %v3515 = vmul.f32 %v1650, %v3514
        %v3516 = vsub.f32 1.0, %v3515
        %v3517 = vmul.f32 %v3514, %v3516
        %v3518 = vadd.f32 %v3514, %v3517
        %vm3519 = vweird.f32 %v1650
        %vm3520 = vweird.f32 %v3514
        %vm3521 = vmor %vm3519, %vm3520
        %v3522 = vsel %vm3521, %v3514, %v3518
        %v3523 = vand.u32 2147483647, %v1650
        %vm3524 = vcmp.eq.f32.partialorder %v3523, 8.507059e+37
        %v3525 = vand.u32 %v1650, 2147483648
        %v3526 = vor.u32 1.1754944e-38, %v3525
        %v3527 = vsel %vm3524, %v3526, %v3522
        %v3528 = vmul.f32 1.0, %v3527
        %v3529 = vrcp.pop %v1651
        %v3530 = vmul.f32 %v1651, %v3529
        %v3531 = vsub.f32 1.0, %v3530
        %v3532 = vmul.f32 %v3529, %v3531
        %v3533 = vadd.f32 %v3529, %v3532
        %vm3534 = vweird.f32 %v1651
        %vm3535 = vweird.f32 %v3529
        %vm3536 = vmor %vm3534, %vm3535
        %v3537 = vsel %vm3536, %v3529, %v3533
        %v3538 = vand.u32 2147483647, %v1651
        %vm3539 = vcmp.eq.f32.partialorder %v3538, 8.507059e+37
        %v3540 = vand.u32 %v1651, 2147483648
        %v3541 = vor.u32 1.1754944e-38, %v3540
        %v3542 = vsel %vm3539, %v3541, %v3537
        %v3543 = vmul.f32 1.0, %v3542
        %v3544 = vrcp.pop %v1652
        %v3545 = vmul.f32 %v1652, %v3544
        %v3546 = vsub.f32 1.0, %v3545
        %v3547 = vmul.f32 %v3544, %v3546
        %v3548 = vadd.f32 %v3544, %v3547
        %vm3549 = vweird.f32 %v1652
        %vm3550 = vweird.f32 %v3544
        %vm3551 = vmor %vm3549, %vm3550
        %v3552 = vsel %vm3551, %v3544, %v3548
        %v3553 = vand.u32 2147483647, %v1652
        %vm3554 = vcmp.eq.f32.partialorder %v3553, 8.507059e+37
        %v3555 = vand.u32 %v1652, 2147483648
        %v3556 = vor.u32 1.1754944e-38, %v3555
        %v3557 = vsel %vm3554, %v3556, %v3552
        %v3558 = vmul.f32 1.0, %v3557
        %v3559 = vrcp.pop %v1653
        %v3560 = vmul.f32 %v1653, %v3559
        %v3561 = vsub.f32 1.0, %v3560
        %v3562 = vmul.f32 %v3559, %v3561
        %v3563 = vadd.f32 %v3559, %v3562
        %vm3564 = vweird.f32 %v1653
        %vm3565 = vweird.f32 %v3559
        %vm3566 = vmor %vm3564, %vm3565
        %v3567 = vsel %vm3566, %v3559, %v3563
        %v3568 = vand.u32 2147483647, %v1653
        %vm3569 = vcmp.eq.f32.partialorder %v3568, 8.507059e+37
        %v3570 = vand.u32 %v1653, 2147483648
        %v3571 = vor.u32 1.1754944e-38, %v3570
        %v3572 = vsel %vm3569, %v3571, %v3567
        %v3573 = vmul.f32 1.0, %v3572
        %v3574 = vld [vmem:[%s398] sm:$0xff]
        %v3575 = vld [vmem:[%s398 + $0x8] sm:$0xff]
        %v3576 = vld [vmem:[%s398 + $0x10] sm:$0xff]
        %v3577 = vld [vmem:[%s398 + $0x18] sm:$0xff]
        %v3578 = vld [vmem:[%s398 + $0x20] sm:$0xff]
        %v3579 = vld [vmem:[%s398 + $0x28] sm:$0xff]
        %v3580 = vld [vmem:[%s398 + $0x30] sm:$0xff]
        %v3581 = vld [vmem:[%s398 + $0x38] sm:$0xff]
        %v3582 = vld [vmem:[%s398 + $0x40] sm:$0xff]
        %v3583 = vld [vmem:[%s398 + $0x48] sm:$0xff]
        %v3584 = vld [vmem:[%s398 + $0x50] sm:$0xff]
        %v3585 = vld [vmem:[%s398 + $0x58] sm:$0xff]
        %v3586 = vld [vmem:[%s398 + $0x60] sm:$0xff]
        %v3587 = vld [vmem:[%s398 + $0x68] sm:$0xff]
        %v3588 = vld [vmem:[%s398 + $0x70] sm:$0xff]
        %v3589 = vld [vmem:[%s398 + $0x78] sm:$0xff]
        %v3590 = vld [vmem:[%s398 + $0x80] sm:$0xff]
        %v3591 = vld [vmem:[%s398 + $0x88] sm:$0xff]
        %v3592 = vld [vmem:[%s398 + $0x90] sm:$0xff]
        %v3593 = vld [vmem:[%s398 + $0x98] sm:$0xff]
        %v3594 = vld [vmem:[%s398 + $0xa0] sm:$0xff]
        %v3595 = vld [vmem:[%s398 + $0xa8] sm:$0xff]
        %v3596 = vld [vmem:[%s398 + $0xb0] sm:$0xff]
        %v3597 = vld [vmem:[%s398 + $0xb8] sm:$0xff]
        %v3598 = vld [vmem:[%s398 + $0xc0] sm:$0xff]
        %v3599 = vld [vmem:[%s398 + $0xc8] sm:$0xff]
        %v3600 = vld [vmem:[%s398 + $0xd0] sm:$0xff]
        %v3601 = vld [vmem:[%s398 + $0xd8] sm:$0xff]
        %v3602 = vld [vmem:[%s398 + $0xe0] sm:$0xff]
        %v3603 = vld [vmem:[%s398 + $0xe8] sm:$0xff]
        %v3604 = vld [vmem:[%s398 + $0xf0] sm:$0xff]
        %v3605 = vld [vmem:[%s398 + $0xf8] sm:$0xff]
        %v3606 = vld [vmem:[%s398 + $0x100] sm:$0xff]
        %v3607 = vld [vmem:[%s398 + $0x108] sm:$0xff]
        %v3608 = vld [vmem:[%s398 + $0x110] sm:$0xff]
        %v3609 = vld [vmem:[%s398 + $0x118] sm:$0xff]
        %v3610 = vld [vmem:[%s398 + $0x120] sm:$0xff]
        %v3611 = vld [vmem:[%s398 + $0x128] sm:$0xff]
        %v3612 = vld [vmem:[%s398 + $0x130] sm:$0xff]
        %v3613 = vld [vmem:[%s398 + $0x138] sm:$0xff]
        %v3614 = vld [vmem:[%s398 + $0x140] sm:$0xff]
        %v3615 = vld [vmem:[%s398 + $0x148] sm:$0xff]
        %v3616 = vld [vmem:[%s398 + $0x150] sm:$0xff]
        %v3617 = vld [vmem:[%s398 + $0x158] sm:$0xff]
        %v3618 = vld [vmem:[%s398 + $0x160] sm:$0xff]
        %v3619 = vld [vmem:[%s398 + $0x168] sm:$0xff]
        %v3620 = vld [vmem:[%s398 + $0x170] sm:$0xff]
        %v3621 = vld [vmem:[%s398 + $0x178] sm:$0xff]
        %v3622 = vld [vmem:[%s398 + $0x180] sm:$0xff]
        %v3623 = vld [vmem:[%s398 + $0x188] sm:$0xff]
        %v3624 = vld [vmem:[%s398 + $0x190] sm:$0xff]
        %v3625 = vld [vmem:[%s398 + $0x198] sm:$0xff]
        %v3626 = vld [vmem:[%s398 + $0x1a0] sm:$0xff]
        %v3627 = vld [vmem:[%s398 + $0x1a8] sm:$0xff]
        %v3628 = vld [vmem:[%s398 + $0x1b0] sm:$0xff]
        %v3629 = vld [vmem:[%s398 + $0x1b8] sm:$0xff]
        %v3630 = vld [vmem:[%s398 + $0x1c0] sm:$0xff]
        %v3631 = vld [vmem:[%s398 + $0x1c8] sm:$0xff]
        %v3632 = vld [vmem:[%s398 + $0x1d0] sm:$0xff]
        %v3633 = vld [vmem:[%s398 + $0x1d8] sm:$0xff]
        %v3634 = vld [vmem:[%s398 + $0x1e0] sm:$0xff]
        %v3635 = vld [vmem:[%s398 + $0x1e8] sm:$0xff]
        %v3636 = vld [vmem:[%s398 + $0x1f0] sm:$0xff]
        %v3637 = vld [vmem:[%s398 + $0x1f8] sm:$0xff]
        %v3638 = vld [vmem:[%s398 + $0x200] sm:$0xff]
        %v3639 = vld [vmem:[%s398 + $0x208] sm:$0xff]
        %v3640 = vld [vmem:[%s398 + $0x210] sm:$0xff]
        %v3641 = vld [vmem:[%s398 + $0x218] sm:$0xff]
        %v3642 = vld [vmem:[%s398 + $0x220] sm:$0xff]
        %v3643 = vld [vmem:[%s398 + $0x228] sm:$0xff]
        %v3644 = vld [vmem:[%s398 + $0x230] sm:$0xff]
        %v3645 = vld [vmem:[%s398 + $0x238] sm:$0xff]
        %v3646 = vld [vmem:[%s398 + $0x240] sm:$0xff]
        %v3647 = vld [vmem:[%s398 + $0x248] sm:$0xff]
        %v3648 = vld [vmem:[%s398 + $0x250] sm:$0xff]
        %v3649 = vld [vmem:[%s398 + $0x258] sm:$0xff]
        %v3650 = vld [vmem:[%s398 + $0x260] sm:$0xff]
        %v3651 = vld [vmem:[%s398 + $0x268] sm:$0xff]
        %v3652 = vld [vmem:[%s398 + $0x270] sm:$0xff]
        %v3653 = vld [vmem:[%s398 + $0x278] sm:$0xff]
        %v3654 = vld [vmem:[%s398 + $0x280] sm:$0xff]
        %v3655 = vld [vmem:[%s398 + $0x288] sm:$0xff]
        %v3656 = vld [vmem:[%s398 + $0x290] sm:$0xff]
        %v3657 = vld [vmem:[%s398 + $0x298] sm:$0xff]
        %v3658 = vld [vmem:[%s398 + $0x2a0] sm:$0xff]
        %v3659 = vld [vmem:[%s398 + $0x2a8] sm:$0xff]
        %v3660 = vld [vmem:[%s398 + $0x2b0] sm:$0xff]
        %v3661 = vld [vmem:[%s398 + $0x2b8] sm:$0xff]
        %v3662 = vld [vmem:[%s398 + $0x2c0] sm:$0xff]
        %v3663 = vld [vmem:[%s398 + $0x2c8] sm:$0xff]
        %v3664 = vld [vmem:[%s398 + $0x2d0] sm:$0xff]
        %v3665 = vld [vmem:[%s398 + $0x2d8] sm:$0xff]
        %v3666 = vld [vmem:[%s398 + $0x2e0] sm:$0xff]
        %v3667 = vld [vmem:[%s398 + $0x2e8] sm:$0xff]
        %v3668 = vld [vmem:[%s398 + $0x2f0] sm:$0xff]
        %v3669 = vld [vmem:[%s398 + $0x2f8] sm:$0xff]
        %v3670 = vld [vmem:[%s398 + $0x300] sm:$0xff]
        %v3671 = vld [vmem:[%s398 + $0x308] sm:$0xff]
        %v3672 = vld [vmem:[%s398 + $0x310] sm:$0xff]
        %v3673 = vld [vmem:[%s398 + $0x318] sm:$0xff]
        %v3674 = vld [vmem:[%s398 + $0x320] sm:$0xff]
        %v3675 = vld [vmem:[%s398 + $0x328] sm:$0xff]
        %v3676 = vld [vmem:[%s398 + $0x330] sm:$0xff]
        %v3677 = vld [vmem:[%s398 + $0x338] sm:$0xff]
        %v3678 = vld [vmem:[%s398 + $0x340] sm:$0xff]
        %v3679 = vld [vmem:[%s398 + $0x348] sm:$0xff]
        %v3680 = vld [vmem:[%s398 + $0x350] sm:$0xff]
        %v3681 = vld [vmem:[%s398 + $0x358] sm:$0xff]
        %v3682 = vld [vmem:[%s398 + $0x360] sm:$0xff]
        %v3683 = vld [vmem:[%s398 + $0x368] sm:$0xff]
        %v3684 = vld [vmem:[%s398 + $0x370] sm:$0xff]
        %v3685 = vld [vmem:[%s398 + $0x378] sm:$0xff]
        %v3686 = vld [vmem:[%s398 + $0x380] sm:$0xff]
        %v3687 = vld [vmem:[%s398 + $0x388] sm:$0xff]
        %v3688 = vld [vmem:[%s398 + $0x390] sm:$0xff]
        %v3689 = vld [vmem:[%s398 + $0x398] sm:$0xff]
        %v3690 = vld [vmem:[%s398 + $0x3a0] sm:$0xff]
        %v3691 = vld [vmem:[%s398 + $0x3a8] sm:$0xff]
        %v3692 = vld [vmem:[%s398 + $0x3b0] sm:$0xff]
        %v3693 = vld [vmem:[%s398 + $0x3b8] sm:$0xff]
        %v3694 = vld [vmem:[%s398 + $0x3c0] sm:$0xff]
        %v3695 = vld [vmem:[%s398 + $0x3c8] sm:$0xff]
        %v3696 = vld [vmem:[%s398 + $0x3d0] sm:$0xff]
        %v3697 = vld [vmem:[%s398 + $0x3d8] sm:$0xff]
        %v3698 = vld [vmem:[%s398 + $0x3e0] sm:$0xff]
        %v3699 = vld [vmem:[%s398 + $0x3e8] sm:$0xff]
        %v3700 = vld [vmem:[%s398 + $0x3f0] sm:$0xff]
        %v3701 = vld [vmem:[%s398 + $0x3f8] sm:$0xff]
        %v3702 = vmul.f32 %v3574, %v1668
        %v3703 = vmul.f32 %v3575, %v1683
        %v3704 = vmul.f32 %v3576, %v1698
        %v3705 = vmul.f32 %v3577, %v1713
        %v3706 = vmul.f32 %v3578, %v1728
        %v3707 = vmul.f32 %v3579, %v1743
        %v3708 = vmul.f32 %v3580, %v1758
        %v3709 = vmul.f32 %v3581, %v1773
        %v3710 = vmul.f32 %v3582, %v1788
        %v3711 = vmul.f32 %v3583, %v1803
        %v3712 = vmul.f32 %v3584, %v1818
        %v3713 = vmul.f32 %v3585, %v1833
        %v3714 = vmul.f32 %v3586, %v1848
        %v3715 = vmul.f32 %v3587, %v1863
        %v3716 = vmul.f32 %v3588, %v1878
        %v3717 = vmul.f32 %v3589, %v1893
        %v3718 = vmul.f32 %v3590, %v1908
        %v3719 = vmul.f32 %v3591, %v1923
        %v3720 = vmul.f32 %v3592, %v1938
        %v3721 = vmul.f32 %v3593, %v1953
        %v3722 = vmul.f32 %v3594, %v1968
        %v3723 = vmul.f32 %v3595, %v1983
        %v3724 = vmul.f32 %v3596, %v1998
        %v3725 = vmul.f32 %v3597, %v2013
        %v3726 = vmul.f32 %v3598, %v2028
        %v3727 = vmul.f32 %v3599, %v2043
        %v3728 = vmul.f32 %v3600, %v2058
        %v3729 = vmul.f32 %v3601, %v2073
        %v3730 = vmul.f32 %v3602, %v2088
        %v3731 = vmul.f32 %v3603, %v2103
        %v3732 = vmul.f32 %v3604, %v2118
        %v3733 = vmul.f32 %v3605, %v2133
        %v3734 = vmul.f32 %v3606, %v2148
        %v3735 = vmul.f32 %v3607, %v2163
        %v3736 = vmul.f32 %v3608, %v2178
        %v3737 = vmul.f32 %v3609, %v2193
        %v3738 = vmul.f32 %v3610, %v2208
        %v3739 = vmul.f32 %v3611, %v2223
        %v3740 = vmul.f32 %v3612, %v2238
        %v3741 = vmul.f32 %v3613, %v2253
        %v3742 = vmul.f32 %v3614, %v2268
        %v3743 = vmul.f32 %v3615, %v2283
        %v3744 = vmul.f32 %v3616, %v2298
        %v3745 = vmul.f32 %v3617, %v2313
        %v3746 = vmul.f32 %v3618, %v2328
        %v3747 = vmul.f32 %v3619, %v2343
        %v3748 = vmul.f32 %v3620, %v2358
        %v3749 = vmul.f32 %v3621, %v2373
        %v3750 = vmul.f32 %v3622, %v2388
        %v3751 = vmul.f32 %v3623, %v2403
        %v3752 = vmul.f32 %v3624, %v2418
        %v3753 = vmul.f32 %v3625, %v2433
        %v3754 = vmul.f32 %v3626, %v2448
        %v3755 = vmul.f32 %v3627, %v2463
        %v3756 = vmul.f32 %v3628, %v2478
        %v3757 = vmul.f32 %v3629, %v2493
        %v3758 = vmul.f32 %v3630, %v2508
        %v3759 = vmul.f32 %v3631, %v2523
        %v3760 = vmul.f32 %v3632, %v2538
        %v3761 = vmul.f32 %v3633, %v2553
        %v3762 = vmul.f32 %v3634, %v2568
        %v3763 = vmul.f32 %v3635, %v2583
        %v3764 = vmul.f32 %v3636, %v2598
        %v3765 = vmul.f32 %v3637, %v2613
        %v3766 = vmul.f32 %v3638, %v2628
        %v3767 = vmul.f32 %v3639, %v2643
        %v3768 = vmul.f32 %v3640, %v2658
        %v3769 = vmul.f32 %v3641, %v2673
        %v3770 = vmul.f32 %v3642, %v2688
        %v3771 = vmul.f32 %v3643, %v2703
        %v3772 = vmul.f32 %v3644, %v2718
        %v3773 = vmul.f32 %v3645, %v2733
        %v3774 = vmul.f32 %v3646, %v2748
        %v3775 = vmul.f32 %v3647, %v2763
        %v3776 = vmul.f32 %v3648, %v2778
        %v3777 = vmul.f32 %v3649, %v2793
        %v3778 = vmul.f32 %v3650, %v2808
        %v3779 = vmul.f32 %v3651, %v2823
        %v3780 = vmul.f32 %v3652, %v2838
        %v3781 = vmul.f32 %v3653, %v2853
        %v3782 = vmul.f32 %v3654, %v2868
        %v3783 = vmul.f32 %v3655, %v2883
        %v3784 = vmul.f32 %v3656, %v2898
        %v3785 = vmul.f32 %v3657, %v2913
        %v3786 = vmul.f32 %v3658, %v2928
        %v3787 = vmul.f32 %v3659, %v2943
        %v3788 = vmul.f32 %v3660, %v2958
        %v3789 = vmul.f32 %v3661, %v2973
        %v3790 = vmul.f32 %v3662, %v2988
        %v3791 = vmul.f32 %v3663, %v3003
        %v3792 = vmul.f32 %v3664, %v3018
        %v3793 = vmul.f32 %v3665, %v3033
        %v3794 = vmul.f32 %v3666, %v3048
        %v3795 = vmul.f32 %v3667, %v3063
        %v3796 = vmul.f32 %v3668, %v3078
        %v3797 = vmul.f32 %v3669, %v3093
        %v3798 = vmul.f32 %v3670, %v3108
        %v3799 = vmul.f32 %v3671, %v3123
        %v3800 = vmul.f32 %v3672, %v3138
        %v3801 = vmul.f32 %v3673, %v3153
        %v3802 = vmul.f32 %v3674, %v3168
        %v3803 = vmul.f32 %v3675, %v3183
        %v3804 = vmul.f32 %v3676, %v3198
        %v3805 = vmul.f32 %v3677, %v3213
        %v3806 = vmul.f32 %v3678, %v3228
        %v3807 = vmul.f32 %v3679, %v3243
        %v3808 = vmul.f32 %v3680, %v3258
        %v3809 = vmul.f32 %v3681, %v3273
        %v3810 = vmul.f32 %v3682, %v3288
        %v3811 = vmul.f32 %v3683, %v3303
        %v3812 = vmul.f32 %v3684, %v3318
        %v3813 = vmul.f32 %v3685, %v3333
        %v3814 = vmul.f32 %v3686, %v3348
        %v3815 = vmul.f32 %v3687, %v3363
        %v3816 = vmul.f32 %v3688, %v3378
        %v3817 = vmul.f32 %v3689, %v3393
        %v3818 = vmul.f32 %v3690, %v3408
        %v3819 = vmul.f32 %v3691, %v3423
        %v3820 = vmul.f32 %v3692, %v3438
        %v3821 = vmul.f32 %v3693, %v3453
        %v3822 = vmul.f32 %v3694, %v3468
        %v3823 = vmul.f32 %v3695, %v3483
        %v3824 = vmul.f32 %v3696, %v3498
        %v3825 = vmul.f32 %v3697, %v3513
        %v3826 = vmul.f32 %v3698, %v3528
        %v3827 = vmul.f32 %v3699, %v3543
        %v3828 = vmul.f32 %v3700, %v3558
        %v3829 = vmul.f32 %v3701, %v3573
        %v3830 = vld [vmem:[%s476] sm:$0xff]
        %v3831 = vld [vmem:[%s476 + $0x8] sm:$0xff]
        %v3832 = vld [vmem:[%s476 + $0x10] sm:$0xff]
        %v3833 = vld [vmem:[%s476 + $0x18] sm:$0xff]
        %v3834 = vld [vmem:[#allocation2] sm:$0xff]
        %v3835 = vld [vmem:[#allocation2 + $0x8] sm:$0xff]
        %v3836 = vld [vmem:[#allocation2 + $0x10] sm:$0xff]
        %v3837 = vld [vmem:[#allocation2 + $0x18] sm:$0xff]
        %v3838 = vld [vmem:[#allocation2 + $0x20] sm:$0xff]
        %v3839 = vld [vmem:[#allocation2 + $0x28] sm:$0xff]
        %v3840 = vld [vmem:[#allocation2 + $0x30] sm:$0xff]
        %v3841 = vld [vmem:[#allocation2 + $0x38] sm:$0xff]
        %3842 = vmatpush.msra.mxu0 %v3732
        %3843 = vmatpush.msra.mxu0 %v3730
        %3844 = vmatpush.msra.mxu0 %v3728
        %3845 = vmatpush.msra.mxu0 %v3726
        %3846 = vmatpush.msra.mxu0 %v3724
        %3847 = vmatpush.msra.mxu0 %v3722
        %3848 = vmatpush.msra.mxu0 %v3720
        %3849 = vmatpush.msra.mxu0 %v3718
        %3850 = vmatpush.msra.mxu0 %v3716
        %3851 = vmatpush.msra.mxu0 %v3714
        %3852 = vmatpush.msra.mxu0 %v3712
        %3853 = vmatpush.msra.mxu0 %v3710
        %3854 = vmatpush.msra.mxu0 %v3708
        %3855 = vmatpush.msra.mxu0 %v3706
        %3856 = vmatpush.msra.mxu0 %v3704
        %3857 = vmatpush.msra.mxu0 %v3702
        %3858 = vmatmul.f32.gmra.mxu0 %v3834
        %v3859 = vpop.f32.mrf.mxu0
        %v3860 = vadd.f32 0.0, %v3859
        %3861 = vmatmul.f32.gmra.mxu0 %v3838
        %v3862 = vpop.f32.mrf.mxu0
        %v3863 = vadd.f32 0.0, %v3862
        %3864 = vdwg.mxu0
        %3865 = vmatpush.msra.mxu0 %v3764
        %3866 = vmatpush.msra.mxu0 %v3762
        %3867 = vmatpush.msra.mxu0 %v3760
        %3868 = vmatpush.msra.mxu0 %v3758
        %3869 = vmatpush.msra.mxu0 %v3756
        %3870 = vmatpush.msra.mxu0 %v3754
        %3871 = vmatpush.msra.mxu0 %v3752
        %3872 = vmatpush.msra.mxu0 %v3750
        %3873 = vmatpush.msra.mxu0 %v3748
        %3874 = vmatpush.msra.mxu0 %v3746
        %3875 = vmatpush.msra.mxu0 %v3744
        %3876 = vmatpush.msra.mxu0 %v3742
        %3877 = vmatpush.msra.mxu0 %v3740
        %3878 = vmatpush.msra.mxu0 %v3738
        %3879 = vmatpush.msra.mxu0 %v3736
        %3880 = vmatpush.msra.mxu0 %v3734
        %3881 = vmatmul.f32.gmra.mxu0 %v3835
        %v3882 = vpop.f32.mrf.mxu0
        %v3883 = vadd.f32 %v3860, %v3882
        %3884 = vmatmul.f32.gmra.mxu0 %v3839
        %v3885 = vpop.f32.mrf.mxu0
        %v3886 = vadd.f32 %v3863, %v3885
        %3887 = vdwg.mxu0
        %3888 = vmatpush.msra.mxu0 %v3796
        %3889 = vmatpush.msra.mxu0 %v3794
        %3890 = vmatpush.msra.mxu0 %v3792
        %3891 = vmatpush.msra.mxu0 %v3790
        %3892 = vmatpush.msra.mxu0 %v3788
        %3893 = vmatpush.msra.mxu0 %v3786
        %3894 = vmatpush.msra.mxu0 %v3784
        %3895 = vmatpush.msra.mxu0 %v3782
        %3896 = vmatpush.msra.mxu0 %v3780
        %3897 = vmatpush.msra.mxu0 %v3778
        %3898 = vmatpush.msra.mxu0 %v3776
        %3899 = vmatpush.msra.mxu0 %v3774
        %3900 = vmatpush.msra.mxu0 %v3772
        %3901 = vmatpush.msra.mxu0 %v3770
        %3902 = vmatpush.msra.mxu0 %v3768
        %3903 = vmatpush.msra.mxu0 %v3766
        %3904 = vmatmul.f32.gmra.mxu0 %v3836
        %v3905 = vpop.f32.mrf.mxu0
        %v3906 = vadd.f32 %v3883, %v3905
        %3907 = vmatmul.f32.gmra.mxu0 %v3840
        %v3908 = vpop.f32.mrf.mxu0
        %v3909 = vadd.f32 %v3886, %v3908
        %3910 = vdwg.mxu0
        %3911 = vmatpush.msra.mxu0 %v3828
        %3912 = vmatpush.msra.mxu0 %v3826
        %3913 = vmatpush.msra.mxu0 %v3824
        %3914 = vmatpush.msra.mxu0 %v3822
        %3915 = vmatpush.msra.mxu0 %v3820
        %3916 = vmatpush.msra.mxu0 %v3818
        %3917 = vmatpush.msra.mxu0 %v3816
        %3918 = vmatpush.msra.mxu0 %v3814
        %3919 = vmatpush.msra.mxu0 %v3812
        %3920 = vmatpush.msra.mxu0 %v3810
        %3921 = vmatpush.msra.mxu0 %v3808
        %3922 = vmatpush.msra.mxu0 %v3806
        %3923 = vmatpush.msra.mxu0 %v3804
        %3924 = vmatpush.msra.mxu0 %v3802
        %3925 = vmatpush.msra.mxu0 %v3800
        %3926 = vmatpush.msra.mxu0 %v3798
        %3927 = vmatmul.f32.gmra.mxu0 %v3837
        %v3928 = vpop.f32.mrf.mxu0
        %v3929 = vadd.f32 %v3906, %v3928
        %3930 = vmatmul.f32.gmra.mxu0 %v3841
        %v3931 = vpop.f32.mrf.mxu0
        %v3932 = vadd.f32 %v3909, %v3931
        %3933 = vdwg.mxu0
        %3934 = vmatpush.msra.mxu0 %v3733
        %3935 = vmatpush.msra.mxu0 %v3731
        %3936 = vmatpush.msra.mxu0 %v3729
        %3937 = vmatpush.msra.mxu0 %v3727
        %3938 = vmatpush.msra.mxu0 %v3725
        %3939 = vmatpush.msra.mxu0 %v3723
        %3940 = vmatpush.msra.mxu0 %v3721
        %3941 = vmatpush.msra.mxu0 %v3719
        %3942 = vmatpush.msra.mxu0 %v3717
        %3943 = vmatpush.msra.mxu0 %v3715
        %3944 = vmatpush.msra.mxu0 %v3713
        %3945 = vmatpush.msra.mxu0 %v3711
        %3946 = vmatpush.msra.mxu0 %v3709
        %3947 = vmatpush.msra.mxu0 %v3707
        %3948 = vmatpush.msra.mxu0 %v3705
        %3949 = vmatpush.msra.mxu0 %v3703
        %3950 = vmatmul.f32.gmra.mxu0 %v3834
        %v3951 = vpop.f32.mrf.mxu0
        %v3952 = vadd.f32 0.0, %v3951
        %3953 = vmatmul.f32.gmra.mxu0 %v3838
        %v3954 = vpop.f32.mrf.mxu0
        %v3955 = vadd.f32 0.0, %v3954
        %3956 = vdwg.mxu0
        %3957 = vmatpush.msra.mxu0 %v3765
        %3958 = vmatpush.msra.mxu0 %v3763
        %3959 = vmatpush.msra.mxu0 %v3761
        %3960 = vmatpush.msra.mxu0 %v3759
        %3961 = vmatpush.msra.mxu0 %v3757
        %3962 = vmatpush.msra.mxu0 %v3755
        %3963 = vmatpush.msra.mxu0 %v3753
        %3964 = vmatpush.msra.mxu0 %v3751
        %3965 = vmatpush.msra.mxu0 %v3749
        %3966 = vmatpush.msra.mxu0 %v3747
        %3967 = vmatpush.msra.mxu0 %v3745
        %3968 = vmatpush.msra.mxu0 %v3743
        %3969 = vmatpush.msra.mxu0 %v3741
        %3970 = vmatpush.msra.mxu0 %v3739
        %3971 = vmatpush.msra.mxu0 %v3737
        %3972 = vmatpush.msra.mxu0 %v3735
        %3973 = vmatmul.f32.gmra.mxu0 %v3835
        %v3974 = vpop.f32.mrf.mxu0
        %v3975 = vadd.f32 %v3952, %v3974
        %3976 = vmatmul.f32.gmra.mxu0 %v3839
        %v3977 = vpop.f32.mrf.mxu0
        %v3978 = vadd.f32 %v3955, %v3977
        %3979 = vdwg.mxu0
        %3980 = vmatpush.msra.mxu0 %v3797
        %3981 = vmatpush.msra.mxu0 %v3795
        %3982 = vmatpush.msra.mxu0 %v3793
        %3983 = vmatpush.msra.mxu0 %v3791
        %3984 = vmatpush.msra.mxu0 %v3789
        %3985 = vmatpush.msra.mxu0 %v3787
        %3986 = vmatpush.msra.mxu0 %v3785
        %3987 = vmatpush.msra.mxu0 %v3783
        %3988 = vmatpush.msra.mxu0 %v3781
        %3989 = vmatpush.msra.mxu0 %v3779
        %3990 = vmatpush.msra.mxu0 %v3777
        %3991 = vmatpush.msra.mxu0 %v3775
        %3992 = vmatpush.msra.mxu0 %v3773
        %3993 = vmatpush.msra.mxu0 %v3771
        %3994 = vmatpush.msra.mxu0 %v3769
        %3995 = vmatpush.msra.mxu0 %v3767
        %3996 = vmatmul.f32.gmra.mxu0 %v3836
        %v3997 = vpop.f32.mrf.mxu0
        %v3998 = vadd.f32 %v3975, %v3997
        %3999 = vmatmul.f32.gmra.mxu0 %v3840
        %v4000 = vpop.f32.mrf.mxu0
        %v4001 = vadd.f32 %v3978, %v4000
        %4002 = vdwg.mxu0
        %4003 = vmatpush.msra.mxu0 %v3829
        %4004 = vmatpush.msra.mxu0 %v3827
        %4005 = vmatpush.msra.mxu0 %v3825
        %4006 = vmatpush.msra.mxu0 %v3823
        %4007 = vmatpush.msra.mxu0 %v3821
        %4008 = vmatpush.msra.mxu0 %v3819
        %4009 = vmatpush.msra.mxu0 %v3817
        %4010 = vmatpush.msra.mxu0 %v3815
        %4011 = vmatpush.msra.mxu0 %v3813
        %4012 = vmatpush.msra.mxu0 %v3811
        %4013 = vmatpush.msra.mxu0 %v3809
        %4014 = vmatpush.msra.mxu0 %v3807
        %4015 = vmatpush.msra.mxu0 %v3805
        %4016 = vmatpush.msra.mxu0 %v3803
        %4017 = vmatpush.msra.mxu0 %v3801
        %4018 = vmatpush.msra.mxu0 %v3799
        %4019 = vmatmul.f32.gmra.mxu0 %v3837
        %v4020 = vpop.f32.mrf.mxu0
        %v4021 = vadd.f32 %v3998, %v4020
        %4022 = vmatmul.f32.gmra.mxu0 %v3841
        %v4023 = vpop.f32.mrf.mxu0
        %v4024 = vadd.f32 %v4001, %v4023
        %4025 = vdwg.mxu0
        %v4026 = vadd.f32 %v3830, %v3929
        %v4027 = vadd.f32 %v3831, %v4021
        %v4028 = vadd.f32 %v3832, %v3932
        %v4029 = vadd.f32 %v3833, %v4024
        %4030 = vst [vmem:[%s476] sm:$0xff] %v4026
        %4031 = vst [vmem:[%s476 + $0x8] sm:$0xff] %v4027
        %4032 = vst [vmem:[%s476 + $0x10] sm:$0xff] %v4028
        %4033 = vst [vmem:[%s476 + $0x18] sm:$0xff] %v4029
        // Predicated region
        $region69: #{tpu_custom_call.1} parent=43 // pred_check
          %p4034 = pneg %p494
        $region70: #{tpu_custom_call.1} parent=43 // pred_check_branch
          %4036 = sbr.rel (%p4034) target = $region72
        $region71: #{tpu_custom_call.1} parent=43 // pred_region
          %v4037 = vld [vmem:[%s476] sm:$0xff]
          %v4038 = vld [vmem:[%s476 + $0x8] sm:$0xff]
          %v4039 = vld [vmem:[%s476 + $0x10] sm:$0xff]
          %v4040 = vld [vmem:[%s476 + $0x18] sm:$0xff]
          %v4041 = vld [vmem:[%s490] sm:$0x3]
          %v4043 = vperm.slane %v4041, 0
          %v4044 = vperm.slane %v4041, 1
          %v4047 = vadd.f32 %v4037, %v4043
          %v4048 = vadd.f32 %v4038, %v4044
          %v4049 = vadd.f32 %v4039, %v4043
          %v4050 = vadd.f32 %v4040, %v4044
          %4051 = vst [vmem:[%s476] sm:$0xff] %v4047
          %4052 = vst [vmem:[%s476 + $0x8] sm:$0xff] %v4048
          %4053 = vst [vmem:[%s476 + $0x10] sm:$0xff] %v4049
          %4054 = vst [vmem:[%s476 + $0x18] sm:$0xff] %v4050
        $region72: #{tpu_custom_call.1} parent=43 // pred_fallthru
          _
        %s4055 = sand.u32 %s222, 1
        %s4056 = scalar_lea.sflag [#allocation4], %s4055
        %s4057 = sand.u32 %s222, 1
        %s4058 = smul.addr %s4057, 32
        %s4059 = scalar_lea.vmem [#allocation11], %s4058
        // Predicated region
        $region73: #{tpu_custom_call.1} parent=43 // pred_check
          %p4060 = pneg %p232
        $region74: #{tpu_custom_call.1} parent=43 // pred_check_branch
          %4062 = sbr.rel (%p4060) target = $region76
        $region75: #{tpu_custom_call.1} parent=43 // pred_region
          %s4063 = smul.u32 2, %s32
          %s4064 = smul.u32 2, %s33
          %4066 = vsyncadd %s4056, 0
          %s4067 = smul.addr %s4063, 4
          %s4068 = sadd.s32 %s4064, %s4067
          %s4069 = smul.addr %s4068, 8
          %s4070 = scalar_lea.hbm %s6, %s4069
          %s4071 = sshll.u32 %s4059, 4
          %s4072 = int_to_ptr.vmem [resolvable:$true] %s4071
          %s4073 = sshll.u32 %s4070, 4
          %s4074 = int_to_ptr.hbm [resolvable:$true] %s4073
          %4079 = dma.vmem_to_hbm [thread:$0]  %s4072, 512, %s4074, %s4056, 256, 512, 16
        $region76: #{tpu_custom_call.1} parent=43 // pred_fallthru
          _
      $region44: #{tpu_custom_call.1} parent=5 // pred_fallthru
        _
      %p4080 = scmp.le.s32.totalorder 2, %s22
      // Predicated region
      $region77: #{tpu_custom_call.1} parent=5 // pred_check
        %p4081 = pneg %p4080
      $region78: #{tpu_custom_call.1} parent=5 // pred_check_branch
        %4083 = sbr.rel (%p4081) target = $region80
      $region79: #{tpu_custom_call.1} parent=5 // pred_region
        %s4084 = ssub.s32 %s22, 2
        // Predicated region
        $region81: #{tpu_custom_call.1} parent=79 // pred_check
          %p4085 = pneg %p238
        $region82: #{tpu_custom_call.1} parent=79 // pred_check_branch
          %4087 = sbr.rel (%p4085) target = $region84
        $region83: #{tpu_custom_call.1} parent=79 // pred_region
          %s4088 = sand.u32 %s223, 1
          %s4089 = scalar_lea.sflag [#allocation4], %s4088
          %s4090 = sand.u32 %s223, 1
          %s4091 = smul.addr %s4090, 32
          %s4092 = scalar_lea.vmem [#allocation11], %s4091
          %4094 = dma.done %s4089, 512
        $region84: #{tpu_custom_call.1} parent=79 // pred_fallthru
          _
      $region80: #{tpu_custom_call.1} parent=5 // pred_fallthru
        _
    $region6: #{tpu_custom_call.1} parent=1 // loop_footer
      %s26 = sadd.s32 1, %s22
    $region7: #{tpu_custom_call.1} parent=1 // loop_footer_branch
      %21 = sbr.rel target = $region3
    $region8: #{tpu_custom_call.1} parent=1 // loop_exit
      _
    %4095 = vsyncpa [#allocation3], 1
    %s4096 = scalar_lea.sflag [#allocation3], 1
    %4097 = vsyncpa %s4096, 1
    %4098 = vsyncpa [#allocation6], 1
    %s4099 = scalar_lea.sflag [#allocation6], 1
    %4100 = vsyncpa %s4099, 1
    %4101 = vsyncpa [#allocation9], 1
    %s4102 = scalar_lea.sflag [#allocation9], 1
    %4103 = vsyncpa %s4102, 1
    %4104 = vsyncpa [#allocation4], 1
    %s4105 = scalar_lea.sflag [#allocation4], 1
    %4106 = vsyncpa %s4105, 1

</llo_original>
